<compile_context>
chip_gen: v7x
topology: tpu7x:2x2x1
jax: 0.10.0
libtpu: 0.0.40
codegen_flags: <defaults>
</compile_context>

<pallas_src>
import jax
import jax.numpy as jnp
from jax import lax
from jax.experimental import pallas as pl
from jax.experimental.pallas import tpu as pltpu


def _sigmoid(v):
    # exp + divide: EUP path, guaranteed to lower on Mosaic.
    return 1.0 / (1.0 + jnp.exp(-v))


def _audio_gru_kernel(x_ref, wih_ref, whh_ref, bx_ref, bhn_ref, o_ref, gx_ref):
    # x_ref:   (1, T*Bn, I)   input block, time-major within the block
    # wih_ref: (I, 3H)        W_ih^T, gate order [r | z | n]
    # whh_ref: (H, 3H)        W_hh^T
    # bx_ref:  (1, 3H)        b_ih + [b_hr, b_hz, 0]  (folded into input gates)
    # bhn_ref: (1, H)         b_hn (applied inside r * (.))
    # o_ref:   (Bn, H)        mean over time of the hidden states
    # gx_ref:  (T*Bn, 3H)     scratch: precomputed input gates
    H = whh_ref.shape[0]
    Bn = o_ref.shape[0]
    T = x_ref.shape[1] // Bn

    # Fused input projection for the whole block: one MXU matmul + folded bias.
    gx_ref[...] = (
        jnp.dot(x_ref[0], wih_ref[...], preferred_element_type=jnp.float32)
        + bx_ref[...]
    )

    whh = whh_ref[...]
    bhn = jnp.broadcast_to(bhn_ref[...], (Bn, H))  # hoisted out of the loop

    def step(t, carry):
        h, acc = carry
        row = pl.multiple_of(t * Bn, Bn)
        gxt = gx_ref[pl.ds(row, Bn), :]                             # (Bn, 3H)
        gh = jnp.dot(h, whh, preferred_element_type=jnp.float32)    # (Bn, 3H)
        r = _sigmoid(gxt[:, :H] + gh[:, :H])
        z = _sigmoid(gxt[:, H:2 * H] + gh[:, H:2 * H])
        n = jnp.tanh(gxt[:, 2 * H:] + r * (gh[:, 2 * H:] + bhn))
        h_new = (1.0 - z) * n + z * h
        return h_new, acc + h_new

    zeros = jnp.zeros((Bn, H), jnp.float32)
    _, acc = lax.fori_loop(0, T, step, (zeros, zeros), unroll=True)
    o_ref[...] = (acc * (1.0 / T)).astype(o_ref.dtype)


def audio_gru(x, w_ih, w_hh, b_ih, b_hh, *, block_b=8):
    """x: (B, T, I); w_ih: (3H, I); w_hh: (3H, H); b_ih, b_hh: (3H,)."""
    B, T, I = x.shape
    H = w_hh.shape[1]
    assert B % block_b == 0, "batch must be divisible by block_b"
    nb = B // block_b

    # Layout plumbing in plain JAX outside the kernel:
    # (B, T, I) -> (nb, T*block_b, I), time-major inside each batch block.
    xg = (
        jnp.transpose(x, (1, 0, 2))              # (T, B, I)
        .reshape(T, nb, block_b, I)
        .transpose(1, 0, 2, 3)                   # (nb, T, block_b, I)
        .reshape(nb, T * block_b, I)
    )
    wih_t = w_ih.T                               # (I, 3H)
    whh_t = w_hh.T                               # (H, 3H)
    # Fold b_ih and the r/z parts of b_hh into one bias on the input gates.
    bx = (b_ih + jnp.concatenate(
        [b_hh[: 2 * H], jnp.zeros((H,), b_hh.dtype)]))[None, :]     # (1, 3H)
    bhn = b_hh[2 * H:][None, :]                                     # (1, H)

    out = pl.pallas_call(
        _audio_gru_kernel,
        out_shape=jax.ShapeDtypeStruct((B, H), x.dtype),
        grid_spec=pltpu.PrefetchScalarGridSpec(
            num_scalar_prefetch=0,
            grid=(nb,),
            in_specs=[
                pl.BlockSpec((1, T * block_b, I), lambda n: (n, 0, 0)),
                pl.BlockSpec((I, 3 * H), lambda n: (0, 0)),
                pl.BlockSpec((H, 3 * H), lambda n: (0, 0)),
                pl.BlockSpec((1, 3 * H), lambda n: (0, 0)),
                pl.BlockSpec((1, H), lambda n: (0, 0)),
            ],
            out_specs=pl.BlockSpec((block_b, H), lambda n: (n, 0)),
            scratch_shapes=[pltpu.VMEM((T * block_b, 3 * H), jnp.float32)],
        ),
        compiler_params=pltpu.CompilerParams(
            dimension_semantics=("parallel",)),
    )(xg, wih_t, whh_t, bx, bhn)
    # TODO(synk): nn.Dropout after the mean is identity in eval mode; a training
    # variant would generate the mask with pltpu.prng_seed / prng_random_bits.
    return out


def audio_gru_ref(x, w_ih, w_hh, b_ih, b_hh):
    # Pure-JAX reference mirroring torch.nn.GRU (1 layer, unidirectional,
    # batch_first) followed by mean over the time dimension.
    B, T, I = x.shape
    H = w_hh.shape[1]

    def cell(h, x_t):
        gx = x_t @ w_ih.T + b_ih                 # (B, 3H)
        gh = h @ w_hh.T + b_hh                   # (B, 3H)
        r = jax.nn.sigmoid(gx[:, :H] + gh[:, :H])
        z = jax.nn.sigmoid(gx[:, H:2 * H] + gh[:, H:2 * H])
        n = jnp.tanh(gx[:, 2 * H:] + r * gh[:, 2 * H:])
        h_new = (1.0 - z) * n + z * h
        return h_new, h_new

    h0 = jnp.zeros((B, H), x.dtype)
    _, hs = lax.scan(cell, h0, jnp.transpose(x, (1, 0, 2)))
    return jnp.mean(hs, axis=0)


if __name__ == "__main__":
    # Small deterministic config consistent with AudioGRU defaults:
    # input_size=23, hidden_size=128, num_layers=1, unidirectional.
    B, T, I, H = 16, 16, 23, 128

    key = jax.random.PRNGKey(0)
    kx, k1, k2, k3, k4 = jax.random.split(key, 5)

    scale = 1.0 / (H ** 0.5)
    x = jax.random.normal(kx, (B, T, I), dtype=jnp.float32)
    w_ih = jax.random.uniform(k1, (3 * H, I), jnp.float32, -1.0, 1.0) * scale
    w_hh = jax.random.uniform(k2, (3 * H, H), jnp.float32, -1.0, 1.0) * scale
    b_ih = jax.random.uniform(k3, (3 * H,), jnp.float32, -1.0, 1.0) * scale
    b_hh = jax.random.uniform(k4, (3 * H,), jnp.float32, -1.0, 1.0) * scale

    out = audio_gru(x, w_ih, w_hh, b_ih, b_hh)
    out = jax.block_until_ready(out)

    ref = audio_gru_ref(x, w_ih, w_hh, b_ih, b_hh)
    assert out.shape == (B, H)
    assert jnp.allclose(out, ref, atol=1e-4, rtol=1e-4), "mismatch vs reference"

    print("KERNEL_OK")
</pallas_src>

<mosaic_0001>
module attributes {stable_mosaic.version = 11 : i64} {
  func.func @_audio_gru_kernel(%arg0: i32, %arg1: memref<1x128x23xf32, #tpu.memory_space<vmem>>, %arg2: memref<23x384xf32, #tpu.memory_space<vmem>>, %arg3: memref<128x384xf32, #tpu.memory_space<vmem>>, %arg4: memref<1x384xf32, #tpu.memory_space<vmem>>, %arg5: memref<1x128xf32, #tpu.memory_space<vmem>>, %arg6: memref<8x128xf32, #tpu.memory_space<vmem>>, %arg7: memref<128x384xf32, #tpu.memory_space<vmem>>) attributes {dimension_semantics = [#tpu.dimension_semantics<parallel>], iteration_bounds = array<i64: 2>, scalar_prefetch = 0 : i64, scratch_operands = 1 : i64, tpu.core_type = #tpu.core_type<tc>, window_params = [{transform_indices = @transform_0, window_bounds = array<i64: 1, 128, 23>}, {pipeline_mode = #tpu.pipeline_mode<synchronous>, transform_indices = @transform_1, window_bounds = array<i64: 23, 384>}, {pipeline_mode = #tpu.pipeline_mode<synchronous>, transform_indices = @transform_2, window_bounds = array<i64: 128, 384>}, {pipeline_mode = #tpu.pipeline_mode<synchronous>, transform_indices = @transform_3, window_bounds = array<i64: 1, 384>}, {pipeline_mode = #tpu.pipeline_mode<synchronous>, transform_indices = @transform_4, window_bounds = array<i64: 1, 128>}, {transform_indices = @transform_5, window_bounds = array<i64: 8, 128>}]} {
    %c0 = arith.constant 0 : index
    %c0_0 = arith.constant 0 : index
    %c0_1 = arith.constant 0 : index
    %0 = vector.load %arg1[%c0, %c0_0, %c0_1] : memref<1x128x23xf32, #tpu.memory_space<vmem>>, vector<1x128x23xf32>
    %1 = vector.shape_cast %0 : vector<1x128x23xf32> to vector<128x23xf32>
    %c0_2 = arith.constant 0 : index
    %c0_3 = arith.constant 0 : index
    %2 = vector.load %arg2[%c0_2, %c0_3] : memref<23x384xf32, #tpu.memory_space<vmem>>, vector<23x384xf32>
    %cst = arith.constant dense<0.000000e+00> : vector<128x384xf32>
    %3 = tpu.matmul %1, %2, %cst {dimension_numbers = #tpu.dot_dimension_numbers<[1], [0], [0], [1], [0, 0, 1, 1], [], []>} : vector<128x23xf32>, vector<23x384xf32>, vector<128x384xf32> -> vector<128x384xf32>
    %c0_4 = arith.constant 0 : index
    %c0_5 = arith.constant 0 : index
    %4 = vector.load %arg4[%c0_4, %c0_5] : memref<1x384xf32, #tpu.memory_space<vmem>>, vector<1x384xf32>
    %5 = vector.broadcast %4 : vector<1x384xf32> to vector<128x384xf32>
    %6 = arith.addf %3, %5 : vector<128x384xf32>
    %c0_6 = arith.constant 0 : index
    %c0_7 = arith.constant 0 : index
    %7 = vector.load %arg7[%c0_6, %c0_7] : memref<128x384xf32, #tpu.memory_space<vmem>>, vector<128x384xf32>
    tpu.vector_store %arg7[%c0_6, %c0_7], %6 {strides = array<i32>} : memref<128x384xf32, #tpu.memory_space<vmem>>, vector<128x384xf32>,
    %c0_8 = arith.constant 0 : index
    %c0_9 = arith.constant 0 : index
    %8 = vector.load %arg3[%c0_8, %c0_9] : memref<128x384xf32, #tpu.memory_space<vmem>>, vector<128x384xf32>
    %c0_10 = arith.constant 0 : index
    %c0_11 = arith.constant 0 : index
    %9 = vector.load %arg5[%c0_10, %c0_11] : memref<1x128xf32, #tpu.memory_space<vmem>>, vector<1x128xf32>
    %10 = vector.shape_cast %9 : vector<1x128xf32> to vector<1x128xf32>
    %11 = vector.broadcast %10 : vector<1x128xf32> to vector<8x128xf32>
    %cst_12 = arith.constant 0.000000e+00 : f32
    %12 = vector.broadcast %cst_12 : f32 to vector<8x128xf32>
    %c0_i32 = arith.constant 0 : i32
    %c8_i32 = arith.constant 8 : i32
    %13 = arith.muli %c0_i32, %c8_i32 : i32
    %14 = tpu.assume_multiple %13, 8 : i32
    %15 = arith.index_cast %14 : i32 to index
    %c0_13 = arith.constant 0 : index
    %16 = vector.load %arg7[%15, %c0_13] : memref<128x384xf32, #tpu.memory_space<vmem>>, vector<8x384xf32>
    %cst_14 = arith.constant dense<0.000000e+00> : vector<8x384xf32>
    %17 = tpu.matmul %12, %8, %cst_14 {dimension_numbers = #tpu.dot_dimension_numbers<[1], [0], [0], [1], [0, 0, 1, 1], [], []>} : vector<8x128xf32>, vector<128x384xf32>, vector<8x384xf32> -> vector<8x384xf32>
    %18 = vector.extract_strided_slice %16 {offsets = [0, 0], sizes = [8, 128], strides = [1, 1]} : vector<8x384xf32> to vector<8x128xf32>
    %19 = vector.extract_strided_slice %17 {offsets = [0, 0], sizes = [8, 128], strides = [1, 1]} : vector<8x384xf32> to vector<8x128xf32>
    %20 = arith.addf %18, %19 : vector<8x128xf32>
    %cst_15 = arith.constant 0.000000e+00 : f32
    %21 = vector.broadcast %cst_15 : f32 to vector<8x128xf32>
    %22 = arith.subf %21, %20 : vector<8x128xf32>
    %23 = math.exp %22 : vector<8x128xf32>
    %cst_16 = arith.constant 1.000000e+00 : f32
    %24 = vector.broadcast %cst_16 : f32 to vector<8x128xf32>
    %25 = arith.addf %24, %23 : vector<8x128xf32>
    %cst_17 = arith.constant 1.000000e+00 : f32
    %26 = vector.broadcast %cst_17 : f32 to vector<8x128xf32>
    %27 = arith.divf %26, %25 : vector<8x128xf32>
    %28 = vector.extract_strided_slice %16 {offsets = [0, 128], sizes = [8, 128], strides = [1, 1]} : vector<8x384xf32> to vector<8x128xf32>
    %29 = vector.extract_strided_slice %17 {offsets = [0, 128], sizes = [8, 128], strides = [1, 1]} : vector<8x384xf32> to vector<8x128xf32>
    %30 = arith.addf %28, %29 : vector<8x128xf32>
    %cst_18 = arith.constant 0.000000e+00 : f32
    %31 = vector.broadcast %cst_18 : f32 to vector<8x128xf32>
    %32 = arith.subf %31, %30 : vector<8x128xf32>
    %33 = math.exp %32 : vector<8x128xf32>
    %cst_19 = arith.constant 1.000000e+00 : f32
    %34 = vector.broadcast %cst_19 : f32 to vector<8x128xf32>
    %35 = arith.addf %34, %33 : vector<8x128xf32>
    %cst_20 = arith.constant 1.000000e+00 : f32
    %36 = vector.broadcast %cst_20 : f32 to vector<8x128xf32>
    %37 = arith.divf %36, %35 : vector<8x128xf32>
    %38 = vector.extract_strided_slice %16 {offsets = [0, 256], sizes = [8, 128], strides = [1, 1]} : vector<8x384xf32> to vector<8x128xf32>
    %39 = vector.extract_strided_slice %17 {offsets = [0, 256], sizes = [8, 128], strides = [1, 1]} : vector<8x384xf32> to vector<8x128xf32>
    %40 = arith.addf %39, %11 : vector<8x128xf32>
    %41 = arith.mulf %27, %40 : vector<8x128xf32>
    %42 = arith.addf %38, %41 : vector<8x128xf32>
    %43 = math.tanh %42 : vector<8x128xf32>
    %cst_21 = arith.constant 1.000000e+00 : f32
    %44 = vector.broadcast %cst_21 : f32 to vector<8x128xf32>
    %45 = arith.subf %44, %37 : vector<8x128xf32>
    %46 = arith.mulf %45, %43 : vector<8x128xf32>
    %47 = arith.mulf %37, %12 : vector<8x128xf32>
    %48 = arith.addf %46, %47 : vector<8x128xf32>
    %49 = arith.addf %12, %48 : vector<8x128xf32>
    %c1_i32 = arith.constant 1 : i32
    %c8_i32_22 = arith.constant 8 : i32
    %50 = arith.muli %c1_i32, %c8_i32_22 : i32
    %51 = tpu.assume_multiple %50, 8 : i32
    %52 = arith.index_cast %51 : i32 to index
    %c0_23 = arith.constant 0 : index
    %53 = vector.load %arg7[%52, %c0_23] : memref<128x384xf32, #tpu.memory_space<vmem>>, vector<8x384xf32>
    %cst_24 = arith.constant dense<0.000000e+00> : vector<8x384xf32>
    %54 = tpu.matmul %48, %8, %cst_24 {dimension_numbers = #tpu.dot_dimension_numbers<[1], [0], [0], [1], [0, 0, 1, 1], [], []>} : vector<8x128xf32>, vector<128x384xf32>, vector<8x384xf32> -> vector<8x384xf32>
    %55 = vector.extract_strided_slice %53 {offsets = [0, 0], sizes = [8, 128], strides = [1, 1]} : vector<8x384xf32> to vector<8x128xf32>
    %56 = vector.extract_strided_slice %54 {offsets = [0, 0], sizes = [8, 128], strides = [1, 1]} : vector<8x384xf32> to vector<8x128xf32>
    %57 = arith.addf %55, %56 : vector<8x128xf32>
    %cst_25 = arith.constant 0.000000e+00 : f32
    %58 = vector.broadcast %cst_25 : f32 to vector<8x128xf32>
    %59 = arith.subf %58, %57 : vector<8x128xf32>
    %60 = math.exp %59 : vector<8x128xf32>
    %cst_26 = arith.constant 1.000000e+00 : f32
    %61 = vector.broadcast %cst_26 : f32 to vector<8x128xf32>
    %62 = arith.addf %61, %60 : vector<8x128xf32>
    %cst_27 = arith.constant 1.000000e+00 : f32
    %63 = vector.broadcast %cst_27 : f32 to vector<8x128xf32>
    %64 = arith.divf %63, %62 : vector<8x128xf32>
    %65 = vector.extract_strided_slice %53 {offsets = [0, 128], sizes = [8, 128], strides = [1, 1]} : vector<8x384xf32> to vector<8x128xf32>
    %66 = vector.extract_strided_slice %54 {offsets = [0, 128], sizes = [8, 128], strides = [1, 1]} : vector<8x384xf32> to vector<8x128xf32>
    %67 = arith.addf %65, %66 : vector<8x128xf32>
    %cst_28 = arith.constant 0.000000e+00 : f32
    %68 = vector.broadcast %cst_28 : f32 to vector<8x128xf32>
    %69 = arith.subf %68, %67 : vector<8x128xf32>
    %70 = math.exp %69 : vector<8x128xf32>
    %cst_29 = arith.constant 1.000000e+00 : f32
    %71 = vector.broadcast %cst_29 : f32 to vector<8x128xf32>
    %72 = arith.addf %71, %70 : vector<8x128xf32>
    %cst_30 = arith.constant 1.000000e+00 : f32
    %73 = vector.broadcast %cst_30 : f32 to vector<8x128xf32>
    %74 = arith.divf %73, %72 : vector<8x128xf32>
    %75 = vector.extract_strided_slice %53 {offsets = [0, 256], sizes = [8, 128], strides = [1, 1]} : vector<8x384xf32> to vector<8x128xf32>
    %76 = vector.extract_strided_slice %54 {offsets = [0, 256], sizes = [8, 128], strides = [1, 1]} : vector<8x384xf32> to vector<8x128xf32>
    %77 = arith.addf %76, %11 : vector<8x128xf32>
    %78 = arith.mulf %64, %77 : vector<8x128xf32>
    %79 = arith.addf %75, %78 : vector<8x128xf32>
    %80 = math.tanh %79 : vector<8x128xf32>
    %cst_31 = arith.constant 1.000000e+00 : f32
    %81 = vector.broadcast %cst_31 : f32 to vector<8x128xf32>
    %82 = arith.subf %81, %74 : vector<8x128xf32>
    %83 = arith.mulf %82, %80 : vector<8x128xf32>
    %84 = arith.mulf %74, %48 : vector<8x128xf32>
    %85 = arith.addf %83, %84 : vector<8x128xf32>
    %86 = arith.addf %49, %85 : vector<8x128xf32>
    %c2_i32 = arith.constant 2 : i32
    %c8_i32_32 = arith.constant 8 : i32
    %87 = arith.muli %c2_i32, %c8_i32_32 : i32
    %88 = tpu.assume_multiple %87, 8 : i32
    %89 = arith.index_cast %88 : i32 to index
    %c0_33 = arith.constant 0 : index
    %90 = vector.load %arg7[%89, %c0_33] : memref<128x384xf32, #tpu.memory_space<vmem>>, vector<8x384xf32>
    %cst_34 = arith.constant dense<0.000000e+00> : vector<8x384xf32>
    %91 = tpu.matmul %85, %8, %cst_34 {dimension_numbers = #tpu.dot_dimension_numbers<[1], [0], [0], [1], [0, 0, 1, 1], [], []>} : vector<8x128xf32>, vector<128x384xf32>, vector<8x384xf32> -> vector<8x384xf32>
    %92 = vector.extract_strided_slice %90 {offsets = [0, 0], sizes = [8, 128], strides = [1, 1]} : vector<8x384xf32> to vector<8x128xf32>
    %93 = vector.extract_strided_slice %91 {offsets = [0, 0], sizes = [8, 128], strides = [1, 1]} : vector<8x384xf32> to vector<8x128xf32>
    %94 = arith.addf %92, %93 : vector<8x128xf32>
    %cst_35 = arith.constant 0.000000e+00 : f32
    %95 = vector.broadcast %cst_35 : f32 to vector<8x128xf32>
    %96 = arith.subf %95, %94 : vector<8x128xf32>
    %97 = math.exp %96 : vector<8x128xf32>
    %cst_36 = arith.constant 1.000000e+00 : f32
    %98 = vector.broadcast %cst_36 : f32 to vector<8x128xf32>
    %99 = arith.addf %98, %97 : vector<8x128xf32>
    %cst_37 = arith.constant 1.000000e+00 : f32
    %100 = vector.broadcast %cst_37 : f32 to vector<8x128xf32>
    %101 = arith.divf %100, %99 : vector<8x128xf32>
    %102 = vector.extract_strided_slice %90 {offsets = [0, 128], sizes = [8, 128], strides = [1, 1]} : vector<8x384xf32> to vector<8x128xf32>
    %103 = vector.extract_strided_slice %91 {offsets = [0, 128], sizes = [8, 128], strides = [1, 1]} : vector<8x384xf32> to vector<8x128xf32>
    %104 = arith.addf %102, %103 : vector<8x128xf32>
    %cst_38 = arith.constant 0.000000e+00 : f32
    %105 = vector.broadcast %cst_38 : f32 to vector<8x128xf32>
    %106 = arith.subf %105, %104 : vector<8x128xf32>
    %107 = math.exp %106 : vector<8x128xf32>
    %cst_39 = arith.constant 1.000000e+00 : f32
    %108 = vector.broadcast %cst_39 : f32 to vector<8x128xf32>
    %109 = arith.addf %108, %107 : vector<8x128xf32>
    %cst_40 = arith.constant 1.000000e+00 : f32
    %110 = vector.broadcast %cst_40 : f32 to vector<8x128xf32>
    %111 = arith.divf %110, %109 : vector<8x128xf32>
    %112 = vector.extract_strided_slice %90 {offsets = [0, 256], sizes = [8, 128], strides = [1, 1]} : vector<8x384xf32> to vector<8x128xf32>
    %113 = vector.extract_strided_slice %91 {offsets = [0, 256], sizes = [8, 128], strides = [1, 1]} : vector<8x384xf32> to vector<8x128xf32>
    %114 = arith.addf %113, %11 : vector<8x128xf32>
    %115 = arith.mulf %101, %114 : vector<8x128xf32>
    %116 = arith.addf %112, %115 : vector<8x128xf32>
    %117 = math.tanh %116 : vector<8x128xf32>
    %cst_41 = arith.constant 1.000000e+00 : f32
    %118 = vector.broadcast %cst_41 : f32 to vector<8x128xf32>
    %119 = arith.subf %118, %111 : vector<8x128xf32>
    %120 = arith.mulf %119, %117 : vector<8x128xf32>
    %121 = arith.mulf %111, %85 : vector<8x128xf32>
    %122 = arith.addf %120, %121 : vector<8x128xf32>
    %123 = arith.addf %86, %122 : vector<8x128xf32>
    %c3_i32 = arith.constant 3 : i32
    %c8_i32_42 = arith.constant 8 : i32
    %124 = arith.muli %c3_i32, %c8_i32_42 : i32
    %125 = tpu.assume_multiple %124, 8 : i32
    %126 = arith.index_cast %125 : i32 to index
    %c0_43 = arith.constant 0 : index
    %127 = vector.load %arg7[%126, %c0_43] : memref<128x384xf32, #tpu.memory_space<vmem>>, vector<8x384xf32>
    %cst_44 = arith.constant dense<0.000000e+00> : vector<8x384xf32>
    %128 = tpu.matmul %122, %8, %cst_44 {dimension_numbers = #tpu.dot_dimension_numbers<[1], [0], [0], [1], [0, 0, 1, 1], [], []>} : vector<8x128xf32>, vector<128x384xf32>, vector<8x384xf32> -> vector<8x384xf32>
    %129 = vector.extract_strided_slice %127 {offsets = [0, 0], sizes = [8, 128], strides = [1, 1]} : vector<8x384xf32> to vector<8x128xf32>
    %130 = vector.extract_strided_slice %128 {offsets = [0, 0], sizes = [8, 128], strides = [1, 1]} : vector<8x384xf32> to vector<8x128xf32>
    %131 = arith.addf %129, %130 : vector<8x128xf32>
    %cst_45 = arith.constant 0.000000e+00 : f32
    %132 = vector.broadcast %cst_45 : f32 to vector<8x128xf32>
    %133 = arith.subf %132, %131 : vector<8x128xf32>
    %134 = math.exp %133 : vector<8x128xf32>
    %cst_46 = arith.constant 1.000000e+00 : f32
    %135 = vector.broadcast %cst_46 : f32 to vector<8x128xf32>
    %136 = arith.addf %135, %134 : vector<8x128xf32>
    %cst_47 = arith.constant 1.000000e+00 : f32
    %137 = vector.broadcast %cst_47 : f32 to vector<8x128xf32>
    %138 = arith.divf %137, %136 : vector<8x128xf32>
    %139 = vector.extract_strided_slice %127 {offsets = [0, 128], sizes = [8, 128], strides = [1, 1]} : vector<8x384xf32> to vector<8x128xf32>
    %140 = vector.extract_strided_slice %128 {offsets = [0, 128], sizes = [8, 128], strides = [1, 1]} : vector<8x384xf32> to vector<8x128xf32>
    %141 = arith.addf %139, %140 : vector<8x128xf32>
    %cst_48 = arith.constant 0.000000e+00 : f32
    %142 = vector.broadcast %cst_48 : f32 to vector<8x128xf32>
    %143 = arith.subf %142, %141 : vector<8x128xf32>
    %144 = math.exp %143 : vector<8x128xf32>
    %cst_49 = arith.constant 1.000000e+00 : f32
    %145 = vector.broadcast %cst_49 : f32 to vector<8x128xf32>
    %146 = arith.addf %145, %144 : vector<8x128xf32>
    %cst_50 = arith.constant 1.000000e+00 : f32
    %147 = vector.broadcast %cst_50 : f32 to vector<8x128xf32>
    %148 = arith.divf %147, %146 : vector<8x128xf32>
    %149 = vector.extract_strided_slice %127 {offsets = [0, 256], sizes = [8, 128], strides = [1, 1]} : vector<8x384xf32> to vector<8x128xf32>
    %150 = vector.extract_strided_slice %128 {offsets = [0, 256], sizes = [8, 128], strides = [1, 1]} : vector<8x384xf32> to vector<8x128xf32>
    %151 = arith.addf %150, %11 : vector<8x128xf32>
    %152 = arith.mulf %138, %151 : vector<8x128xf32>
    %153 = arith.addf %149, %152 : vector<8x128xf32>
    %154 = math.tanh %153 : vector<8x128xf32>
    %cst_51 = arith.constant 1.000000e+00 : f32
    %155 = vector.broadcast %cst_51 : f32 to vector<8x128xf32>
    %156 = arith.subf %155, %148 : vector<8x128xf32>
    %157 = arith.mulf %156, %154 : vector<8x128xf32>
    %158 = arith.mulf %148, %122 : vector<8x128xf32>
    %159 = arith.addf %157, %158 : vector<8x128xf32>
    %160 = arith.addf %123, %159 : vector<8x128xf32>
    %c4_i32 = arith.constant 4 : i32
    %c8_i32_52 = arith.constant 8 : i32
    %161 = arith.muli %c4_i32, %c8_i32_52 : i32
    %162 = tpu.assume_multiple %161, 8 : i32
    %163 = arith.index_cast %162 : i32 to index
    %c0_53 = arith.constant 0 : index
    %164 = vector.load %arg7[%163, %c0_53] : memref<128x384xf32, #tpu.memory_space<vmem>>, vector<8x384xf32>
    %cst_54 = arith.constant dense<0.000000e+00> : vector<8x384xf32>
    %165 = tpu.matmul %159, %8, %cst_54 {dimension_numbers = #tpu.dot_dimension_numbers<[1], [0], [0], [1], [0, 0, 1, 1], [], []>} : vector<8x128xf32>, vector<128x384xf32>, vector<8x384xf32> -> vector<8x384xf32>
    %166 = vector.extract_strided_slice %164 {offsets = [0, 0], sizes = [8, 128], strides = [1, 1]} : vector<8x384xf32> to vector<8x128xf32>
    %167 = vector.extract_strided_slice %165 {offsets = [0, 0], sizes = [8, 128], strides = [1, 1]} : vector<8x384xf32> to vector<8x128xf32>
    %168 = arith.addf %166, %167 : vector<8x128xf32>
    %cst_55 = arith.constant 0.000000e+00 : f32
    %169 = vector.broadcast %cst_55 : f32 to vector<8x128xf32>
    %170 = arith.subf %169, %168 : vector<8x128xf32>
    %171 = math.exp %170 : vector<8x128xf32>
    %cst_56 = arith.constant 1.000000e+00 : f32
    %172 = vector.broadcast %cst_56 : f32 to vector<8x128xf32>
    %173 = arith.addf %172, %171 : vector<8x128xf32>
    %cst_57 = arith.constant 1.000000e+00 : f32
    %174 = vector.broadcast %cst_57 : f32 to vector<8x128xf32>
    %175 = arith.divf %174, %173 : vector<8x128xf32>
    %176 = vector.extract_strided_slice %164 {offsets = [0, 128], sizes = [8, 128], strides = [1, 1]} : vector<8x384xf32> to vector<8x128xf32>
    %177 = vector.extract_strided_slice %165 {offsets = [0, 128], sizes = [8, 128], strides = [1, 1]} : vector<8x384xf32> to vector<8x128xf32>
    %178 = arith.addf %176, %177 : vector<8x128xf32>
    %cst_58 = arith.constant 0.000000e+00 : f32
    %179 = vector.broadcast %cst_58 : f32 to vector<8x128xf32>
    %180 = arith.subf %179, %178 : vector<8x128xf32>
    %181 = math.exp %180 : vector<8x128xf32>
    %cst_59 = arith.constant 1.000000e+00 : f32
    %182 = vector.broadcast %cst_59 : f32 to vector<8x128xf32>
    %183 = arith.addf %182, %181 : vector<8x128xf32>
    %cst_60 = arith.constant 1.000000e+00 : f32
    %184 = vector.broadcast %cst_60 : f32 to vector<8x128xf32>
    %185 = arith.divf %184, %183 : vector<8x128xf32>
    %186 = vector.extract_strided_slice %164 {offsets = [0, 256], sizes = [8, 128], strides = [1, 1]} : vector<8x384xf32> to vector<8x128xf32>
    %187 = vector.extract_strided_slice %165 {offsets = [0, 256], sizes = [8, 128], strides = [1, 1]} : vector<8x384xf32> to vector<8x128xf32>
    %188 = arith.addf %187, %11 : vector<8x128xf32>
    %189 = arith.mulf %175, %188 : vector<8x128xf32>
    %190 = arith.addf %186, %189 : vector<8x128xf32>
    %191 = math.tanh %190 : vector<8x128xf32>
    %cst_61 = arith.constant 1.000000e+00 : f32
    %192 = vector.broadcast %cst_61 : f32 to vector<8x128xf32>
    %193 = arith.subf %192, %185 : vector<8x128xf32>
    %194 = arith.mulf %193, %191 : vector<8x128xf32>
    %195 = arith.mulf %185, %159 : vector<8x128xf32>
    %196 = arith.addf %194, %195 : vector<8x128xf32>
    %197 = arith.addf %160, %196 : vector<8x128xf32>
    %c5_i32 = arith.constant 5 : i32
    %c8_i32_62 = arith.constant 8 : i32
    %198 = arith.muli %c5_i32, %c8_i32_62 : i32
    %199 = tpu.assume_multiple %198, 8 : i32
    %200 = arith.index_cast %199 : i32 to index
    %c0_63 = arith.constant 0 : index
    %201 = vector.load %arg7[%200, %c0_63] : memref<128x384xf32, #tpu.memory_space<vmem>>, vector<8x384xf32>
    %cst_64 = arith.constant dense<0.000000e+00> : vector<8x384xf32>
    %202 = tpu.matmul %196, %8, %cst_64 {dimension_numbers = #tpu.dot_dimension_numbers<[1], [0], [0], [1], [0, 0, 1, 1], [], []>} : vector<8x128xf32>, vector<128x384xf32>, vector<8x384xf32> -> vector<8x384xf32>
    %203 = vector.extract_strided_slice %201 {offsets = [0, 0], sizes = [8, 128], strides = [1, 1]} : vector<8x384xf32> to vector<8x128xf32>
    %204 = vector.extract_strided_slice %202 {offsets = [0, 0], sizes = [8, 128], strides = [1, 1]} : vector<8x384xf32> to vector<8x128xf32>
    %205 = arith.addf %203, %204 : vector<8x128xf32>
    %cst_65 = arith.constant 0.000000e+00 : f32
    %206 = vector.broadcast %cst_65 : f32 to vector<8x128xf32>
    %207 = arith.subf %206, %205 : vector<8x128xf32>
    %208 = math.exp %207 : vector<8x128xf32>
    %cst_66 = arith.constant 1.000000e+00 : f32
    %209 = vector.broadcast %cst_66 : f32 to vector<8x128xf32>
    %210 = arith.addf %209, %208 : vector<8x128xf32>
    %cst_67 = arith.constant 1.000000e+00 : f32
    %211 = vector.broadcast %cst_67 : f32 to vector<8x128xf32>
    %212 = arith.divf %211, %210 : vector<8x128xf32>
    %213 = vector.extract_strided_slice %201 {offsets = [0, 128], sizes = [8, 128], strides = [1, 1]} : vector<8x384xf32> to vector<8x128xf32>
    %214 = vector.extract_strided_slice %202 {offsets = [0, 128], sizes = [8, 128], strides = [1, 1]} : vector<8x384xf32> to vector<8x128xf32>
    %215 = arith.addf %213, %214 : vector<8x128xf32>
    %cst_68 = arith.constant 0.000000e+00 : f32
    %216 = vector.broadcast %cst_68 : f32 to vector<8x128xf32>
    %217 = arith.subf %216, %215 : vector<8x128xf32>
    %218 = math.exp %217 : vector<8x128xf32>
    %cst_69 = arith.constant 1.000000e+00 : f32
    %219 = vector.broadcast %cst_69 : f32 to vector<8x128xf32>
    %220 = arith.addf %219, %218 : vector<8x128xf32>
    %cst_70 = arith.constant 1.000000e+00 : f32
    %221 = vector.broadcast %cst_70 : f32 to vector<8x128xf32>
    %222 = arith.divf %221, %220 : vector<8x128xf32>
    %223 = vector.extract_strided_slice %201 {offsets = [0, 256], sizes = [8, 128], strides = [1, 1]} : vector<8x384xf32> to vector<8x128xf32>
    %224 = vector.extract_strided_slice %202 {offsets = [0, 256], sizes = [8, 128], strides = [1, 1]} : vector<8x384xf32> to vector<8x128xf32>
    %225 = arith.addf %224, %11 : vector<8x128xf32>
    %226 = arith.mulf %212, %225 : vector<8x128xf32>
    %227 = arith.addf %223, %226 : vector<8x128xf32>
    %228 = math.tanh %227 : vector<8x128xf32>
    %cst_71 = arith.constant 1.000000e+00 : f32
    %229 = vector.broadcast %cst_71 : f32 to vector<8x128xf32>
    %230 = arith.subf %229, %222 : vector<8x128xf32>
    %231 = arith.mulf %230, %228 : vector<8x128xf32>
    %232 = arith.mulf %222, %196 : vector<8x128xf32>
    %233 = arith.addf %231, %232 : vector<8x128xf32>
    %234 = arith.addf %197, %233 : vector<8x128xf32>
    %c6_i32 = arith.constant 6 : i32
    %c8_i32_72 = arith.constant 8 : i32
    %235 = arith.muli %c6_i32, %c8_i32_72 : i32
    %236 = tpu.assume_multiple %235, 8 : i32
    %237 = arith.index_cast %236 : i32 to index
    %c0_73 = arith.constant 0 : index
    %238 = vector.load %arg7[%237, %c0_73] : memref<128x384xf32, #tpu.memory_space<vmem>>, vector<8x384xf32>
    %cst_74 = arith.constant dense<0.000000e+00> : vector<8x384xf32>
    %239 = tpu.matmul %233, %8, %cst_74 {dimension_numbers = #tpu.dot_dimension_numbers<[1], [0], [0], [1], [0, 0, 1, 1], [], []>} : vector<8x128xf32>, vector<128x384xf32>, vector<8x384xf32> -> vector<8x384xf32>
    %240 = vector.extract_strided_slice %238 {offsets = [0, 0], sizes = [8, 128], strides = [1, 1]} : vector<8x384xf32> to vector<8x128xf32>
    %241 = vector.extract_strided_slice %239 {offsets = [0, 0], sizes = [8, 128], strides = [1, 1]} : vector<8x384xf32> to vector<8x128xf32>
    %242 = arith.addf %240, %241 : vector<8x128xf32>
    %cst_75 = arith.constant 0.000000e+00 : f32
    %243 = vector.broadcast %cst_75 : f32 to vector<8x128xf32>
    %244 = arith.subf %243, %242 : vector<8x128xf32>
    %245 = math.exp %244 : vector<8x128xf32>
    %cst_76 = arith.constant 1.000000e+00 : f32
    %246 = vector.broadcast %cst_76 : f32 to vector<8x128xf32>
    %247 = arith.addf %246, %245 : vector<8x128xf32>
    %cst_77 = arith.constant 1.000000e+00 : f32
    %248 = vector.broadcast %cst_77 : f32 to vector<8x128xf32>
    %249 = arith.divf %248, %247 : vector<8x128xf32>
    %250 = vector.extract_strided_slice %238 {offsets = [0, 128], sizes = [8, 128], strides = [1, 1]} : vector<8x384xf32> to vector<8x128xf32>
    %251 = vector.extract_strided_slice %239 {offsets = [0, 128], sizes = [8, 128], strides = [1, 1]} : vector<8x384xf32> to vector<8x128xf32>
    %252 = arith.addf %250, %251 : vector<8x128xf32>
    %cst_78 = arith.constant 0.000000e+00 : f32
    %253 = vector.broadcast %cst_78 : f32 to vector<8x128xf32>
    %254 = arith.subf %253, %252 : vector<8x128xf32>
    %255 = math.exp %254 : vector<8x128xf32>
    %cst_79 = arith.constant 1.000000e+00 : f32
    %256 = vector.broadcast %cst_79 : f32 to vector<8x128xf32>
    %257 = arith.addf %256, %255 : vector<8x128xf32>
    %cst_80 = arith.constant 1.000000e+00 : f32
    %258 = vector.broadcast %cst_80 : f32 to vector<8x128xf32>
    %259 = arith.divf %258, %257 : vector<8x128xf32>
    %260 = vector.extract_strided_slice %238 {offsets = [0, 256], sizes = [8, 128], strides = [1, 1]} : vector<8x384xf32> to vector<8x128xf32>
    %261 = vector.extract_strided_slice %239 {offsets = [0, 256], sizes = [8, 128], strides = [1, 1]} : vector<8x384xf32> to vector<8x128xf32>
    %262 = arith.addf %261, %11 : vector<8x128xf32>
    %263 = arith.mulf %249, %262 : vector<8x128xf32>
    %264 = arith.addf %260, %263 : vector<8x128xf32>
    %265 = math.tanh %264 : vector<8x128xf32>
    %cst_81 = arith.constant 1.000000e+00 : f32
    %266 = vector.broadcast %cst_81 : f32 to vector<8x128xf32>
    %267 = arith.subf %266, %259 : vector<8x128xf32>
    %268 = arith.mulf %267, %265 : vector<8x128xf32>
    %269 = arith.mulf %259, %233 : vector<8x128xf32>
    %270 = arith.addf %268, %269 : vector<8x128xf32>
    %271 = arith.addf %234, %270 : vector<8x128xf32>
    %c7_i32 = arith.constant 7 : i32
    %c8_i32_82 = arith.constant 8 : i32
    %272 = arith.muli %c7_i32, %c8_i32_82 : i32
    %273 = tpu.assume_multiple %272, 8 : i32
    %274 = arith.index_cast %273 : i32 to index
    %c0_83 = arith.constant 0 : index
    %275 = vector.load %arg7[%274, %c0_83] : memref<128x384xf32, #tpu.memory_space<vmem>>, vector<8x384xf32>
    %cst_84 = arith.constant dense<0.000000e+00> : vector<8x384xf32>
    %276 = tpu.matmul %270, %8, %cst_84 {dimension_numbers = #tpu.dot_dimension_numbers<[1], [0], [0], [1], [0, 0, 1, 1], [], []>} : vector<8x128xf32>, vector<128x384xf32>, vector<8x384xf32> -> vector<8x384xf32>
    %277 = vector.extract_strided_slice %275 {offsets = [0, 0], sizes = [8, 128], strides = [1, 1]} : vector<8x384xf32> to vector<8x128xf32>
    %278 = vector.extract_strided_slice %276 {offsets = [0, 0], sizes = [8, 128], strides = [1, 1]} : vector<8x384xf32> to vector<8x128xf32>
    %279 = arith.addf %277, %278 : vector<8x128xf32>
    %cst_85 = arith.constant 0.000000e+00 : f32
    %280 = vector.broadcast %cst_85 : f32 to vector<8x128xf32>
    %281 = arith.subf %280, %279 : vector<8x128xf32>
    %282 = math.exp %281 : vector<8x128xf32>
    %cst_86 = arith.constant 1.000000e+00 : f32
    %283 = vector.broadcast %cst_86 : f32 to vector<8x128xf32>
    %284 = arith.addf %283, %282 : vector<8x128xf32>
    %cst_87 = arith.constant 1.000000e+00 : f32
    %285 = vector.broadcast %cst_87 : f32 to vector<8x128xf32>
    %286 = arith.divf %285, %284 : vector<8x128xf32>
    %287 = vector.extract_strided_slice %275 {offsets = [0, 128], sizes = [8, 128], strides = [1, 1]} : vector<8x384xf32> to vector<8x128xf32>
    %288 = vector.extract_strided_slice %276 {offsets = [0, 128], sizes = [8, 128], strides = [1, 1]} : vector<8x384xf32> to vector<8x128xf32>
    %289 = arith.addf %287, %288 : vector<8x128xf32>
    %cst_88 = arith.constant 0.000000e+00 : f32
    %290 = vector.broadcast %cst_88 : f32 to vector<8x128xf32>
    %291 = arith.subf %290, %289 : vector<8x128xf32>
    %292 = math.exp %291 : vector<8x128xf32>
    %cst_89 = arith.constant 1.000000e+00 : f32
    %293 = vector.broadcast %cst_89 : f32 to vector<8x128xf32>
    %294 = arith.addf %293, %292 : vector<8x128xf32>
    %cst_90 = arith.constant 1.000000e+00 : f32
    %295 = vector.broadcast %cst_90 : f32 to vector<8x128xf32>
    %296 = arith.divf %295, %294 : vector<8x128xf32>
    %297 = vector.extract_strided_slice %275 {offsets = [0, 256], sizes = [8, 128], strides = [1, 1]} : vector<8x384xf32> to vector<8x128xf32>
    %298 = vector.extract_strided_slice %276 {offsets = [0, 256], sizes = [8, 128], strides = [1, 1]} : vector<8x384xf32> to vector<8x128xf32>
    %299 = arith.addf %298, %11 : vector<8x128xf32>
    %300 = arith.mulf %286, %299 : vector<8x128xf32>
    %301 = arith.addf %297, %300 : vector<8x128xf32>
    %302 = math.tanh %301 : vector<8x128xf32>
    %cst_91 = arith.constant 1.000000e+00 : f32
    %303 = vector.broadcast %cst_91 : f32 to vector<8x128xf32>
    %304 = arith.subf %303, %296 : vector<8x128xf32>
    %305 = arith.mulf %304, %302 : vector<8x128xf32>
    %306 = arith.mulf %296, %270 : vector<8x128xf32>
    %307 = arith.addf %305, %306 : vector<8x128xf32>
    %308 = arith.addf %271, %307 : vector<8x128xf32>
    %c8_i32_92 = arith.constant 8 : i32
    %c8_i32_93 = arith.constant 8 : i32
    %309 = arith.muli %c8_i32_92, %c8_i32_93 : i32
    %310 = tpu.assume_multiple %309, 8 : i32
    %311 = arith.index_cast %310 : i32 to index
    %c0_94 = arith.constant 0 : index
    %312 = vector.load %arg7[%311, %c0_94] : memref<128x384xf32, #tpu.memory_space<vmem>>, vector<8x384xf32>
    %cst_95 = arith.constant dense<0.000000e+00> : vector<8x384xf32>
    %313 = tpu.matmul %307, %8, %cst_95 {dimension_numbers = #tpu.dot_dimension_numbers<[1], [0], [0], [1], [0, 0, 1, 1], [], []>} : vector<8x128xf32>, vector<128x384xf32>, vector<8x384xf32> -> vector<8x384xf32>
    %314 = vector.extract_strided_slice %312 {offsets = [0, 0], sizes = [8, 128], strides = [1, 1]} : vector<8x384xf32> to vector<8x128xf32>
    %315 = vector.extract_strided_slice %313 {offsets = [0, 0], sizes = [8, 128], strides = [1, 1]} : vector<8x384xf32> to vector<8x128xf32>
    %316 = arith.addf %314, %315 : vector<8x128xf32>
    %cst_96 = arith.constant 0.000000e+00 : f32
    %317 = vector.broadcast %cst_96 : f32 to vector<8x128xf32>
    %318 = arith.subf %317, %316 : vector<8x128xf32>
    %319 = math.exp %318 : vector<8x128xf32>
    %cst_97 = arith.constant 1.000000e+00 : f32
    %320 = vector.broadcast %cst_97 : f32 to vector<8x128xf32>
    %321 = arith.addf %320, %319 : vector<8x128xf32>
    %cst_98 = arith.constant 1.000000e+00 : f32
    %322 = vector.broadcast %cst_98 : f32 to vector<8x128xf32>
    %323 = arith.divf %322, %321 : vector<8x128xf32>
    %324 = vector.extract_strided_slice %312 {offsets = [0, 128], sizes = [8, 128], strides = [1, 1]} : vector<8x384xf32> to vector<8x128xf32>
    %325 = vector.extract_strided_slice %313 {offsets = [0, 128], sizes = [8, 128], strides = [1, 1]} : vector<8x384xf32> to vector<8x128xf32>
    %326 = arith.addf %324, %325 : vector<8x128xf32>
    %cst_99 = arith.constant 0.000000e+00 : f32
    %327 = vector.broadcast %cst_99 : f32 to vector<8x128xf32>
    %328 = arith.subf %327, %326 : vector<8x128xf32>
    %329 = math.exp %328 : vector<8x128xf32>
    %cst_100 = arith.constant 1.000000e+00 : f32
    %330 = vector.broadcast %cst_100 : f32 to vector<8x128xf32>
    %331 = arith.addf %330, %329 : vector<8x128xf32>
    %cst_101 = arith.constant 1.000000e+00 : f32
    %332 = vector.broadcast %cst_101 : f32 to vector<8x128xf32>
    %333 = arith.divf %332, %331 : vector<8x128xf32>
    %334 = vector.extract_strided_slice %312 {offsets = [0, 256], sizes = [8, 128], strides = [1, 1]} : vector<8x384xf32> to vector<8x128xf32>
    %335 = vector.extract_strided_slice %313 {offsets = [0, 256], sizes = [8, 128], strides = [1, 1]} : vector<8x384xf32> to vector<8x128xf32>
    %336 = arith.addf %335, %11 : vector<8x128xf32>
    %337 = arith.mulf %323, %336 : vector<8x128xf32>
    %338 = arith.addf %334, %337 : vector<8x128xf32>
    %339 = math.tanh %338 : vector<8x128xf32>
    %cst_102 = arith.constant 1.000000e+00 : f32
    %340 = vector.broadcast %cst_102 : f32 to vector<8x128xf32>
    %341 = arith.subf %340, %333 : vector<8x128xf32>
    %342 = arith.mulf %341, %339 : vector<8x128xf32>
    %343 = arith.mulf %333, %307 : vector<8x128xf32>
    %344 = arith.addf %342, %343 : vector<8x128xf32>
    %345 = arith.addf %308, %344 : vector<8x128xf32>
    %c9_i32 = arith.constant 9 : i32
    %c8_i32_103 = arith.constant 8 : i32
    %346 = arith.muli %c9_i32, %c8_i32_103 : i32
    %347 = tpu.assume_multiple %346, 8 : i32
    %348 = arith.index_cast %347 : i32 to index
    %c0_104 = arith.constant 0 : index
    %349 = vector.load %arg7[%348, %c0_104] : memref<128x384xf32, #tpu.memory_space<vmem>>, vector<8x384xf32>
    %cst_105 = arith.constant dense<0.000000e+00> : vector<8x384xf32>
    %350 = tpu.matmul %344, %8, %cst_105 {dimension_numbers = #tpu.dot_dimension_numbers<[1], [0], [0], [1], [0, 0, 1, 1], [], []>} : vector<8x128xf32>, vector<128x384xf32>, vector<8x384xf32> -> vector<8x384xf32>
    %351 = vector.extract_strided_slice %349 {offsets = [0, 0], sizes = [8, 128], strides = [1, 1]} : vector<8x384xf32> to vector<8x128xf32>
    %352 = vector.extract_strided_slice %350 {offsets = [0, 0], sizes = [8, 128], strides = [1, 1]} : vector<8x384xf32> to vector<8x128xf32>
    %353 = arith.addf %351, %352 : vector<8x128xf32>
    %cst_106 = arith.constant 0.000000e+00 : f32
    %354 = vector.broadcast %cst_106 : f32 to vector<8x128xf32>
    %355 = arith.subf %354, %353 : vector<8x128xf32>
    %356 = math.exp %355 : vector<8x128xf32>
    %cst_107 = arith.constant 1.000000e+00 : f32
    %357 = vector.broadcast %cst_107 : f32 to vector<8x128xf32>
    %358 = arith.addf %357, %356 : vector<8x128xf32>
    %cst_108 = arith.constant 1.000000e+00 : f32
    %359 = vector.broadcast %cst_108 : f32 to vector<8x128xf32>
    %360 = arith.divf %359, %358 : vector<8x128xf32>
    %361 = vector.extract_strided_slice %349 {offsets = [0, 128], sizes = [8, 128], strides = [1, 1]} : vector<8x384xf32> to vector<8x128xf32>
    %362 = vector.extract_strided_slice %350 {offsets = [0, 128], sizes = [8, 128], strides = [1, 1]} : vector<8x384xf32> to vector<8x128xf32>
    %363 = arith.addf %361, %362 : vector<8x128xf32>
    %cst_109 = arith.constant 0.000000e+00 : f32
    %364 = vector.broadcast %cst_109 : f32 to vector<8x128xf32>
    %365 = arith.subf %364, %363 : vector<8x128xf32>
    %366 = math.exp %365 : vector<8x128xf32>
    %cst_110 = arith.constant 1.000000e+00 : f32
    %367 = vector.broadcast %cst_110 : f32 to vector<8x128xf32>
    %368 = arith.addf %367, %366 : vector<8x128xf32>
    %cst_111 = arith.constant 1.000000e+00 : f32
    %369 = vector.broadcast %cst_111 : f32 to vector<8x128xf32>
    %370 = arith.divf %369, %368 : vector<8x128xf32>
    %371 = vector.extract_strided_slice %349 {offsets = [0, 256], sizes = [8, 128], strides = [1, 1]} : vector<8x384xf32> to vector<8x128xf32>
    %372 = vector.extract_strided_slice %350 {offsets = [0, 256], sizes = [8, 128], strides = [1, 1]} : vector<8x384xf32> to vector<8x128xf32>
    %373 = arith.addf %372, %11 : vector<8x128xf32>
    %374 = arith.mulf %360, %373 : vector<8x128xf32>
    %375 = arith.addf %371, %374 : vector<8x128xf32>
    %376 = math.tanh %375 : vector<8x128xf32>
    %cst_112 = arith.constant 1.000000e+00 : f32
    %377 = vector.broadcast %cst_112 : f32 to vector<8x128xf32>
    %378 = arith.subf %377, %370 : vector<8x128xf32>
    %379 = arith.mulf %378, %376 : vector<8x128xf32>
    %380 = arith.mulf %370, %344 : vector<8x128xf32>
    %381 = arith.addf %379, %380 : vector<8x128xf32>
    %382 = arith.addf %345, %381 : vector<8x128xf32>
    %c10_i32 = arith.constant 10 : i32
    %c8_i32_113 = arith.constant 8 : i32
    %383 = arith.muli %c10_i32, %c8_i32_113 : i32
    %384 = tpu.assume_multiple %383, 8 : i32
    %385 = arith.index_cast %384 : i32 to index
    %c0_114 = arith.constant 0 : index
    %386 = vector.load %arg7[%385, %c0_114] : memref<128x384xf32, #tpu.memory_space<vmem>>, vector<8x384xf32>
    %cst_115 = arith.constant dense<0.000000e+00> : vector<8x384xf32>
    %387 = tpu.matmul %381, %8, %cst_115 {dimension_numbers = #tpu.dot_dimension_numbers<[1], [0], [0], [1], [0, 0, 1, 1], [], []>} : vector<8x128xf32>, vector<128x384xf32>, vector<8x384xf32> -> vector<8x384xf32>
    %388 = vector.extract_strided_slice %386 {offsets = [0, 0], sizes = [8, 128], strides = [1, 1]} : vector<8x384xf32> to vector<8x128xf32>
    %389 = vector.extract_strided_slice %387 {offsets = [0, 0], sizes = [8, 128], strides = [1, 1]} : vector<8x384xf32> to vector<8x128xf32>
    %390 = arith.addf %388, %389 : vector<8x128xf32>
    %cst_116 = arith.constant 0.000000e+00 : f32
    %391 = vector.broadcast %cst_116 : f32 to vector<8x128xf32>
    %392 = arith.subf %391, %390 : vector<8x128xf32>
    %393 = math.exp %392 : vector<8x128xf32>
    %cst_117 = arith.constant 1.000000e+00 : f32
    %394 = vector.broadcast %cst_117 : f32 to vector<8x128xf32>
    %395 = arith.addf %394, %393 : vector<8x128xf32>
    %cst_118 = arith.constant 1.000000e+00 : f32
    %396 = vector.broadcast %cst_118 : f32 to vector<8x128xf32>
    %397 = arith.divf %396, %395 : vector<8x128xf32>
    %398 = vector.extract_strided_slice %386 {offsets = [0, 128], sizes = [8, 128], strides = [1, 1]} : vector<8x384xf32> to vector<8x128xf32>
    %399 = vector.extract_strided_slice %387 {offsets = [0, 128], sizes = [8, 128], strides = [1, 1]} : vector<8x384xf32> to vector<8x128xf32>
    %400 = arith.addf %398, %399 : vector<8x128xf32>
    %cst_119 = arith.constant 0.000000e+00 : f32
    %401 = vector.broadcast %cst_119 : f32 to vector<8x128xf32>
    %402 = arith.subf %401, %400 : vector<8x128xf32>
    %403 = math.exp %402 : vector<8x128xf32>
    %cst_120 = arith.constant 1.000000e+00 : f32
    %404 = vector.broadcast %cst_120 : f32 to vector<8x128xf32>
    %405 = arith.addf %404, %403 : vector<8x128xf32>
    %cst_121 = arith.constant 1.000000e+00 : f32
    %406 = vector.broadcast %cst_121 : f32 to vector<8x128xf32>
    %407 = arith.divf %406, %405 : vector<8x128xf32>
    %408 = vector.extract_strided_slice %386 {offsets = [0, 256], sizes = [8, 128], strides = [1, 1]} : vector<8x384xf32> to vector<8x128xf32>
    %409 = vector.extract_strided_slice %387 {offsets = [0, 256], sizes = [8, 128], strides = [1, 1]} : vector<8x384xf32> to vector<8x128xf32>
    %410 = arith.addf %409, %11 : vector<8x128xf32>
    %411 = arith.mulf %397, %410 : vector<8x128xf32>
    %412 = arith.addf %408, %411 : vector<8x128xf32>
    %413 = math.tanh %412 : vector<8x128xf32>
    %cst_122 = arith.constant 1.000000e+00 : f32
    %414 = vector.broadcast %cst_122 : f32 to vector<8x128xf32>
    %415 = arith.subf %414, %407 : vector<8x128xf32>
    %416 = arith.mulf %415, %413 : vector<8x128xf32>
    %417 = arith.mulf %407, %381 : vector<8x128xf32>
    %418 = arith.addf %416, %417 : vector<8x128xf32>
    %419 = arith.addf %382, %418 : vector<8x128xf32>
    %c11_i32 = arith.constant 11 : i32
    %c8_i32_123 = arith.constant 8 : i32
    %420 = arith.muli %c11_i32, %c8_i32_123 : i32
    %421 = tpu.assume_multiple %420, 8 : i32
    %422 = arith.index_cast %421 : i32 to index
    %c0_124 = arith.constant 0 : index
    %423 = vector.load %arg7[%422, %c0_124] : memref<128x384xf32, #tpu.memory_space<vmem>>, vector<8x384xf32>
    %cst_125 = arith.constant dense<0.000000e+00> : vector<8x384xf32>
    %424 = tpu.matmul %418, %8, %cst_125 {dimension_numbers = #tpu.dot_dimension_numbers<[1], [0], [0], [1], [0, 0, 1, 1], [], []>} : vector<8x128xf32>, vector<128x384xf32>, vector<8x384xf32> -> vector<8x384xf32>
    %425 = vector.extract_strided_slice %423 {offsets = [0, 0], sizes = [8, 128], strides = [1, 1]} : vector<8x384xf32> to vector<8x128xf32>
    %426 = vector.extract_strided_slice %424 {offsets = [0, 0], sizes = [8, 128], strides = [1, 1]} : vector<8x384xf32> to vector<8x128xf32>
    %427 = arith.addf %425, %426 : vector<8x128xf32>
    %cst_126 = arith.constant 0.000000e+00 : f32
    %428 = vector.broadcast %cst_126 : f32 to vector<8x128xf32>
    %429 = arith.subf %428, %427 : vector<8x128xf32>
    %430 = math.exp %429 : vector<8x128xf32>
    %cst_127 = arith.constant 1.000000e+00 : f32
    %431 = vector.broadcast %cst_127 : f32 to vector<8x128xf32>
    %432 = arith.addf %431, %430 : vector<8x128xf32>
    %cst_128 = arith.constant 1.000000e+00 : f32
    %433 = vector.broadcast %cst_128 : f32 to vector<8x128xf32>
    %434 = arith.divf %433, %432 : vector<8x128xf32>
    %435 = vector.extract_strided_slice %423 {offsets = [0, 128], sizes = [8, 128], strides = [1, 1]} : vector<8x384xf32> to vector<8x128xf32>
    %436 = vector.extract_strided_slice %424 {offsets = [0, 128], sizes = [8, 128], strides = [1, 1]} : vector<8x384xf32> to vector<8x128xf32>
    %437 = arith.addf %435, %436 : vector<8x128xf32>
    %cst_129 = arith.constant 0.000000e+00 : f32
    %438 = vector.broadcast %cst_129 : f32 to vector<8x128xf32>
    %439 = arith.subf %438, %437 : vector<8x128xf32>
    %440 = math.exp %439 : vector<8x128xf32>
    %cst_130 = arith.constant 1.000000e+00 : f32
    %441 = vector.broadcast %cst_130 : f32 to vector<8x128xf32>
    %442 = arith.addf %441, %440 : vector<8x128xf32>
    %cst_131 = arith.constant 1.000000e+00 : f32
    %443 = vector.broadcast %cst_131 : f32 to vector<8x128xf32>
    %444 = arith.divf %443, %442 : vector<8x128xf32>
    %445 = vector.extract_strided_slice %423 {offsets = [0, 256], sizes = [8, 128], strides = [1, 1]} : vector<8x384xf32> to vector<8x128xf32>
    %446 = vector.extract_strided_slice %424 {offsets = [0, 256], sizes = [8, 128], strides = [1, 1]} : vector<8x384xf32> to vector<8x128xf32>
    %447 = arith.addf %446, %11 : vector<8x128xf32>
    %448 = arith.mulf %434, %447 : vector<8x128xf32>
    %449 = arith.addf %445, %448 : vector<8x128xf32>
    %450 = math.tanh %449 : vector<8x128xf32>
    %cst_132 = arith.constant 1.000000e+00 : f32
    %451 = vector.broadcast %cst_132 : f32 to vector<8x128xf32>
    %452 = arith.subf %451, %444 : vector<8x128xf32>
    %453 = arith.mulf %452, %450 : vector<8x128xf32>
    %454 = arith.mulf %444, %418 : vector<8x128xf32>
    %455 = arith.addf %453, %454 : vector<8x128xf32>
    %456 = arith.addf %419, %455 : vector<8x128xf32>
    %c12_i32 = arith.constant 12 : i32
    %c8_i32_133 = arith.constant 8 : i32
    %457 = arith.muli %c12_i32, %c8_i32_133 : i32
    %458 = tpu.assume_multiple %457, 8 : i32
    %459 = arith.index_cast %458 : i32 to index
    %c0_134 = arith.constant 0 : index
    %460 = vector.load %arg7[%459, %c0_134] : memref<128x384xf32, #tpu.memory_space<vmem>>, vector<8x384xf32>
    %cst_135 = arith.constant dense<0.000000e+00> : vector<8x384xf32>
    %461 = tpu.matmul %455, %8, %cst_135 {dimension_numbers = #tpu.dot_dimension_numbers<[1], [0], [0], [1], [0, 0, 1, 1], [], []>} : vector<8x128xf32>, vector<128x384xf32>, vector<8x384xf32> -> vector<8x384xf32>
    %462 = vector.extract_strided_slice %460 {offsets = [0, 0], sizes = [8, 128], strides = [1, 1]} : vector<8x384xf32> to vector<8x128xf32>
    %463 = vector.extract_strided_slice %461 {offsets = [0, 0], sizes = [8, 128], strides = [1, 1]} : vector<8x384xf32> to vector<8x128xf32>
    %464 = arith.addf %462, %463 : vector<8x128xf32>
    %cst_136 = arith.constant 0.000000e+00 : f32
    %465 = vector.broadcast %cst_136 : f32 to vector<8x128xf32>
    %466 = arith.subf %465, %464 : vector<8x128xf32>
    %467 = math.exp %466 : vector<8x128xf32>
    %cst_137 = arith.constant 1.000000e+00 : f32
    %468 = vector.broadcast %cst_137 : f32 to vector<8x128xf32>
    %469 = arith.addf %468, %467 : vector<8x128xf32>
    %cst_138 = arith.constant 1.000000e+00 : f32
    %470 = vector.broadcast %cst_138 : f32 to vector<8x128xf32>
    %471 = arith.divf %470, %469 : vector<8x128xf32>
    %472 = vector.extract_strided_slice %460 {offsets = [0, 128], sizes = [8, 128], strides = [1, 1]} : vector<8x384xf32> to vector<8x128xf32>
    %473 = vector.extract_strided_slice %461 {offsets = [0, 128], sizes = [8, 128], strides = [1, 1]} : vector<8x384xf32> to vector<8x128xf32>
    %474 = arith.addf %472, %473 : vector<8x128xf32>
    %cst_139 = arith.constant 0.000000e+00 : f32
    %475 = vector.broadcast %cst_139 : f32 to vector<8x128xf32>
    %476 = arith.subf %475, %474 : vector<8x128xf32>
    %477 = math.exp %476 : vector<8x128xf32>
    %cst_140 = arith.constant 1.000000e+00 : f32
    %478 = vector.broadcast %cst_140 : f32 to vector<8x128xf32>
    %479 = arith.addf %478, %477 : vector<8x128xf32>
    %cst_141 = arith.constant 1.000000e+00 : f32
    %480 = vector.broadcast %cst_141 : f32 to vector<8x128xf32>
    %481 = arith.divf %480, %479 : vector<8x128xf32>
    %482 = vector.extract_strided_slice %460 {offsets = [0, 256], sizes = [8, 128], strides = [1, 1]} : vector<8x384xf32> to vector<8x128xf32>
    %483 = vector.extract_strided_slice %461 {offsets = [0, 256], sizes = [8, 128], strides = [1, 1]} : vector<8x384xf32> to vector<8x128xf32>
    %484 = arith.addf %483, %11 : vector<8x128xf32>
    %485 = arith.mulf %471, %484 : vector<8x128xf32>
    %486 = arith.addf %482, %485 : vector<8x128xf32>
    %487 = math.tanh %486 : vector<8x128xf32>
    %cst_142 = arith.constant 1.000000e+00 : f32
    %488 = vector.broadcast %cst_142 : f32 to vector<8x128xf32>
    %489 = arith.subf %488, %481 : vector<8x128xf32>
    %490 = arith.mulf %489, %487 : vector<8x128xf32>
    %491 = arith.mulf %481, %455 : vector<8x128xf32>
    %492 = arith.addf %490, %491 : vector<8x128xf32>
    %493 = arith.addf %456, %492 : vector<8x128xf32>
    %c13_i32 = arith.constant 13 : i32
    %c8_i32_143 = arith.constant 8 : i32
    %494 = arith.muli %c13_i32, %c8_i32_143 : i32
    %495 = tpu.assume_multiple %494, 8 : i32
    %496 = arith.index_cast %495 : i32 to index
    %c0_144 = arith.constant 0 : index
    %497 = vector.load %arg7[%496, %c0_144] : memref<128x384xf32, #tpu.memory_space<vmem>>, vector<8x384xf32>
    %cst_145 = arith.constant dense<0.000000e+00> : vector<8x384xf32>
    %498 = tpu.matmul %492, %8, %cst_145 {dimension_numbers = #tpu.dot_dimension_numbers<[1], [0], [0], [1], [0, 0, 1, 1], [], []>} : vector<8x128xf32>, vector<128x384xf32>, vector<8x384xf32> -> vector<8x384xf32>
    %499 = vector.extract_strided_slice %497 {offsets = [0, 0], sizes = [8, 128], strides = [1, 1]} : vector<8x384xf32> to vector<8x128xf32>
    %500 = vector.extract_strided_slice %498 {offsets = [0, 0], sizes = [8, 128], strides = [1, 1]} : vector<8x384xf32> to vector<8x128xf32>
    %501 = arith.addf %499, %500 : vector<8x128xf32>
    %cst_146 = arith.constant 0.000000e+00 : f32
    %502 = vector.broadcast %cst_146 : f32 to vector<8x128xf32>
    %503 = arith.subf %502, %501 : vector<8x128xf32>
    %504 = math.exp %503 : vector<8x128xf32>
    %cst_147 = arith.constant 1.000000e+00 : f32
    %505 = vector.broadcast %cst_147 : f32 to vector<8x128xf32>
    %506 = arith.addf %505, %504 : vector<8x128xf32>
    %cst_148 = arith.constant 1.000000e+00 : f32
    %507 = vector.broadcast %cst_148 : f32 to vector<8x128xf32>
    %508 = arith.divf %507, %506 : vector<8x128xf32>
    %509 = vector.extract_strided_slice %497 {offsets = [0, 128], sizes = [8, 128], strides = [1, 1]} : vector<8x384xf32> to vector<8x128xf32>
    %510 = vector.extract_strided_slice %498 {offsets = [0, 128], sizes = [8, 128], strides = [1, 1]} : vector<8x384xf32> to vector<8x128xf32>
    %511 = arith.addf %509, %510 : vector<8x128xf32>
    %cst_149 = arith.constant 0.000000e+00 : f32
    %512 = vector.broadcast %cst_149 : f32 to vector<8x128xf32>
    %513 = arith.subf %512, %511 : vector<8x128xf32>
    %514 = math.exp %513 : vector<8x128xf32>
    %cst_150 = arith.constant 1.000000e+00 : f32
    %515 = vector.broadcast %cst_150 : f32 to vector<8x128xf32>
    %516 = arith.addf %515, %514 : vector<8x128xf32>
    %cst_151 = arith.constant 1.000000e+00 : f32
    %517 = vector.broadcast %cst_151 : f32 to vector<8x128xf32>
    %518 = arith.divf %517, %516 : vector<8x128xf32>
    %519 = vector.extract_strided_slice %497 {offsets = [0, 256], sizes = [8, 128], strides = [1, 1]} : vector<8x384xf32> to vector<8x128xf32>
    %520 = vector.extract_strided_slice %498 {offsets = [0, 256], sizes = [8, 128], strides = [1, 1]} : vector<8x384xf32> to vector<8x128xf32>
    %521 = arith.addf %520, %11 : vector<8x128xf32>
    %522 = arith.mulf %508, %521 : vector<8x128xf32>
    %523 = arith.addf %519, %522 : vector<8x128xf32>
    %524 = math.tanh %523 : vector<8x128xf32>
    %cst_152 = arith.constant 1.000000e+00 : f32
    %525 = vector.broadcast %cst_152 : f32 to vector<8x128xf32>
    %526 = arith.subf %525, %518 : vector<8x128xf32>
    %527 = arith.mulf %526, %524 : vector<8x128xf32>
    %528 = arith.mulf %518, %492 : vector<8x128xf32>
    %529 = arith.addf %527, %528 : vector<8x128xf32>
    %530 = arith.addf %493, %529 : vector<8x128xf32>
    %c14_i32 = arith.constant 14 : i32
    %c8_i32_153 = arith.constant 8 : i32
    %531 = arith.muli %c14_i32, %c8_i32_153 : i32
    %532 = tpu.assume_multiple %531, 8 : i32
    %533 = arith.index_cast %532 : i32 to index
    %c0_154 = arith.constant 0 : index
    %534 = vector.load %arg7[%533, %c0_154] : memref<128x384xf32, #tpu.memory_space<vmem>>, vector<8x384xf32>
    %cst_155 = arith.constant dense<0.000000e+00> : vector<8x384xf32>
    %535 = tpu.matmul %529, %8, %cst_155 {dimension_numbers = #tpu.dot_dimension_numbers<[1], [0], [0], [1], [0, 0, 1, 1], [], []>} : vector<8x128xf32>, vector<128x384xf32>, vector<8x384xf32> -> vector<8x384xf32>
    %536 = vector.extract_strided_slice %534 {offsets = [0, 0], sizes = [8, 128], strides = [1, 1]} : vector<8x384xf32> to vector<8x128xf32>
    %537 = vector.extract_strided_slice %535 {offsets = [0, 0], sizes = [8, 128], strides = [1, 1]} : vector<8x384xf32> to vector<8x128xf32>
    %538 = arith.addf %536, %537 : vector<8x128xf32>
    %cst_156 = arith.constant 0.000000e+00 : f32
    %539 = vector.broadcast %cst_156 : f32 to vector<8x128xf32>
    %540 = arith.subf %539, %538 : vector<8x128xf32>
    %541 = math.exp %540 : vector<8x128xf32>
    %cst_157 = arith.constant 1.000000e+00 : f32
    %542 = vector.broadcast %cst_157 : f32 to vector<8x128xf32>
    %543 = arith.addf %542, %541 : vector<8x128xf32>
    %cst_158 = arith.constant 1.000000e+00 : f32
    %544 = vector.broadcast %cst_158 : f32 to vector<8x128xf32>
    %545 = arith.divf %544, %543 : vector<8x128xf32>
    %546 = vector.extract_strided_slice %534 {offsets = [0, 128], sizes = [8, 128], strides = [1, 1]} : vector<8x384xf32> to vector<8x128xf32>
    %547 = vector.extract_strided_slice %535 {offsets = [0, 128], sizes = [8, 128], strides = [1, 1]} : vector<8x384xf32> to vector<8x128xf32>
    %548 = arith.addf %546, %547 : vector<8x128xf32>
    %cst_159 = arith.constant 0.000000e+00 : f32
    %549 = vector.broadcast %cst_159 : f32 to vector<8x128xf32>
    %550 = arith.subf %549, %548 : vector<8x128xf32>
    %551 = math.exp %550 : vector<8x128xf32>
    %cst_160 = arith.constant 1.000000e+00 : f32
    %552 = vector.broadcast %cst_160 : f32 to vector<8x128xf32>
    %553 = arith.addf %552, %551 : vector<8x128xf32>
    %cst_161 = arith.constant 1.000000e+00 : f32
    %554 = vector.broadcast %cst_161 : f32 to vector<8x128xf32>
    %555 = arith.divf %554, %553 : vector<8x128xf32>
    %556 = vector.extract_strided_slice %534 {offsets = [0, 256], sizes = [8, 128], strides = [1, 1]} : vector<8x384xf32> to vector<8x128xf32>
    %557 = vector.extract_strided_slice %535 {offsets = [0, 256], sizes = [8, 128], strides = [1, 1]} : vector<8x384xf32> to vector<8x128xf32>
    %558 = arith.addf %557, %11 : vector<8x128xf32>
    %559 = arith.mulf %545, %558 : vector<8x128xf32>
    %560 = arith.addf %556, %559 : vector<8x128xf32>
    %561 = math.tanh %560 : vector<8x128xf32>
    %cst_162 = arith.constant 1.000000e+00 : f32
    %562 = vector.broadcast %cst_162 : f32 to vector<8x128xf32>
    %563 = arith.subf %562, %555 : vector<8x128xf32>
    %564 = arith.mulf %563, %561 : vector<8x128xf32>
    %565 = arith.mulf %555, %529 : vector<8x128xf32>
    %566 = arith.addf %564, %565 : vector<8x128xf32>
    %567 = arith.addf %530, %566 : vector<8x128xf32>
    %c15_i32 = arith.constant 15 : i32
    %c8_i32_163 = arith.constant 8 : i32
    %568 = arith.muli %c15_i32, %c8_i32_163 : i32
    %569 = tpu.assume_multiple %568, 8 : i32
    %570 = arith.index_cast %569 : i32 to index
    %c0_164 = arith.constant 0 : index
    %571 = vector.load %arg7[%570, %c0_164] : memref<128x384xf32, #tpu.memory_space<vmem>>, vector<8x384xf32>
    %cst_165 = arith.constant dense<0.000000e+00> : vector<8x384xf32>
    %572 = tpu.matmul %566, %8, %cst_165 {dimension_numbers = #tpu.dot_dimension_numbers<[1], [0], [0], [1], [0, 0, 1, 1], [], []>} : vector<8x128xf32>, vector<128x384xf32>, vector<8x384xf32> -> vector<8x384xf32>
    %573 = vector.extract_strided_slice %571 {offsets = [0, 0], sizes = [8, 128], strides = [1, 1]} : vector<8x384xf32> to vector<8x128xf32>
    %574 = vector.extract_strided_slice %572 {offsets = [0, 0], sizes = [8, 128], strides = [1, 1]} : vector<8x384xf32> to vector<8x128xf32>
    %575 = arith.addf %573, %574 : vector<8x128xf32>
    %cst_166 = arith.constant 0.000000e+00 : f32
    %576 = vector.broadcast %cst_166 : f32 to vector<8x128xf32>
    %577 = arith.subf %576, %575 : vector<8x128xf32>
    %578 = math.exp %577 : vector<8x128xf32>
    %cst_167 = arith.constant 1.000000e+00 : f32
    %579 = vector.broadcast %cst_167 : f32 to vector<8x128xf32>
    %580 = arith.addf %579, %578 : vector<8x128xf32>
    %cst_168 = arith.constant 1.000000e+00 : f32
    %581 = vector.broadcast %cst_168 : f32 to vector<8x128xf32>
    %582 = arith.divf %581, %580 : vector<8x128xf32>
    %583 = vector.extract_strided_slice %571 {offsets = [0, 128], sizes = [8, 128], strides = [1, 1]} : vector<8x384xf32> to vector<8x128xf32>
    %584 = vector.extract_strided_slice %572 {offsets = [0, 128], sizes = [8, 128], strides = [1, 1]} : vector<8x384xf32> to vector<8x128xf32>
    %585 = arith.addf %583, %584 : vector<8x128xf32>
    %cst_169 = arith.constant 0.000000e+00 : f32
    %586 = vector.broadcast %cst_169 : f32 to vector<8x128xf32>
    %587 = arith.subf %586, %585 : vector<8x128xf32>
    %588 = math.exp %587 : vector<8x128xf32>
    %cst_170 = arith.constant 1.000000e+00 : f32
    %589 = vector.broadcast %cst_170 : f32 to vector<8x128xf32>
    %590 = arith.addf %589, %588 : vector<8x128xf32>
    %cst_171 = arith.constant 1.000000e+00 : f32
    %591 = vector.broadcast %cst_171 : f32 to vector<8x128xf32>
    %592 = arith.divf %591, %590 : vector<8x128xf32>
    %593 = vector.extract_strided_slice %571 {offsets = [0, 256], sizes = [8, 128], strides = [1, 1]} : vector<8x384xf32> to vector<8x128xf32>
    %594 = vector.extract_strided_slice %572 {offsets = [0, 256], sizes = [8, 128], strides = [1, 1]} : vector<8x384xf32> to vector<8x128xf32>
    %595 = arith.addf %594, %11 : vector<8x128xf32>
    %596 = arith.mulf %582, %595 : vector<8x128xf32>
    %597 = arith.addf %593, %596 : vector<8x128xf32>
    %598 = math.tanh %597 : vector<8x128xf32>
    %cst_172 = arith.constant 1.000000e+00 : f32
    %599 = vector.broadcast %cst_172 : f32 to vector<8x128xf32>
    %600 = arith.subf %599, %592 : vector<8x128xf32>
    %601 = arith.mulf %600, %598 : vector<8x128xf32>
    %602 = arith.mulf %592, %566 : vector<8x128xf32>
    %603 = arith.addf %601, %602 : vector<8x128xf32>
    %604 = arith.addf %567, %603 : vector<8x128xf32>
    %c16_i32 = arith.constant 16 : i32
    %cst_173 = arith.constant 6.250000e-02 : f32
    %605 = vector.broadcast %cst_173 : f32 to vector<8x128xf32>
    %606 = arith.mulf %604, %605 : vector<8x128xf32>
    %c0_174 = arith.constant 0 : index
    %c0_175 = arith.constant 0 : index
    %607 = vector.load %arg6[%c0_174, %c0_175] : memref<8x128xf32, #tpu.memory_space<vmem>>, vector<8x128xf32>
    tpu.vector_store %arg6[%c0_174, %c0_175], %606 {strides = array<i32>} : memref<8x128xf32, #tpu.memory_space<vmem>>, vector<8x128xf32>,
    return
  }
  func.func @transform_0(%arg0: i32) -> (i32, i32, i32) {
    %c0_i32 = arith.constant 0 : i32
    %c0_i32_0 = arith.constant 0 : i32
    %c0_i32_1 = arith.constant 0 : i32
    return %arg0, %c0_i32, %c0_i32_0 : i32, i32, i32
  }
  func.func @transform_1(%arg0: i32) -> (i32, i32) {
    %c0_i32 = arith.constant 0 : i32
    %c0_i32_0 = arith.constant 0 : i32
    %c0_i32_1 = arith.constant 0 : i32
    return %c0_i32, %c0_i32_0 : i32, i32
  }
  func.func @transform_2(%arg0: i32) -> (i32, i32) {
    %c0_i32 = arith.constant 0 : i32
    %c0_i32_0 = arith.constant 0 : i32
    %c0_i32_1 = arith.constant 0 : i32
    return %c0_i32, %c0_i32_0 : i32, i32
  }
  func.func @transform_3(%arg0: i32) -> (i32, i32) {
    %c0_i32 = arith.constant 0 : i32
    %c0_i32_0 = arith.constant 0 : i32
    %c0_i32_1 = arith.constant 0 : i32
    return %c0_i32, %c0_i32_0 : i32, i32
  }
  func.func @transform_4(%arg0: i32) -> (i32, i32) {
    %c0_i32 = arith.constant 0 : i32
    %c0_i32_0 = arith.constant 0 : i32
    %c0_i32_1 = arith.constant 0 : i32
    return %c0_i32, %c0_i32_0 : i32, i32
  }
  func.func @transform_5(%arg0: i32) -> (i32, i32) {
    %c0_i32 = arith.constant 0 : i32
    %c0_i32_0 = arith.constant 0 : i32
    return %arg0, %c0_i32 : i32, i32
  }
}

</mosaic_0001>

<llo_original>
// kernel: tpu_custom_call.1
$region0: #{tpu_custom_call.1}
  #allocation0 [shape = 'u32[]', space=smem, size = 0x4, offset = 0x4, fixed_abs, tag = 'smem constant byte address 0x4 - core index']
  #allocation1 [shape = 'u32[144,128]{1,0:T(1,128)}', space=vmem, size = 0x12000, scoped, tag = 'internal scratch']
  #allocation2 [shape = 'f32[128,384]{1,0:T(8,128)}', space=vmem, size = 0x30000, scoped, tag = 'scratch operand']
  %s0 = inlined_call_operand.vmem [shape: f32[2,128,23], index: 0, kind: input, shape index: {}]
  %s1 = inlined_call_operand.vmem [shape: f32[23,384], index: 1, kind: input, shape index: {}]
  %s2 = inlined_call_operand.hbm [shape: f32[128,384], index: 2, kind: input, shape index: {}]
  %s3 = inlined_call_operand.vmem [shape: f32[1,384], index: 3, kind: input, shape index: {}]
  %s4 = inlined_call_operand.vmem [shape: f32[1,128], index: 4, kind: input, shape index: {}]
  %s5 = inlined_call_operand.hbm [shape: f32[16,128], index: 5, kind: output, shape index: {}]
  %s6 = sld [smem:[#allocation0]]
  $region57: #{tpu_custom_call.1} parent=0
    _
  %s8 = ssub.s32 1, %s6
  %s9 = scalar_select 0, %s8, %s6
  $region1: #{tpu_custom_call.1} parent=0
    #allocation3 [shape = 'u8[196608]{0}', space=vmem, size = 0x30000, scoped, tag = 'input window, operand 2, single buffered']
    #allocation4 [shape = 's32[2]{0}', space=sflag, size = 0x8, scoped, tag = 'scoped memory for tpu_custom_call.1']
    #allocation5 [shape = 's32[2]{0}', space=sflag, size = 0x8, scoped, tag = 'scoped memory for tpu_custom_call.1']
    #allocation6 [shape = 'u8[8192]{0}', space=vmem, size = 0x2000, scoped, tag = 'output window, operand 0']
    %10 = vsyncpa [#allocation4], 0
    %11 = vsyncpa [#allocation5], 0
    %s12 = scalar_lea.sflag [#allocation5], 1
    %13 = vsyncpa %s12, 0
    loop: start=0, step=1, limit=4
    $region2: #{tpu_custom_call.1} parent=1 // loop_pre_header
      _
    $region3: #{tpu_custom_call.1} parent=1 // loop_header
      %s15 = sphi 0, %s19
      %p16 = scmp.ge.s32.totalorder %s15, 4
      %s25 = sphi 0, %s27
      %s28 = sphi 0, %s25
      %s29 = sphi 0, %s28
      %s45 = sphi 0, %s29
      %s49 = sphi 0, %s49
      %s51 = sphi 0, %s49
      %s52 = sphi 0, %s51
      %s66 = sphi 0, %s52
      %s70 = sphi 0, %s70
      %s72 = sphi 0, %s70
      %s73 = sphi 0, %s72
      %s87 = sphi 0, %s73
      %s91 = sphi 0, %s91
      %s93 = sphi 0, %s91
      %s94 = sphi 0, %s93
      %s108 = sphi 0, %s94
      %s112 = sphi 0, %s112
      %s114 = sphi 0, %s112
      %s115 = sphi 0, %s114
      %s129 = sphi 0, %s115
      %s135 = sphi 0, %s137
      %s138 = sphi 0, %s135
      %s139 = sphi 0, %s138
      %s155 = sphi 0, %s139
    $region4: #{tpu_custom_call.1} parent=1 // loop_header_branch
      %18 = sbr.rel (%p16) target = $region8
    $region5: #{tpu_custom_call.1} parent=1 // loop_body
      %s20 = ssub.s32 %s15, 1
      %s21 = ssub.s32 %s15, 2
      %s22 = sadd.s32 %s15, 1
      %s23 = ssub.s32 %s15, %s22
      %p24 = scmp.eq.s32.totalorder %s23, 0
      %s26 = sadd.s32 %s25, 1
      %s27 = scalar_select %p24, %s25, %s26
      %p30 = pneg %p24
      %p31 = scmp.eq.s32.totalorder %s15, 1
      %p32 = por %p30, %p31
      %p33 = scmp.ne.s32.totalorder %s25, %s28
      %p34 = scmp.eq.s32.totalorder %s15, 0
      %p35 = por %p33, %p34
      %p36 = scmp.ne.s32.totalorder %s25, %s28
      %p37 = scmp.eq.s32.totalorder %s20, 1
      %p38 = por %p36, %p37
      %p39 = scmp.ne.s32.totalorder %s28, %s29
      %p40 = scmp.eq.s32.totalorder %s20, 0
      %p41 = por %p39, %p40
      %p42 = scmp.ne.s32.totalorder %s28, %s29
      %p43 = scmp.eq.s32.totalorder %s21, 1
      %p44 = por %p42, %p43
      %p46 = scmp.ne.s32.totalorder %s29, %s45
      %p47 = scmp.eq.s32.totalorder %s21, 0
      %p48 = por %p46, %p47
      %s50 = sadd.s32 %s49, 1
      %p53 = scmp.eq.s32.totalorder %s15, 1
      %p54 = scmp.ne.s32.totalorder %s49, %s51
      %p55 = scmp.eq.s32.totalorder %s15, 0
      %p56 = por %p54, %p55
      %p57 = scmp.ne.s32.totalorder %s49, %s51
      %p58 = scmp.eq.s32.totalorder %s20, 1
      %p59 = por %p57, %p58
      %p60 = scmp.ne.s32.totalorder %s51, %s52
      %p61 = scmp.eq.s32.totalorder %s20, 0
      %p62 = por %p60, %p61
      %p63 = scmp.ne.s32.totalorder %s51, %s52
      %p64 = scmp.eq.s32.totalorder %s21, 1
      %p65 = por %p63, %p64
      %p67 = scmp.ne.s32.totalorder %s52, %s66
      %p68 = scmp.eq.s32.totalorder %s21, 0
      %p69 = por %p67, %p68
      %s71 = sadd.s32 %s70, 1
      %p74 = scmp.eq.s32.totalorder %s15, 1
      %p75 = scmp.ne.s32.totalorder %s70, %s72
      %p76 = scmp.eq.s32.totalorder %s15, 0
      %p77 = por %p75, %p76
      %p78 = scmp.ne.s32.totalorder %s70, %s72
      %p79 = scmp.eq.s32.totalorder %s20, 1
      %p80 = por %p78, %p79
      %p81 = scmp.ne.s32.totalorder %s72, %s73
      %p82 = scmp.eq.s32.totalorder %s20, 0
      %p83 = por %p81, %p82
      %p84 = scmp.ne.s32.totalorder %s72, %s73
      %p85 = scmp.eq.s32.totalorder %s21, 1
      %p86 = por %p84, %p85
      %p88 = scmp.ne.s32.totalorder %s73, %s87
      %p89 = scmp.eq.s32.totalorder %s21, 0
      %p90 = por %p88, %p89
      %s92 = sadd.s32 %s91, 1
      %p95 = scmp.eq.s32.totalorder %s15, 1
      %p96 = scmp.ne.s32.totalorder %s91, %s93
      %p97 = scmp.eq.s32.totalorder %s15, 0
      %p98 = por %p96, %p97
      %p99 = scmp.ne.s32.totalorder %s91, %s93
      %p100 = scmp.eq.s32.totalorder %s20, 1
      %p101 = por %p99, %p100
      %p102 = scmp.ne.s32.totalorder %s93, %s94
      %p103 = scmp.eq.s32.totalorder %s20, 0
      %p104 = por %p102, %p103
      %p105 = scmp.ne.s32.totalorder %s93, %s94
      %p106 = scmp.eq.s32.totalorder %s21, 1
      %p107 = por %p105, %p106
      %p109 = scmp.ne.s32.totalorder %s94, %s108
      %p110 = scmp.eq.s32.totalorder %s21, 0
      %p111 = por %p109, %p110
      %s113 = sadd.s32 %s112, 1
      %p116 = scmp.eq.s32.totalorder %s15, 1
      %p117 = scmp.ne.s32.totalorder %s112, %s114
      %p118 = scmp.eq.s32.totalorder %s15, 0
      %p119 = por %p117, %p118
      %p120 = scmp.ne.s32.totalorder %s112, %s114
      %p121 = scmp.eq.s32.totalorder %s20, 1
      %p122 = por %p120, %p121
      %p123 = scmp.ne.s32.totalorder %s114, %s115
      %p124 = scmp.eq.s32.totalorder %s20, 0
      %p125 = por %p123, %p124
      %p126 = scmp.ne.s32.totalorder %s114, %s115
      %p127 = scmp.eq.s32.totalorder %s21, 1
      %p128 = por %p126, %p127
      %p130 = scmp.ne.s32.totalorder %s115, %s129
      %p131 = scmp.eq.s32.totalorder %s21, 0
      %p132 = por %p130, %p131
      %s133 = ssub.s32 %s15, %s22
      %p134 = scmp.eq.s32.totalorder %s133, 0
      %s136 = sadd.s32 %s135, 1
      %s137 = scalar_select %p134, %s135, %s136
      %p140 = pneg %p134
      %p141 = scmp.eq.s32.totalorder %s15, 1
      %p142 = por %p140, %p141
      %p143 = scmp.ne.s32.totalorder %s135, %s138
      %p144 = scmp.eq.s32.totalorder %s15, 0
      %p145 = por %p143, %p144
      %p146 = scmp.ne.s32.totalorder %s135, %s138
      %p147 = scmp.eq.s32.totalorder %s20, 1
      %p148 = por %p146, %p147
      %p149 = scmp.ne.s32.totalorder %s138, %s139
      %p150 = scmp.eq.s32.totalorder %s20, 0
      %p151 = por %p149, %p150
      %p152 = scmp.ne.s32.totalorder %s138, %s139
      %p153 = scmp.eq.s32.totalorder %s21, 1
      %p154 = por %p152, %p153
      %p156 = scmp.ne.s32.totalorder %s139, %s155
      %p157 = scmp.eq.s32.totalorder %s21, 0
      %p158 = por %p156, %p157
      %p159 = scmp.le.s32.totalorder 1, %s15
      %p160 = scmp.lt.s32.totalorder %s15, 3
      %p161 = pnand %p159, %p160
      %p162 = pneg %p161
      // Predicated region
      $region9: #{tpu_custom_call.1} parent=5 // pred_check
        _
      $region10: #{tpu_custom_call.1} parent=5 // pred_check_branch
        %164 = sbr.rel (%p161) target = $region12
      $region11: #{tpu_custom_call.1} parent=5 // pred_region
        %s165 = ssub.s32 %s15, 1
        // Predicated region
        $region13: #{tpu_custom_call.1} parent=11 // pred_check
          %p166 = pneg %p62
        $region14: #{tpu_custom_call.1} parent=11 // pred_check_branch
          %168 = sbr.rel (%p166) target = $region16
        $region15: #{tpu_custom_call.1} parent=11 // pred_region
          _
        $region16: #{tpu_custom_call.1} parent=11 // pred_fallthru
          _
        // Predicated region
        $region17: #{tpu_custom_call.1} parent=11 // pred_check
          %p169 = pneg %p83
        $region18: #{tpu_custom_call.1} parent=11 // pred_check_branch
          %171 = sbr.rel (%p169) target = $region20
        $region19: #{tpu_custom_call.1} parent=11 // pred_region
          %s173 = ssub.s32 6144, 6144
          %174 = vsyncadd [#allocation4], %s173
          %s175 = sshll.u32 [#allocation3], 4
          %s176 = int_to_ptr.vmem [resolvable:$true] %s175
          %181 = dma.hbm_to_vmem [thread:$0]  %s2, 6144, %s176, [#allocation4], 384, 384, 24
        $region20: #{tpu_custom_call.1} parent=11 // pred_fallthru
          _
        // Predicated region
        $region21: #{tpu_custom_call.1} parent=11 // pred_check
          %p182 = pneg %p104
        $region22: #{tpu_custom_call.1} parent=11 // pred_check_branch
          %184 = sbr.rel (%p182) target = $region24
        $region23: #{tpu_custom_call.1} parent=11 // pred_region
          _
        $region24: #{tpu_custom_call.1} parent=11 // pred_fallthru
          _
        // Predicated region
        $region25: #{tpu_custom_call.1} parent=11 // pred_check
          %p185 = pneg %p125
        $region26: #{tpu_custom_call.1} parent=11 // pred_check_branch
          %187 = sbr.rel (%p185) target = $region28
        $region27: #{tpu_custom_call.1} parent=11 // pred_region
          _
        $region28: #{tpu_custom_call.1} parent=11 // pred_fallthru
          _
      $region12: #{tpu_custom_call.1} parent=5 // pred_fallthru
        _
      %p188 = scmp.lt.s32.totalorder %s15, 2
      // Predicated region
      $region29: #{tpu_custom_call.1} parent=5 // pred_check
        %p189 = pneg %p188
      $region30: #{tpu_custom_call.1} parent=5 // pred_check_branch
        %191 = sbr.rel (%p189) target = $region32
      $region31: #{tpu_custom_call.1} parent=5 // pred_region
        // Predicated region
        $region33: #{tpu_custom_call.1} parent=31 // pred_check
          %p192 = pneg %p35
        $region34: #{tpu_custom_call.1} parent=31 // pred_check_branch
          %194 = sbr.rel (%p192) target = $region36
        $region35: #{tpu_custom_call.1} parent=31 // pred_region
          %p195 = scmp.lt.s32.totalorder %s15, 1
          %s196 = scalar_select %p195, %s15, 1
          %s197 = smul.addr %s196, 16
          %s198 = smul.addr %s197, 8
          %s199 = scalar_lea.vmem %s0, %s198
        $region36: #{tpu_custom_call.1} parent=31 // pred_fallthru
          _
      $region32: #{tpu_custom_call.1} parent=5 // pred_fallthru
        _
      %p200 = scmp.le.s32.totalorder 1, %s15
      %p201 = scmp.lt.s32.totalorder %s15, 3
      %p202 = pnand %p200, %p201
      %p203 = pneg %p202
      // Predicated region
      $region37: #{tpu_custom_call.1} parent=5 // pred_check
        _
      $region38: #{tpu_custom_call.1} parent=5 // pred_check_branch
        %205 = sbr.rel (%p202) target = $region40
      $region39: #{tpu_custom_call.1} parent=5 // pred_region
        %s206 = ssub.s32 %s15, 1
        // Predicated region
        $region41: #{tpu_custom_call.1} parent=39 // pred_check
          %p207 = pneg %p83
        $region42: #{tpu_custom_call.1} parent=39 // pred_check_branch
          %209 = sbr.rel (%p207) target = $region44
        $region43: #{tpu_custom_call.1} parent=39 // pred_region
          %210 = dma.done [#allocation4], 6144
        $region44: #{tpu_custom_call.1} parent=39 // pred_fallthru
          _
        %p211 = scmp.lt.s32.totalorder %s20, 1
        %s212 = scalar_select %p211, %s20, 1
        %s213 = smul.addr %s212, 16
        %s214 = smul.addr %s213, 8
        %s215 = scalar_lea.vmem %s0, %s214
        %p216 = pneg %p41
        %p217 = pneg %p38
        %p218 = pneg %p62
        %p219 = pneg %p59
        %p220 = pneg %p83
        %p221 = pneg %p80
        %p222 = pneg %p104
        %p223 = pneg %p101
        %p224 = pneg %p125
        %p225 = pneg %p122
        %p226 = pneg %p151
        %p227 = pneg %p148
        %s228 = sand.u32 %s138, 1
        %s229 = scalar_lea.sflag [#allocation5], %s228
        %s230 = sand.u32 %s138, 1
        %s231 = smul.addr %s230, 8
        %s232 = scalar_lea.vmem [#allocation6], %s231
        %p233 = scmp.lt.s32.totalorder %s20, 1
        %s234 = scalar_select %p233, %s20, 1
        %s235 = smul.addr %s234, 16
        %s236 = smul.addr %s235, 8
        %s237 = scalar_lea.vmem %s0, %s236
        %v238 = vld [vmem:[%s237] sm:$0xff]
        %v239 = vld [vmem:[%s237 + $0x8] sm:$0xff]
        %v240 = vld [vmem:[%s237 + $0x10] sm:$0xff]
        %v241 = vld [vmem:[%s237 + $0x18] sm:$0xff]
        %v242 = vld [vmem:[%s237 + $0x20] sm:$0xff]
        %v243 = vld [vmem:[%s237 + $0x28] sm:$0xff]
        %v244 = vld [vmem:[%s237 + $0x30] sm:$0xff]
        %v245 = vld [vmem:[%s237 + $0x38] sm:$0xff]
        %v246 = vld [vmem:[%s237 + $0x40] sm:$0xff]
        %v247 = vld [vmem:[%s237 + $0x48] sm:$0xff]
        %v248 = vld [vmem:[%s237 + $0x50] sm:$0xff]
        %v249 = vld [vmem:[%s237 + $0x58] sm:$0xff]
        %v250 = vld [vmem:[%s237 + $0x60] sm:$0xff]
        %v251 = vld [vmem:[%s237 + $0x68] sm:$0xff]
        %v252 = vld [vmem:[%s237 + $0x70] sm:$0xff]
        %v253 = vld [vmem:[%s237 + $0x78] sm:$0xff]
        %v254 = vld [vmem:[%s1] sm:$0xff]
        %v255 = vld [vmem:[%s1 + $0x8] sm:$0xff]
        %v256 = vld [vmem:[%s1 + $0x10] sm:$0xff]
        %v257 = vld [vmem:[%s1 + $0x18] sm:$0xff]
        %v258 = vld [vmem:[%s1 + $0x20] sm:$0xff]
        %v259 = vld [vmem:[%s1 + $0x28] sm:$0xff]
        %v260 = vld [vmem:[%s1 + $0x30] sm:$0x7f]
        %v261 = vld [vmem:[%s1 + $0x38] sm:$0x7f]
        %v262 = vld [vmem:[%s1 + $0x40] sm:$0x7f]
        %v263 = vld [vmem:[%s3] sm:$0x7]
        %v265 = vlaneseq
        %v266 = vshrl.u32 %v265, 7
        %v267 = vsub.s32 0, %v266
        %v268 = vrot.slane %v263, %v267
        %v269 = vlaneseq
        %v270 = vshrl.u32 %v269, 7
        %v271 = vsub.s32 1, %v270
        %v272 = vrot.slane %v263, %v271
        %v273 = vlaneseq
        %v274 = vshrl.u32 %v273, 7
        %v275 = vsub.s32 2, %v274
        %v276 = vrot.slane %v263, %v275
        %vm280 = vcmask 187392
        %v282 = vsel %vm280, %v238, 0
        %v285 = vsel %vm280, %v239, 0
        %v288 = vsel %vm280, %v240, 0
        %v291 = vsel %vm280, %v241, 0
        %v294 = vsel %vm280, %v242, 0
        %v297 = vsel %vm280, %v243, 0
        %v300 = vsel %vm280, %v244, 0
        %v303 = vsel %vm280, %v245, 0
        %v306 = vsel %vm280, %v246, 0
        %v309 = vsel %vm280, %v247, 0
        %v312 = vsel %vm280, %v248, 0
        %v315 = vsel %vm280, %v249, 0
        %v318 = vsel %vm280, %v250, 0
        %v321 = vsel %vm280, %v251, 0
        %v324 = vsel %vm280, %v252, 0
        %v327 = vsel %vm280, %v253, 0
        %vm329 = vcmask 1046528
        %v331 = vsel %vm329, %v260, 0
        %v334 = vsel %vm329, %v261, 0
        %v337 = vsel %vm329, %v262, 0
        %339 = vmatprep.subr.mxu0 %v255
        %340 = vmatpush1.msra.mxu0 %v254
        %341 = vmatprep.subr.mxu0 %v258
        %342 = vmatpush1.msra.mxu0 %v257
        %343 = vmatprep.subr.mxu0 %v334
        %344 = vmatpush1.msra.mxu0 %v331
        %345 = vmatprep.subr.mxu0 0.0
        %346 = vmatpush1.msra.mxu0 0.0
        %347 = vmatprep.subr.mxu0 0.0
        %348 = vmatpush1.msra.mxu0 0.0
        %349 = vmatprep.subr.mxu0 0.0
        %350 = vmatpush1.msra.mxu0 0.0
        %351 = vmatprep.subr.mxu0 0.0
        %352 = vmatpush1.msra.mxu0 0.0
        %353 = vmatprep.subr.mxu0 0.0
        %354 = vmatpush1.msra.mxu0 0.0
        %355 = vmatprep.subr.mxu0 0.0
        %356 = vmatpush1.msra.mxu0 0.0
        %357 = vmatprep.subr.mxu0 0.0
        %358 = vmatpush1.msra.mxu0 0.0
        %359 = vmatprep.subr.mxu0 0.0
        %360 = vmatpush1.msra.mxu0 0.0
        %361 = vmatprep.subr.mxu0 0.0
        %362 = vmatpush1.msra.mxu0 0.0
        %363 = vmatprep.subr.mxu0 0.0
        %364 = vmatpush1.msra.mxu0 0.0
        %365 = vmatprep.subr.mxu0 0.0
        %366 = vmatpush1.msra.mxu0 0.0
        %367 = vmatprep.subr.mxu0 0.0
        %368 = vmatpush1.msra.mxu0 0.0
        %369 = vmatprep.subr.mxu0 0.0
        %370 = vmatpush1.msra.mxu0 0.0
        %371 = vmatprep.subr.mxu0 0.0
        %372 = vmatpush1.msra.mxu0 0.0
        %373 = vmatprep.subr.mxu0 0.0
        %374 = vmatpush1.msra.mxu0 0.0
        %375 = vmatprep.subr.mxu0 0.0
        %376 = vmatpush1.msra.mxu0 0.0
        %377 = vmatprep.subr.mxu0 0.0
        %378 = vmatpush1.msra.mxu0 0.0
        %379 = vmatprep.subr.mxu0 0.0
        %380 = vmatpush1.msra.mxu0 0.0
        %381 = vmatprep.subr.mxu0 0.0
        %382 = vmatpush1.msra.mxu0 0.0
        %383 = vmatprep.subr.mxu0 0.0
        %384 = vmatpush1.msra.mxu0 0.0
        %385 = vmatprep.subr.mxu0 0.0
        %386 = vmatpush1.msra.mxu0 0.0
        %387 = vmatprep.subr.mxu0 0.0
        %388 = vmatpush1.msra.mxu0 0.0
        %389 = vmatprep.subr.mxu0 0.0
        %390 = vmatpush1.msra.mxu0 0.0
        %391 = vmatprep.subr.mxu0 0.0
        %392 = vmatpush1.msra.mxu0 0.0
        %393 = vmatprep.subr.mxu0 0.0
        %394 = vmatpush1.msra.mxu0 0.0
        %395 = vmatprep.subr.mxu0 0.0
        %396 = vmatpush1.msra.mxu0 0.0
        %397 = vmatprep.subr.mxu0 0.0
        %398 = vmatpush1.msra.mxu0 0.0
        %399 = vmatprep.subr.mxu0 0.0
        %400 = vmatpush1.msra.mxu0 0.0
        %401 = vmatprep.subr.mxu0 0.0
        %402 = vmatpush1.msra.mxu0 0.0
        %403 = vmatprep.mubr.f32.mxu0 0.0
        %404 = vmatmul.mubr.f32.gmra.mrb[0].mxu0 %v282
        %v405 = vpop.f32.mrb[0].mxu0
        %v406 = vadd.f32 %v268, %v405
        %v407 = vpop.f32.mrb[0].mxu0
        %v408 = vadd.f32 %v272, %v407
        %409 = vmatprep.mubr.f32.mxu0 0.0
        %410 = vmatmul.mubr.f32.gmra.mrb[0].mxu0 %v285
        %v411 = vpop.f32.mrb[0].mxu0
        %v412 = vadd.f32 %v268, %v411
        %v413 = vpop.f32.mrb[0].mxu0
        %v414 = vadd.f32 %v272, %v413
        %415 = vmatprep.mubr.f32.mxu0 0.0
        %416 = vmatmul.mubr.f32.gmra.mrb[0].mxu0 %v288
        %v417 = vpop.f32.mrb[0].mxu0
        %v418 = vadd.f32 %v268, %v417
        %v419 = vpop.f32.mrb[0].mxu0
        %v420 = vadd.f32 %v272, %v419
        %421 = vmatprep.mubr.f32.mxu0 0.0
        %422 = vmatmul.mubr.f32.gmra.mrb[0].mxu0 %v291
        %v423 = vpop.f32.mrb[0].mxu0
        %v424 = vadd.f32 %v268, %v423
        %v425 = vpop.f32.mrb[0].mxu0
        %v426 = vadd.f32 %v272, %v425
        %427 = vmatprep.mubr.f32.mxu0 0.0
        %428 = vmatmul.mubr.f32.gmra.mrb[0].mxu0 %v294
        %v429 = vpop.f32.mrb[0].mxu0
        %v430 = vadd.f32 %v268, %v429
        %v431 = vpop.f32.mrb[0].mxu0
        %v432 = vadd.f32 %v272, %v431
        %433 = vmatprep.mubr.f32.mxu0 0.0
        %434 = vmatmul.mubr.f32.gmra.mrb[0].mxu0 %v297
        %v435 = vpop.f32.mrb[0].mxu0
        %v436 = vadd.f32 %v268, %v435
        %v437 = vpop.f32.mrb[0].mxu0
        %v438 = vadd.f32 %v272, %v437
        %439 = vmatprep.mubr.f32.mxu0 0.0
        %440 = vmatmul.mubr.f32.gmra.mrb[0].mxu0 %v300
        %v441 = vpop.f32.mrb[0].mxu0
        %v442 = vadd.f32 %v268, %v441
        %v443 = vpop.f32.mrb[0].mxu0
        %v444 = vadd.f32 %v272, %v443
        %445 = vmatprep.mubr.f32.mxu0 0.0
        %446 = vmatmul.mubr.f32.gmra.mrb[0].mxu0 %v303
        %v447 = vpop.f32.mrb[0].mxu0
        %v448 = vadd.f32 %v268, %v447
        %v449 = vpop.f32.mrb[0].mxu0
        %v450 = vadd.f32 %v272, %v449
        %451 = vmatprep.mubr.f32.mxu0 0.0
        %452 = vmatmul.mubr.f32.gmra.mrb[0].mxu0 %v306
        %v453 = vpop.f32.mrb[0].mxu0
        %v454 = vadd.f32 %v268, %v453
        %v455 = vpop.f32.mrb[0].mxu0
        %v456 = vadd.f32 %v272, %v455
        %457 = vmatprep.mubr.f32.mxu0 0.0
        %458 = vmatmul.mubr.f32.gmra.mrb[0].mxu0 %v309
        %v459 = vpop.f32.mrb[0].mxu0
        %v460 = vadd.f32 %v268, %v459
        %v461 = vpop.f32.mrb[0].mxu0
        %v462 = vadd.f32 %v272, %v461
        %463 = vmatprep.mubr.f32.mxu0 0.0
        %464 = vmatmul.mubr.f32.gmra.mrb[0].mxu0 %v312
        %v465 = vpop.f32.mrb[0].mxu0
        %v466 = vadd.f32 %v268, %v465
        %v467 = vpop.f32.mrb[0].mxu0
        %v468 = vadd.f32 %v272, %v467
        %469 = vmatprep.mubr.f32.mxu0 0.0
        %470 = vmatmul.mubr.f32.gmra.mrb[0].mxu0 %v315
        %v471 = vpop.f32.mrb[0].mxu0
        %v472 = vadd.f32 %v268, %v471
        %v473 = vpop.f32.mrb[0].mxu0
        %v474 = vadd.f32 %v272, %v473
        %475 = vmatprep.mubr.f32.mxu0 0.0
        %476 = vmatmul.mubr.f32.gmra.mrb[0].mxu0 %v318
        %v477 = vpop.f32.mrb[0].mxu0
        %v478 = vadd.f32 %v268, %v477
        %v479 = vpop.f32.mrb[0].mxu0
        %v480 = vadd.f32 %v272, %v479
        %481 = vmatprep.mubr.f32.mxu0 0.0
        %482 = vmatmul.mubr.f32.gmra.mrb[0].mxu0 %v321
        %v483 = vpop.f32.mrb[0].mxu0
        %v484 = vadd.f32 %v268, %v483
        %v485 = vpop.f32.mrb[0].mxu0
        %v486 = vadd.f32 %v272, %v485
        %487 = vmatprep.mubr.f32.mxu0 0.0
        %488 = vmatmul.mubr.f32.gmra.mrb[0].mxu0 %v324
        %v489 = vpop.f32.mrb[0].mxu0
        %v490 = vadd.f32 %v268, %v489
        %v491 = vpop.f32.mrb[0].mxu0
        %v492 = vadd.f32 %v272, %v491
        %493 = vmatprep.mubr.f32.mxu0 0.0
        %494 = vmatmul.mubr.f32.gmra.mrb[0].mxu0 %v327
        %v495 = vpop.f32.mrb[0].mxu0
        %v496 = vadd.f32 %v268, %v495
        %v497 = vpop.f32.mrb[0].mxu0
        %v498 = vadd.f32 %v272, %v497
        %499 = vdwg.mxu0
        %500 = vmatprep.subr.mxu0 0.0
        %501 = vmatpush1.msra.mxu0 %v256
        %502 = vmatprep.subr.mxu0 0.0
        %503 = vmatpush1.msra.mxu0 %v259
        %504 = vmatprep.subr.mxu0 0.0
        %505 = vmatpush1.msra.mxu0 %v337
        %506 = vmatprep.subr.mxu0 0.0
        %507 = vmatpush1.msra.mxu0 0.0
        %508 = vmatprep.subr.mxu0 0.0
        %509 = vmatpush1.msra.mxu0 0.0
        %510 = vmatprep.subr.mxu0 0.0
        %511 = vmatpush1.msra.mxu0 0.0
        %512 = vmatprep.subr.mxu0 0.0
        %513 = vmatpush1.msra.mxu0 0.0
        %514 = vmatprep.subr.mxu0 0.0
        %515 = vmatpush1.msra.mxu0 0.0
        %516 = vmatprep.subr.mxu0 0.0
        %517 = vmatpush1.msra.mxu0 0.0
        %518 = vmatprep.subr.mxu0 0.0
        %519 = vmatpush1.msra.mxu0 0.0
        %520 = vmatprep.subr.mxu0 0.0
        %521 = vmatpush1.msra.mxu0 0.0
        %522 = vmatprep.subr.mxu0 0.0
        %523 = vmatpush1.msra.mxu0 0.0
        %524 = vmatprep.subr.mxu0 0.0
        %525 = vmatpush1.msra.mxu0 0.0
        %526 = vmatprep.subr.mxu0 0.0
        %527 = vmatpush1.msra.mxu0 0.0
        %528 = vmatprep.subr.mxu0 0.0
        %529 = vmatpush1.msra.mxu0 0.0
        %530 = vmatprep.subr.mxu0 0.0
        %531 = vmatpush1.msra.mxu0 0.0
        %532 = vmatprep.subr.mxu0 0.0
        %533 = vmatpush1.msra.mxu0 0.0
        %534 = vmatprep.subr.mxu0 0.0
        %535 = vmatpush1.msra.mxu0 0.0
        %536 = vmatprep.subr.mxu0 0.0
        %537 = vmatpush1.msra.mxu0 0.0
        %538 = vmatprep.subr.mxu0 0.0
        %539 = vmatpush1.msra.mxu0 0.0
        %540 = vmatprep.subr.mxu0 0.0
        %541 = vmatpush1.msra.mxu0 0.0
        %542 = vmatprep.subr.mxu0 0.0
        %543 = vmatpush1.msra.mxu0 0.0
        %544 = vmatprep.subr.mxu0 0.0
        %545 = vmatpush1.msra.mxu0 0.0
        %546 = vmatprep.subr.mxu0 0.0
        %547 = vmatpush1.msra.mxu0 0.0
        %548 = vmatprep.subr.mxu0 0.0
        %549 = vmatpush1.msra.mxu0 0.0
        %550 = vmatprep.subr.mxu0 0.0
        %551 = vmatpush1.msra.mxu0 0.0
        %552 = vmatprep.subr.mxu0 0.0
        %553 = vmatpush1.msra.mxu0 0.0
        %554 = vmatprep.subr.mxu0 0.0
        %555 = vmatpush1.msra.mxu0 0.0
        %556 = vmatprep.subr.mxu0 0.0
        %557 = vmatpush1.msra.mxu0 0.0
        %558 = vmatprep.subr.mxu0 0.0
        %559 = vmatpush1.msra.mxu0 0.0
        %560 = vmatprep.subr.mxu0 0.0
        %561 = vmatpush1.msra.mxu0 0.0
        %562 = vmatprep.subr.mxu0 0.0
        %563 = vmatpush1.msra.mxu0 0.0
        %564 = vmatprep.mubr.f32.mxu0 0.0
        %565 = vmatmul.mubr.f32.gmra.mrb[0].mxu0 %v282
        %v566 = vpop.f32.mrb[0].mxu0
        %v567 = vadd.f32 %v276, %v566
        %v568 = vpop.f32.mrb[0].mxu0
        %569 = vmatprep.mubr.f32.mxu0 0.0
        %570 = vmatmul.mubr.f32.gmra.mrb[0].mxu0 %v285
        %v571 = vpop.f32.mrb[0].mxu0
        %v572 = vadd.f32 %v276, %v571
        %v573 = vpop.f32.mrb[0].mxu0
        %574 = vmatprep.mubr.f32.mxu0 0.0
        %575 = vmatmul.mubr.f32.gmra.mrb[0].mxu0 %v288
        %v576 = vpop.f32.mrb[0].mxu0
        %v577 = vadd.f32 %v276, %v576
        %v578 = vpop.f32.mrb[0].mxu0
        %579 = vmatprep.mubr.f32.mxu0 0.0
        %580 = vmatmul.mubr.f32.gmra.mrb[0].mxu0 %v291
        %v581 = vpop.f32.mrb[0].mxu0
        %v582 = vadd.f32 %v276, %v581
        %v583 = vpop.f32.mrb[0].mxu0
        %584 = vmatprep.mubr.f32.mxu0 0.0
        %585 = vmatmul.mubr.f32.gmra.mrb[0].mxu0 %v294
        %v586 = vpop.f32.mrb[0].mxu0
        %v587 = vadd.f32 %v276, %v586
        %v588 = vpop.f32.mrb[0].mxu0
        %589 = vmatprep.mubr.f32.mxu0 0.0
        %590 = vmatmul.mubr.f32.gmra.mrb[0].mxu0 %v297
        %v591 = vpop.f32.mrb[0].mxu0
        %v592 = vadd.f32 %v276, %v591
        %v593 = vpop.f32.mrb[0].mxu0
        %594 = vmatprep.mubr.f32.mxu0 0.0
        %595 = vmatmul.mubr.f32.gmra.mrb[0].mxu0 %v300
        %v596 = vpop.f32.mrb[0].mxu0
        %v597 = vadd.f32 %v276, %v596
        %v598 = vpop.f32.mrb[0].mxu0
        %599 = vmatprep.mubr.f32.mxu0 0.0
        %600 = vmatmul.mubr.f32.gmra.mrb[0].mxu0 %v303
        %v601 = vpop.f32.mrb[0].mxu0
        %v602 = vadd.f32 %v276, %v601
        %v603 = vpop.f32.mrb[0].mxu0
        %604 = vmatprep.mubr.f32.mxu0 0.0
        %605 = vmatmul.mubr.f32.gmra.mrb[0].mxu0 %v306
        %v606 = vpop.f32.mrb[0].mxu0
        %v607 = vadd.f32 %v276, %v606
        %v608 = vpop.f32.mrb[0].mxu0
        %609 = vmatprep.mubr.f32.mxu0 0.0
        %610 = vmatmul.mubr.f32.gmra.mrb[0].mxu0 %v309
        %v611 = vpop.f32.mrb[0].mxu0
        %v612 = vadd.f32 %v276, %v611
        %v613 = vpop.f32.mrb[0].mxu0
        %614 = vmatprep.mubr.f32.mxu0 0.0
        %615 = vmatmul.mubr.f32.gmra.mrb[0].mxu0 %v312
        %v616 = vpop.f32.mrb[0].mxu0
        %v617 = vadd.f32 %v276, %v616
        %v618 = vpop.f32.mrb[0].mxu0
        %619 = vmatprep.mubr.f32.mxu0 0.0
        %620 = vmatmul.mubr.f32.gmra.mrb[0].mxu0 %v315
        %v621 = vpop.f32.mrb[0].mxu0
        %v622 = vadd.f32 %v276, %v621
        %v623 = vpop.f32.mrb[0].mxu0
        %624 = vmatprep.mubr.f32.mxu0 0.0
        %625 = vmatmul.mubr.f32.gmra.mrb[0].mxu0 %v318
        %v626 = vpop.f32.mrb[0].mxu0
        %v627 = vadd.f32 %v276, %v626
        %v628 = vpop.f32.mrb[0].mxu0
        %629 = vmatprep.mubr.f32.mxu0 0.0
        %630 = vmatmul.mubr.f32.gmra.mrb[0].mxu0 %v321
        %v631 = vpop.f32.mrb[0].mxu0
        %v632 = vadd.f32 %v276, %v631
        %v633 = vpop.f32.mrb[0].mxu0
        %634 = vmatprep.mubr.f32.mxu0 0.0
        %635 = vmatmul.mubr.f32.gmra.mrb[0].mxu0 %v324
        %v636 = vpop.f32.mrb[0].mxu0
        %v637 = vadd.f32 %v276, %v636
        %v638 = vpop.f32.mrb[0].mxu0
        %639 = vmatprep.mubr.f32.mxu0 0.0
        %640 = vmatmul.mubr.f32.gmra.mrb[0].mxu0 %v327
        %v641 = vpop.f32.mrb[0].mxu0
        %v642 = vadd.f32 %v276, %v641
        %v643 = vpop.f32.mrb[0].mxu0
        %644 = vdwg.mxu0
        %645 = vst [vmem:[#allocation2] sm:$0xff] %v406
        %646 = vst [vmem:[#allocation2 + $0x8] sm:$0xff] %v408
        %647 = vst [vmem:[#allocation2 + $0x10] sm:$0xff] %v567
        %648 = vst [vmem:[#allocation2 + $0x18] sm:$0xff] %v412
        %649 = vst [vmem:[#allocation2 + $0x20] sm:$0xff] %v414
        %650 = vst [vmem:[#allocation2 + $0x28] sm:$0xff] %v572
        %651 = vst [vmem:[#allocation2 + $0x30] sm:$0xff] %v418
        %652 = vst [vmem:[#allocation2 + $0x38] sm:$0xff] %v420
        %653 = vst [vmem:[#allocation2 + $0x40] sm:$0xff] %v577
        %654 = vst [vmem:[#allocation2 + $0x48] sm:$0xff] %v424
        %655 = vst [vmem:[#allocation2 + $0x50] sm:$0xff] %v426
        %656 = vst [vmem:[#allocation2 + $0x58] sm:$0xff] %v582
        %657 = vst [vmem:[#allocation2 + $0x60] sm:$0xff] %v430
        %658 = vst [vmem:[#allocation2 + $0x68] sm:$0xff] %v432
        %659 = vst [vmem:[#allocation2 + $0x70] sm:$0xff] %v587
        %660 = vst [vmem:[#allocation2 + $0x78] sm:$0xff] %v436
        %661 = vst [vmem:[#allocation2 + $0x80] sm:$0xff] %v438
        %662 = vst [vmem:[#allocation2 + $0x88] sm:$0xff] %v592
        %663 = vst [vmem:[#allocation2 + $0x90] sm:$0xff] %v442
        %664 = vst [vmem:[#allocation2 + $0x98] sm:$0xff] %v444
        %665 = vst [vmem:[#allocation2 + $0xa0] sm:$0xff] %v597
        %666 = vst [vmem:[#allocation2 + $0xa8] sm:$0xff] %v448
        %667 = vst [vmem:[#allocation2 + $0xb0] sm:$0xff] %v450
        %668 = vst [vmem:[#allocation2 + $0xb8] sm:$0xff] %v602
        %669 = vst [vmem:[#allocation2 + $0xc0] sm:$0xff] %v454
        %670 = vst [vmem:[#allocation2 + $0xc8] sm:$0xff] %v456
        %671 = vst [vmem:[#allocation2 + $0xd0] sm:$0xff] %v607
        %672 = vst [vmem:[#allocation2 + $0xd8] sm:$0xff] %v460
        %673 = vst [vmem:[#allocation2 + $0xe0] sm:$0xff] %v462
        %674 = vst [vmem:[#allocation2 + $0xe8] sm:$0xff] %v612
        %675 = vst [vmem:[#allocation2 + $0xf0] sm:$0xff] %v466
        %676 = vst [vmem:[#allocation2 + $0xf8] sm:$0xff] %v468
        %677 = vst [vmem:[#allocation2 + $0x100] sm:$0xff] %v617
        %678 = vst [vmem:[#allocation2 + $0x108] sm:$0xff] %v472
        %679 = vst [vmem:[#allocation2 + $0x110] sm:$0xff] %v474
        %680 = vst [vmem:[#allocation2 + $0x118] sm:$0xff] %v622
        %681 = vst [vmem:[#allocation2 + $0x120] sm:$0xff] %v478
        %682 = vst [vmem:[#allocation2 + $0x128] sm:$0xff] %v480
        %683 = vst [vmem:[#allocation2 + $0x130] sm:$0xff] %v627
        %684 = vst [vmem:[#allocation2 + $0x138] sm:$0xff] %v484
        %685 = vst [vmem:[#allocation2 + $0x140] sm:$0xff] %v486
        %686 = vst [vmem:[#allocation2 + $0x148] sm:$0xff] %v632
        %687 = vst [vmem:[#allocation2 + $0x150] sm:$0xff] %v490
        %688 = vst [vmem:[#allocation2 + $0x158] sm:$0xff] %v492
        %689 = vst [vmem:[#allocation2 + $0x160] sm:$0xff] %v637
        %690 = vst [vmem:[#allocation2 + $0x168] sm:$0xff] %v496
        %691 = vst [vmem:[#allocation2 + $0x170] sm:$0xff] %v498
        %692 = vst [vmem:[#allocation2 + $0x178] sm:$0xff] %v642
        %v693 = vld [vmem:[#allocation3] sm:$0xff]
        %v694 = vld [vmem:[#allocation3 + $0x8] sm:$0xff]
        %v695 = vld [vmem:[#allocation3 + $0x10] sm:$0xff]
        %v696 = vld [vmem:[#allocation3 + $0x18] sm:$0xff]
        %v697 = vld [vmem:[#allocation3 + $0x20] sm:$0xff]
        %v698 = vld [vmem:[#allocation3 + $0x28] sm:$0xff]
        %v699 = vld [vmem:[#allocation3 + $0x30] sm:$0xff]
        %v700 = vld [vmem:[#allocation3 + $0x38] sm:$0xff]
        %v701 = vld [vmem:[#allocation3 + $0x40] sm:$0xff]
        %v702 = vld [vmem:[#allocation3 + $0x48] sm:$0xff]
        %v703 = vld [vmem:[#allocation3 + $0x50] sm:$0xff]
        %v704 = vld [vmem:[#allocation3 + $0x58] sm:$0xff]
        %v705 = vld [vmem:[#allocation3 + $0x60] sm:$0xff]
        %v706 = vld [vmem:[#allocation3 + $0x68] sm:$0xff]
        %v707 = vld [vmem:[#allocation3 + $0x70] sm:$0xff]
        %v708 = vld [vmem:[#allocation3 + $0x78] sm:$0xff]
        %v709 = vld [vmem:[#allocation3 + $0x80] sm:$0xff]
        %v710 = vld [vmem:[#allocation3 + $0x88] sm:$0xff]
        %v711 = vld [vmem:[#allocation3 + $0x90] sm:$0xff]
        %v712 = vld [vmem:[#allocation3 + $0x98] sm:$0xff]
        %v713 = vld [vmem:[#allocation3 + $0xa0] sm:$0xff]
        %v714 = vld [vmem:[#allocation3 + $0xa8] sm:$0xff]
        %v715 = vld [vmem:[#allocation3 + $0xb0] sm:$0xff]
        %v716 = vld [vmem:[#allocation3 + $0xb8] sm:$0xff]
        %v717 = vld [vmem:[#allocation3 + $0xc0] sm:$0xff]
        %v718 = vld [vmem:[#allocation3 + $0xc8] sm:$0xff]
        %v719 = vld [vmem:[#allocation3 + $0xd0] sm:$0xff]
        %v720 = vld [vmem:[#allocation3 + $0xd8] sm:$0xff]
        %v721 = vld [vmem:[#allocation3 + $0xe0] sm:$0xff]
        %v722 = vld [vmem:[#allocation3 + $0xe8] sm:$0xff]
        %v723 = vld [vmem:[#allocation3 + $0xf0] sm:$0xff]
        %v724 = vld [vmem:[#allocation3 + $0xf8] sm:$0xff]
        %v725 = vld [vmem:[#allocation3 + $0x100] sm:$0xff]
        %v726 = vld [vmem:[#allocation3 + $0x108] sm:$0xff]
        %v727 = vld [vmem:[#allocation3 + $0x110] sm:$0xff]
        %v728 = vld [vmem:[#allocation3 + $0x118] sm:$0xff]
        %v729 = vld [vmem:[#allocation3 + $0x120] sm:$0xff]
        %v730 = vld [vmem:[#allocation3 + $0x128] sm:$0xff]
        %v731 = vld [vmem:[#allocation3 + $0x130] sm:$0xff]
        %v732 = vld [vmem:[#allocation3 + $0x138] sm:$0xff]
        %v733 = vld [vmem:[#allocation3 + $0x140] sm:$0xff]
        %v734 = vld [vmem:[#allocation3 + $0x148] sm:$0xff]
        %v735 = vld [vmem:[#allocation3 + $0x150] sm:$0xff]
        %v736 = vld [vmem:[#allocation3 + $0x158] sm:$0xff]
        %v737 = vld [vmem:[#allocation3 + $0x160] sm:$0xff]
        %v738 = vld [vmem:[#allocation3 + $0x168] sm:$0xff]
        %v739 = vld [vmem:[#allocation3 + $0x170] sm:$0xff]
        %v740 = vld [vmem:[#allocation3 + $0x178] sm:$0xff]
        %v741 = vld [vmem:[%s4] sm:$0x1]
        %v743 = vlaneseq
        %v744 = vshrl.u32 %v743, 7
        %v745 = vsub.s32 0, %v744
        %v746 = vrot.slane %v741, %v745
        %s748 = smul.u32 0, 3
        %s749 = smul.addr %s748, 8
        %s750 = scalar_lea.vmem [#allocation2], %s749
        %v751 = vld [vmem:[%s750] sm:$0xff]
        %v752 = vld [vmem:[%s750 + $0x8] sm:$0xff]
        %v753 = vld [vmem:[%s750 + $0x10] sm:$0xff]
        %754 = vmatprep.subr.mxu0 %v694
        %755 = vmatpush1.msra.mxu0 %v693
        %756 = vmatprep.subr.mxu0 %v697
        %757 = vmatpush1.msra.mxu0 %v696
        %758 = vmatprep.subr.mxu0 %v700
        %759 = vmatpush1.msra.mxu0 %v699
        %760 = vmatprep.subr.mxu0 %v703
        %761 = vmatpush1.msra.mxu0 %v702
        %762 = vmatprep.subr.mxu0 %v706
        %763 = vmatpush1.msra.mxu0 %v705
        %764 = vmatprep.subr.mxu0 %v709
        %765 = vmatpush1.msra.mxu0 %v708
        %766 = vmatprep.subr.mxu0 %v712
        %767 = vmatpush1.msra.mxu0 %v711
        %768 = vmatprep.subr.mxu0 %v715
        %769 = vmatpush1.msra.mxu0 %v714
        %770 = vmatprep.subr.mxu0 %v718
        %771 = vmatpush1.msra.mxu0 %v717
        %772 = vmatprep.subr.mxu0 %v721
        %773 = vmatpush1.msra.mxu0 %v720
        %774 = vmatprep.subr.mxu0 %v724
        %775 = vmatpush1.msra.mxu0 %v723
        %776 = vmatprep.subr.mxu0 %v727
        %777 = vmatpush1.msra.mxu0 %v726
        %778 = vmatprep.subr.mxu0 %v730
        %779 = vmatpush1.msra.mxu0 %v729
        %780 = vmatprep.subr.mxu0 %v733
        %781 = vmatpush1.msra.mxu0 %v732
        %782 = vmatprep.subr.mxu0 %v736
        %783 = vmatpush1.msra.mxu0 %v735
        %784 = vmatprep.subr.mxu0 %v739
        %785 = vmatpush1.msra.mxu0 %v738
        %786 = vmatprep.subr.mxu0 0.0
        %787 = vmatpush1.msra.mxu0 0.0
        %788 = vmatprep.subr.mxu0 0.0
        %789 = vmatpush1.msra.mxu0 0.0
        %790 = vmatprep.subr.mxu0 0.0
        %791 = vmatpush1.msra.mxu0 0.0
        %792 = vmatprep.subr.mxu0 0.0
        %793 = vmatpush1.msra.mxu0 0.0
        %794 = vmatprep.subr.mxu0 0.0
        %795 = vmatpush1.msra.mxu0 0.0
        %796 = vmatprep.subr.mxu0 0.0
        %797 = vmatpush1.msra.mxu0 0.0
        %798 = vmatprep.subr.mxu0 0.0
        %799 = vmatpush1.msra.mxu0 0.0
        %800 = vmatprep.subr.mxu0 0.0
        %801 = vmatpush1.msra.mxu0 0.0
        %802 = vmatprep.subr.mxu0 0.0
        %803 = vmatpush1.msra.mxu0 0.0
        %804 = vmatprep.subr.mxu0 0.0
        %805 = vmatpush1.msra.mxu0 0.0
        %806 = vmatprep.subr.mxu0 0.0
        %807 = vmatpush1.msra.mxu0 0.0
        %808 = vmatprep.subr.mxu0 0.0
        %809 = vmatpush1.msra.mxu0 0.0
        %810 = vmatprep.subr.mxu0 0.0
        %811 = vmatpush1.msra.mxu0 0.0
        %812 = vmatprep.subr.mxu0 0.0
        %813 = vmatpush1.msra.mxu0 0.0
        %814 = vmatprep.subr.mxu0 0.0
        %815 = vmatpush1.msra.mxu0 0.0
        %816 = vmatprep.subr.mxu0 0.0
        %817 = vmatpush1.msra.mxu0 0.0
        %818 = vmatprep.mubr.f32.mxu0 0.0
        %819 = vmatmul.mubr.f32.gmra.mrb[0].mxu0 0.0
        %v820 = vpop.f32.mrb[0].mxu0
        %v821 = vadd.f32 0.0, %v820
        %v822 = vpop.f32.mrb[0].mxu0
        %v823 = vadd.f32 0.0, %v822
        %824 = vdwg.mxu0
        %825 = vmatprep.subr.mxu0 0.0
        %826 = vmatpush1.msra.mxu0 %v695
        %827 = vmatprep.subr.mxu0 0.0
        %828 = vmatpush1.msra.mxu0 %v698
        %829 = vmatprep.subr.mxu0 0.0
        %830 = vmatpush1.msra.mxu0 %v701
        %831 = vmatprep.subr.mxu0 0.0
        %832 = vmatpush1.msra.mxu0 %v704
        %833 = vmatprep.subr.mxu0 0.0
        %834 = vmatpush1.msra.mxu0 %v707
        %835 = vmatprep.subr.mxu0 0.0
        %836 = vmatpush1.msra.mxu0 %v710
        %837 = vmatprep.subr.mxu0 0.0
        %838 = vmatpush1.msra.mxu0 %v713
        %839 = vmatprep.subr.mxu0 0.0
        %840 = vmatpush1.msra.mxu0 %v716
        %841 = vmatprep.subr.mxu0 0.0
        %842 = vmatpush1.msra.mxu0 %v719
        %843 = vmatprep.subr.mxu0 0.0
        %844 = vmatpush1.msra.mxu0 %v722
        %845 = vmatprep.subr.mxu0 0.0
        %846 = vmatpush1.msra.mxu0 %v725
        %847 = vmatprep.subr.mxu0 0.0
        %848 = vmatpush1.msra.mxu0 %v728
        %849 = vmatprep.subr.mxu0 0.0
        %850 = vmatpush1.msra.mxu0 %v731
        %851 = vmatprep.subr.mxu0 0.0
        %852 = vmatpush1.msra.mxu0 %v734
        %853 = vmatprep.subr.mxu0 0.0
        %854 = vmatpush1.msra.mxu0 %v737
        %855 = vmatprep.subr.mxu0 0.0
        %856 = vmatpush1.msra.mxu0 %v740
        %857 = vmatprep.subr.mxu0 0.0
        %858 = vmatpush1.msra.mxu0 0.0
        %859 = vmatprep.subr.mxu0 0.0
        %860 = vmatpush1.msra.mxu0 0.0
        %861 = vmatprep.subr.mxu0 0.0
        %862 = vmatpush1.msra.mxu0 0.0
        %863 = vmatprep.subr.mxu0 0.0
        %864 = vmatpush1.msra.mxu0 0.0
        %865 = vmatprep.subr.mxu0 0.0
        %866 = vmatpush1.msra.mxu0 0.0
        %867 = vmatprep.subr.mxu0 0.0
        %868 = vmatpush1.msra.mxu0 0.0
        %869 = vmatprep.subr.mxu0 0.0
        %870 = vmatpush1.msra.mxu0 0.0
        %871 = vmatprep.subr.mxu0 0.0
        %872 = vmatpush1.msra.mxu0 0.0
        %873 = vmatprep.subr.mxu0 0.0
        %874 = vmatpush1.msra.mxu0 0.0
        %875 = vmatprep.subr.mxu0 0.0
        %876 = vmatpush1.msra.mxu0 0.0
        %877 = vmatprep.subr.mxu0 0.0
        %878 = vmatpush1.msra.mxu0 0.0
        %879 = vmatprep.subr.mxu0 0.0
        %880 = vmatpush1.msra.mxu0 0.0
        %881 = vmatprep.subr.mxu0 0.0
        %882 = vmatpush1.msra.mxu0 0.0
        %883 = vmatprep.subr.mxu0 0.0
        %884 = vmatpush1.msra.mxu0 0.0
        %885 = vmatprep.subr.mxu0 0.0
        %886 = vmatpush1.msra.mxu0 0.0
        %887 = vmatprep.subr.mxu0 0.0
        %888 = vmatpush1.msra.mxu0 0.0
        %889 = vmatprep.mubr.f32.mxu0 0.0
        %890 = vmatmul.mubr.f32.gmra.mrb[0].mxu0 0.0
        %v891 = vpop.f32.mrb[0].mxu0
        %v892 = vadd.f32 0.0, %v891
        %v893 = vpop.f32.mrb[0].mxu0
        %894 = vdwg.mxu0
        %v895 = vadd.f32 %v751, %v821
        %v896 = vsub.f32 0.0, %v895
        %v897 = vmul.f32 %v896, 1.442695
        %v898 = vpow.pop %v897
        %v899 = vadd.f32 %v898, 1.0
        %v900 = vrcp.pop %v899
        %v901 = vmul.f32 1.0, %v900
        %v902 = vadd.f32 %v752, %v823
        %v903 = vsub.f32 0.0, %v902
        %v904 = vmul.f32 %v903, 1.442695
        %v905 = vpow.pop %v904
        %v906 = vadd.f32 %v905, 1.0
        %v907 = vrcp.pop %v906
        %v908 = vmul.f32 1.0, %v907
        %v909 = vadd.f32 %v892, %v746
        %v910 = vmul.f32 %v901, %v909
        %v911 = vadd.f32 %v753, %v910
        %v912 = vtanh.pop %v911
        %v913 = vsub.f32 1.0, %v908
        %v914 = vmul.f32 %v913, %v912
        %v915 = vmul.f32 %v908, 0.0
        %v916 = vadd.f32 %v914, %v915
        %v917 = vadd.f32 %v916, 0.0
        %s918 = smul.u32 1, 3
        %s919 = smul.addr %s918, 8
        %s920 = scalar_lea.vmem [#allocation2], %s919
        %v921 = vld [vmem:[%s920] sm:$0xff]
        %v922 = vld [vmem:[%s920 + $0x8] sm:$0xff]
        %v923 = vld [vmem:[%s920 + $0x10] sm:$0xff]
        %924 = vmatprep.subr.mxu0 %v694
        %925 = vmatpush1.msra.mxu0 %v693
        %926 = vmatprep.subr.mxu0 %v697
        %927 = vmatpush1.msra.mxu0 %v696
        %928 = vmatprep.subr.mxu0 %v700
        %929 = vmatpush1.msra.mxu0 %v699
        %930 = vmatprep.subr.mxu0 %v703
        %931 = vmatpush1.msra.mxu0 %v702
        %932 = vmatprep.subr.mxu0 %v706
        %933 = vmatpush1.msra.mxu0 %v705
        %934 = vmatprep.subr.mxu0 %v709
        %935 = vmatpush1.msra.mxu0 %v708
        %936 = vmatprep.subr.mxu0 %v712
        %937 = vmatpush1.msra.mxu0 %v711
        %938 = vmatprep.subr.mxu0 %v715
        %939 = vmatpush1.msra.mxu0 %v714
        %940 = vmatprep.subr.mxu0 %v718
        %941 = vmatpush1.msra.mxu0 %v717
        %942 = vmatprep.subr.mxu0 %v721
        %943 = vmatpush1.msra.mxu0 %v720
        %944 = vmatprep.subr.mxu0 %v724
        %945 = vmatpush1.msra.mxu0 %v723
        %946 = vmatprep.subr.mxu0 %v727
        %947 = vmatpush1.msra.mxu0 %v726
        %948 = vmatprep.subr.mxu0 %v730
        %949 = vmatpush1.msra.mxu0 %v729
        %950 = vmatprep.subr.mxu0 %v733
        %951 = vmatpush1.msra.mxu0 %v732
        %952 = vmatprep.subr.mxu0 %v736
        %953 = vmatpush1.msra.mxu0 %v735
        %954 = vmatprep.subr.mxu0 %v739
        %955 = vmatpush1.msra.mxu0 %v738
        %956 = vmatprep.subr.mxu0 0.0
        %957 = vmatpush1.msra.mxu0 0.0
        %958 = vmatprep.subr.mxu0 0.0
        %959 = vmatpush1.msra.mxu0 0.0
        %960 = vmatprep.subr.mxu0 0.0
        %961 = vmatpush1.msra.mxu0 0.0
        %962 = vmatprep.subr.mxu0 0.0
        %963 = vmatpush1.msra.mxu0 0.0
        %964 = vmatprep.subr.mxu0 0.0
        %965 = vmatpush1.msra.mxu0 0.0
        %966 = vmatprep.subr.mxu0 0.0
        %967 = vmatpush1.msra.mxu0 0.0
        %968 = vmatprep.subr.mxu0 0.0
        %969 = vmatpush1.msra.mxu0 0.0
        %970 = vmatprep.subr.mxu0 0.0
        %971 = vmatpush1.msra.mxu0 0.0
        %972 = vmatprep.subr.mxu0 0.0
        %973 = vmatpush1.msra.mxu0 0.0
        %974 = vmatprep.subr.mxu0 0.0
        %975 = vmatpush1.msra.mxu0 0.0
        %976 = vmatprep.subr.mxu0 0.0
        %977 = vmatpush1.msra.mxu0 0.0
        %978 = vmatprep.subr.mxu0 0.0
        %979 = vmatpush1.msra.mxu0 0.0
        %980 = vmatprep.subr.mxu0 0.0
        %981 = vmatpush1.msra.mxu0 0.0
        %982 = vmatprep.subr.mxu0 0.0
        %983 = vmatpush1.msra.mxu0 0.0
        %984 = vmatprep.subr.mxu0 0.0
        %985 = vmatpush1.msra.mxu0 0.0
        %986 = vmatprep.subr.mxu0 0.0
        %987 = vmatpush1.msra.mxu0 0.0
        %988 = vmatprep.mubr.f32.mxu0 0.0
        %989 = vmatmul.mubr.f32.gmra.mrb[0].mxu0 %v916
        %v990 = vpop.f32.mrb[0].mxu0
        %v991 = vadd.f32 0.0, %v990
        %v992 = vpop.f32.mrb[0].mxu0
        %v993 = vadd.f32 0.0, %v992
        %994 = vdwg.mxu0
        %995 = vmatprep.subr.mxu0 0.0
        %996 = vmatpush1.msra.mxu0 %v695
        %997 = vmatprep.subr.mxu0 0.0
        %998 = vmatpush1.msra.mxu0 %v698
        %999 = vmatprep.subr.mxu0 0.0
        %1000 = vmatpush1.msra.mxu0 %v701
        %1001 = vmatprep.subr.mxu0 0.0
        %1002 = vmatpush1.msra.mxu0 %v704
        %1003 = vmatprep.subr.mxu0 0.0
        %1004 = vmatpush1.msra.mxu0 %v707
        %1005 = vmatprep.subr.mxu0 0.0
        %1006 = vmatpush1.msra.mxu0 %v710
        %1007 = vmatprep.subr.mxu0 0.0
        %1008 = vmatpush1.msra.mxu0 %v713
        %1009 = vmatprep.subr.mxu0 0.0
        %1010 = vmatpush1.msra.mxu0 %v716
        %1011 = vmatprep.subr.mxu0 0.0
        %1012 = vmatpush1.msra.mxu0 %v719
        %1013 = vmatprep.subr.mxu0 0.0
        %1014 = vmatpush1.msra.mxu0 %v722
        %1015 = vmatprep.subr.mxu0 0.0
        %1016 = vmatpush1.msra.mxu0 %v725
        %1017 = vmatprep.subr.mxu0 0.0
        %1018 = vmatpush1.msra.mxu0 %v728
        %1019 = vmatprep.subr.mxu0 0.0
        %1020 = vmatpush1.msra.mxu0 %v731
        %1021 = vmatprep.subr.mxu0 0.0
        %1022 = vmatpush1.msra.mxu0 %v734
        %1023 = vmatprep.subr.mxu0 0.0
        %1024 = vmatpush1.msra.mxu0 %v737
        %1025 = vmatprep.subr.mxu0 0.0
        %1026 = vmatpush1.msra.mxu0 %v740
        %1027 = vmatprep.subr.mxu0 0.0
        %1028 = vmatpush1.msra.mxu0 0.0
        %1029 = vmatprep.subr.mxu0 0.0
        %1030 = vmatpush1.msra.mxu0 0.0
        %1031 = vmatprep.subr.mxu0 0.0
        %1032 = vmatpush1.msra.mxu0 0.0
        %1033 = vmatprep.subr.mxu0 0.0
        %1034 = vmatpush1.msra.mxu0 0.0
        %1035 = vmatprep.subr.mxu0 0.0
        %1036 = vmatpush1.msra.mxu0 0.0
        %1037 = vmatprep.subr.mxu0 0.0
        %1038 = vmatpush1.msra.mxu0 0.0
        %1039 = vmatprep.subr.mxu0 0.0
        %1040 = vmatpush1.msra.mxu0 0.0
        %1041 = vmatprep.subr.mxu0 0.0
        %1042 = vmatpush1.msra.mxu0 0.0
        %1043 = vmatprep.subr.mxu0 0.0
        %1044 = vmatpush1.msra.mxu0 0.0
        %1045 = vmatprep.subr.mxu0 0.0
        %1046 = vmatpush1.msra.mxu0 0.0
        %1047 = vmatprep.subr.mxu0 0.0
        %1048 = vmatpush1.msra.mxu0 0.0
        %1049 = vmatprep.subr.mxu0 0.0
        %1050 = vmatpush1.msra.mxu0 0.0
        %1051 = vmatprep.subr.mxu0 0.0
        %1052 = vmatpush1.msra.mxu0 0.0
        %1053 = vmatprep.subr.mxu0 0.0
        %1054 = vmatpush1.msra.mxu0 0.0
        %1055 = vmatprep.subr.mxu0 0.0
        %1056 = vmatpush1.msra.mxu0 0.0
        %1057 = vmatprep.subr.mxu0 0.0
        %1058 = vmatpush1.msra.mxu0 0.0
        %1059 = vmatprep.mubr.f32.mxu0 0.0
        %1060 = vmatmul.mubr.f32.gmra.mrb[0].mxu0 %v916
        %v1061 = vpop.f32.mrb[0].mxu0
        %v1062 = vadd.f32 0.0, %v1061
        %v1063 = vpop.f32.mrb[0].mxu0
        %1064 = vdwg.mxu0
        %v1065 = vadd.f32 %v921, %v991
        %v1066 = vsub.f32 0.0, %v1065
        %v1067 = vmul.f32 %v1066, 1.442695
        %v1068 = vpow.pop %v1067
        %v1069 = vadd.f32 %v1068, 1.0
        %v1070 = vrcp.pop %v1069
        %v1071 = vmul.f32 1.0, %v1070
        %v1072 = vadd.f32 %v922, %v993
        %v1073 = vsub.f32 0.0, %v1072
        %v1074 = vmul.f32 %v1073, 1.442695
        %v1075 = vpow.pop %v1074
        %v1076 = vadd.f32 %v1075, 1.0
        %v1077 = vrcp.pop %v1076
        %v1078 = vmul.f32 1.0, %v1077
        %v1079 = vadd.f32 %v1062, %v746
        %v1080 = vmul.f32 %v1071, %v1079
        %v1081 = vadd.f32 %v923, %v1080
        %v1082 = vtanh.pop %v1081
        %v1083 = vsub.f32 1.0, %v1078
        %v1084 = vmul.f32 %v1083, %v1082
        %v1085 = vmul.f32 %v1078, %v916
        %v1086 = vadd.f32 %v1084, %v1085
        %v1087 = vadd.f32 %v917, %v1086
        %s1088 = smul.u32 2, 3
        %s1089 = smul.addr %s1088, 8
        %s1090 = scalar_lea.vmem [#allocation2], %s1089
        %v1091 = vld [vmem:[%s1090] sm:$0xff]
        %v1092 = vld [vmem:[%s1090 + $0x8] sm:$0xff]
        %v1093 = vld [vmem:[%s1090 + $0x10] sm:$0xff]
        %1094 = vmatprep.subr.mxu0 %v694
        %1095 = vmatpush1.msra.mxu0 %v693
        %1096 = vmatprep.subr.mxu0 %v697
        %1097 = vmatpush1.msra.mxu0 %v696
        %1098 = vmatprep.subr.mxu0 %v700
        %1099 = vmatpush1.msra.mxu0 %v699
        %1100 = vmatprep.subr.mxu0 %v703
        %1101 = vmatpush1.msra.mxu0 %v702
        %1102 = vmatprep.subr.mxu0 %v706
        %1103 = vmatpush1.msra.mxu0 %v705
        %1104 = vmatprep.subr.mxu0 %v709
        %1105 = vmatpush1.msra.mxu0 %v708
        %1106 = vmatprep.subr.mxu0 %v712
        %1107 = vmatpush1.msra.mxu0 %v711
        %1108 = vmatprep.subr.mxu0 %v715
        %1109 = vmatpush1.msra.mxu0 %v714
        %1110 = vmatprep.subr.mxu0 %v718
        %1111 = vmatpush1.msra.mxu0 %v717
        %1112 = vmatprep.subr.mxu0 %v721
        %1113 = vmatpush1.msra.mxu0 %v720
        %1114 = vmatprep.subr.mxu0 %v724
        %1115 = vmatpush1.msra.mxu0 %v723
        %1116 = vmatprep.subr.mxu0 %v727
        %1117 = vmatpush1.msra.mxu0 %v726
        %1118 = vmatprep.subr.mxu0 %v730
        %1119 = vmatpush1.msra.mxu0 %v729
        %1120 = vmatprep.subr.mxu0 %v733
        %1121 = vmatpush1.msra.mxu0 %v732
        %1122 = vmatprep.subr.mxu0 %v736
        %1123 = vmatpush1.msra.mxu0 %v735
        %1124 = vmatprep.subr.mxu0 %v739
        %1125 = vmatpush1.msra.mxu0 %v738
        %1126 = vmatprep.subr.mxu0 0.0
        %1127 = vmatpush1.msra.mxu0 0.0
        %1128 = vmatprep.subr.mxu0 0.0
        %1129 = vmatpush1.msra.mxu0 0.0
        %1130 = vmatprep.subr.mxu0 0.0
        %1131 = vmatpush1.msra.mxu0 0.0
        %1132 = vmatprep.subr.mxu0 0.0
        %1133 = vmatpush1.msra.mxu0 0.0
        %1134 = vmatprep.subr.mxu0 0.0
        %1135 = vmatpush1.msra.mxu0 0.0
        %1136 = vmatprep.subr.mxu0 0.0
        %1137 = vmatpush1.msra.mxu0 0.0
        %1138 = vmatprep.subr.mxu0 0.0
        %1139 = vmatpush1.msra.mxu0 0.0
        %1140 = vmatprep.subr.mxu0 0.0
        %1141 = vmatpush1.msra.mxu0 0.0
        %1142 = vmatprep.subr.mxu0 0.0
        %1143 = vmatpush1.msra.mxu0 0.0
        %1144 = vmatprep.subr.mxu0 0.0
        %1145 = vmatpush1.msra.mxu0 0.0
        %1146 = vmatprep.subr.mxu0 0.0
        %1147 = vmatpush1.msra.mxu0 0.0
        %1148 = vmatprep.subr.mxu0 0.0
        %1149 = vmatpush1.msra.mxu0 0.0
        %1150 = vmatprep.subr.mxu0 0.0
        %1151 = vmatpush1.msra.mxu0 0.0
        %1152 = vmatprep.subr.mxu0 0.0
        %1153 = vmatpush1.msra.mxu0 0.0
        %1154 = vmatprep.subr.mxu0 0.0
        %1155 = vmatpush1.msra.mxu0 0.0
        %1156 = vmatprep.subr.mxu0 0.0
        %1157 = vmatpush1.msra.mxu0 0.0
        %1158 = vmatprep.mubr.f32.mxu0 0.0
        %1159 = vmatmul.mubr.f32.gmra.mrb[0].mxu0 %v1086
        %v1160 = vpop.f32.mrb[0].mxu0
        %v1161 = vadd.f32 0.0, %v1160
        %v1162 = vpop.f32.mrb[0].mxu0
        %v1163 = vadd.f32 0.0, %v1162
        %1164 = vdwg.mxu0
        %1165 = vmatprep.subr.mxu0 0.0
        %1166 = vmatpush1.msra.mxu0 %v695
        %1167 = vmatprep.subr.mxu0 0.0
        %1168 = vmatpush1.msra.mxu0 %v698
        %1169 = vmatprep.subr.mxu0 0.0
        %1170 = vmatpush1.msra.mxu0 %v701
        %1171 = vmatprep.subr.mxu0 0.0
        %1172 = vmatpush1.msra.mxu0 %v704
        %1173 = vmatprep.subr.mxu0 0.0
        %1174 = vmatpush1.msra.mxu0 %v707
        %1175 = vmatprep.subr.mxu0 0.0
        %1176 = vmatpush1.msra.mxu0 %v710
        %1177 = vmatprep.subr.mxu0 0.0
        %1178 = vmatpush1.msra.mxu0 %v713
        %1179 = vmatprep.subr.mxu0 0.0
        %1180 = vmatpush1.msra.mxu0 %v716
        %1181 = vmatprep.subr.mxu0 0.0
        %1182 = vmatpush1.msra.mxu0 %v719
        %1183 = vmatprep.subr.mxu0 0.0
        %1184 = vmatpush1.msra.mxu0 %v722
        %1185 = vmatprep.subr.mxu0 0.0
        %1186 = vmatpush1.msra.mxu0 %v725
        %1187 = vmatprep.subr.mxu0 0.0
        %1188 = vmatpush1.msra.mxu0 %v728
        %1189 = vmatprep.subr.mxu0 0.0
        %1190 = vmatpush1.msra.mxu0 %v731
        %1191 = vmatprep.subr.mxu0 0.0
        %1192 = vmatpush1.msra.mxu0 %v734
        %1193 = vmatprep.subr.mxu0 0.0
        %1194 = vmatpush1.msra.mxu0 %v737
        %1195 = vmatprep.subr.mxu0 0.0
        %1196 = vmatpush1.msra.mxu0 %v740
        %1197 = vmatprep.subr.mxu0 0.0
        %1198 = vmatpush1.msra.mxu0 0.0
        %1199 = vmatprep.subr.mxu0 0.0
        %1200 = vmatpush1.msra.mxu0 0.0
        %1201 = vmatprep.subr.mxu0 0.0
        %1202 = vmatpush1.msra.mxu0 0.0
        %1203 = vmatprep.subr.mxu0 0.0
        %1204 = vmatpush1.msra.mxu0 0.0
        %1205 = vmatprep.subr.mxu0 0.0
        %1206 = vmatpush1.msra.mxu0 0.0
        %1207 = vmatprep.subr.mxu0 0.0
        %1208 = vmatpush1.msra.mxu0 0.0
        %1209 = vmatprep.subr.mxu0 0.0
        %1210 = vmatpush1.msra.mxu0 0.0
        %1211 = vmatprep.subr.mxu0 0.0
        %1212 = vmatpush1.msra.mxu0 0.0
        %1213 = vmatprep.subr.mxu0 0.0
        %1214 = vmatpush1.msra.mxu0 0.0
        %1215 = vmatprep.subr.mxu0 0.0
        %1216 = vmatpush1.msra.mxu0 0.0
        %1217 = vmatprep.subr.mxu0 0.0
        %1218 = vmatpush1.msra.mxu0 0.0
        %1219 = vmatprep.subr.mxu0 0.0
        %1220 = vmatpush1.msra.mxu0 0.0
        %1221 = vmatprep.subr.mxu0 0.0
        %1222 = vmatpush1.msra.mxu0 0.0
        %1223 = vmatprep.subr.mxu0 0.0
        %1224 = vmatpush1.msra.mxu0 0.0
        %1225 = vmatprep.subr.mxu0 0.0
        %1226 = vmatpush1.msra.mxu0 0.0
        %1227 = vmatprep.subr.mxu0 0.0
        %1228 = vmatpush1.msra.mxu0 0.0
        %1229 = vmatprep.mubr.f32.mxu0 0.0
        %1230 = vmatmul.mubr.f32.gmra.mrb[0].mxu0 %v1086
        %v1231 = vpop.f32.mrb[0].mxu0
        %v1232 = vadd.f32 0.0, %v1231
        %v1233 = vpop.f32.mrb[0].mxu0
        %1234 = vdwg.mxu0
        %v1235 = vadd.f32 %v1091, %v1161
        %v1236 = vsub.f32 0.0, %v1235
        %v1237 = vmul.f32 %v1236, 1.442695
        %v1238 = vpow.pop %v1237
        %v1239 = vadd.f32 %v1238, 1.0
        %v1240 = vrcp.pop %v1239
        %v1241 = vmul.f32 1.0, %v1240
        %v1242 = vadd.f32 %v1092, %v1163
        %v1243 = vsub.f32 0.0, %v1242
        %v1244 = vmul.f32 %v1243, 1.442695
        %v1245 = vpow.pop %v1244
        %v1246 = vadd.f32 %v1245, 1.0
        %v1247 = vrcp.pop %v1246
        %v1248 = vmul.f32 1.0, %v1247
        %v1249 = vadd.f32 %v1232, %v746
        %v1250 = vmul.f32 %v1241, %v1249
        %v1251 = vadd.f32 %v1093, %v1250
        %v1252 = vtanh.pop %v1251
        %v1253 = vsub.f32 1.0, %v1248
        %v1254 = vmul.f32 %v1253, %v1252
        %v1255 = vmul.f32 %v1248, %v1086
        %v1256 = vadd.f32 %v1254, %v1255
        %v1257 = vadd.f32 %v1087, %v1256
        %s1258 = smul.u32 3, 3
        %s1259 = smul.addr %s1258, 8
        %s1260 = scalar_lea.vmem [#allocation2], %s1259
        %v1261 = vld [vmem:[%s1260] sm:$0xff]
        %v1262 = vld [vmem:[%s1260 + $0x8] sm:$0xff]
        %v1263 = vld [vmem:[%s1260 + $0x10] sm:$0xff]
        %1264 = vmatprep.subr.mxu0 %v694
        %1265 = vmatpush1.msra.mxu0 %v693
        %1266 = vmatprep.subr.mxu0 %v697
        %1267 = vmatpush1.msra.mxu0 %v696
        %1268 = vmatprep.subr.mxu0 %v700
        %1269 = vmatpush1.msra.mxu0 %v699
        %1270 = vmatprep.subr.mxu0 %v703
        %1271 = vmatpush1.msra.mxu0 %v702
        %1272 = vmatprep.subr.mxu0 %v706
        %1273 = vmatpush1.msra.mxu0 %v705
        %1274 = vmatprep.subr.mxu0 %v709
        %1275 = vmatpush1.msra.mxu0 %v708
        %1276 = vmatprep.subr.mxu0 %v712
        %1277 = vmatpush1.msra.mxu0 %v711
        %1278 = vmatprep.subr.mxu0 %v715
        %1279 = vmatpush1.msra.mxu0 %v714
        %1280 = vmatprep.subr.mxu0 %v718
        %1281 = vmatpush1.msra.mxu0 %v717
        %1282 = vmatprep.subr.mxu0 %v721
        %1283 = vmatpush1.msra.mxu0 %v720
        %1284 = vmatprep.subr.mxu0 %v724
        %1285 = vmatpush1.msra.mxu0 %v723
        %1286 = vmatprep.subr.mxu0 %v727
        %1287 = vmatpush1.msra.mxu0 %v726
        %1288 = vmatprep.subr.mxu0 %v730
        %1289 = vmatpush1.msra.mxu0 %v729
        %1290 = vmatprep.subr.mxu0 %v733
        %1291 = vmatpush1.msra.mxu0 %v732
        %1292 = vmatprep.subr.mxu0 %v736
        %1293 = vmatpush1.msra.mxu0 %v735
        %1294 = vmatprep.subr.mxu0 %v739
        %1295 = vmatpush1.msra.mxu0 %v738
        %1296 = vmatprep.subr.mxu0 0.0
        %1297 = vmatpush1.msra.mxu0 0.0
        %1298 = vmatprep.subr.mxu0 0.0
        %1299 = vmatpush1.msra.mxu0 0.0
        %1300 = vmatprep.subr.mxu0 0.0
        %1301 = vmatpush1.msra.mxu0 0.0
        %1302 = vmatprep.subr.mxu0 0.0
        %1303 = vmatpush1.msra.mxu0 0.0
        %1304 = vmatprep.subr.mxu0 0.0
        %1305 = vmatpush1.msra.mxu0 0.0
        %1306 = vmatprep.subr.mxu0 0.0
        %1307 = vmatpush1.msra.mxu0 0.0
        %1308 = vmatprep.subr.mxu0 0.0
        %1309 = vmatpush1.msra.mxu0 0.0
        %1310 = vmatprep.subr.mxu0 0.0
        %1311 = vmatpush1.msra.mxu0 0.0
        %1312 = vmatprep.subr.mxu0 0.0
        %1313 = vmatpush1.msra.mxu0 0.0
        %1314 = vmatprep.subr.mxu0 0.0
        %1315 = vmatpush1.msra.mxu0 0.0
        %1316 = vmatprep.subr.mxu0 0.0
        %1317 = vmatpush1.msra.mxu0 0.0
        %1318 = vmatprep.subr.mxu0 0.0
        %1319 = vmatpush1.msra.mxu0 0.0
        %1320 = vmatprep.subr.mxu0 0.0
        %1321 = vmatpush1.msra.mxu0 0.0
        %1322 = vmatprep.subr.mxu0 0.0
        %1323 = vmatpush1.msra.mxu0 0.0
        %1324 = vmatprep.subr.mxu0 0.0
        %1325 = vmatpush1.msra.mxu0 0.0
        %1326 = vmatprep.subr.mxu0 0.0
        %1327 = vmatpush1.msra.mxu0 0.0
        %1328 = vmatprep.mubr.f32.mxu0 0.0
        %1329 = vmatmul.mubr.f32.gmra.mrb[0].mxu0 %v1256
        %v1330 = vpop.f32.mrb[0].mxu0
        %v1331 = vadd.f32 0.0, %v1330
        %v1332 = vpop.f32.mrb[0].mxu0
        %v1333 = vadd.f32 0.0, %v1332
        %1334 = vdwg.mxu0
        %1335 = vmatprep.subr.mxu0 0.0
        %1336 = vmatpush1.msra.mxu0 %v695
        %1337 = vmatprep.subr.mxu0 0.0
        %1338 = vmatpush1.msra.mxu0 %v698
        %1339 = vmatprep.subr.mxu0 0.0
        %1340 = vmatpush1.msra.mxu0 %v701
        %1341 = vmatprep.subr.mxu0 0.0
        %1342 = vmatpush1.msra.mxu0 %v704
        %1343 = vmatprep.subr.mxu0 0.0
        %1344 = vmatpush1.msra.mxu0 %v707
        %1345 = vmatprep.subr.mxu0 0.0
        %1346 = vmatpush1.msra.mxu0 %v710
        %1347 = vmatprep.subr.mxu0 0.0
        %1348 = vmatpush1.msra.mxu0 %v713
        %1349 = vmatprep.subr.mxu0 0.0
        %1350 = vmatpush1.msra.mxu0 %v716
        %1351 = vmatprep.subr.mxu0 0.0
        %1352 = vmatpush1.msra.mxu0 %v719
        %1353 = vmatprep.subr.mxu0 0.0
        %1354 = vmatpush1.msra.mxu0 %v722
        %1355 = vmatprep.subr.mxu0 0.0
        %1356 = vmatpush1.msra.mxu0 %v725
        %1357 = vmatprep.subr.mxu0 0.0
        %1358 = vmatpush1.msra.mxu0 %v728
        %1359 = vmatprep.subr.mxu0 0.0
        %1360 = vmatpush1.msra.mxu0 %v731
        %1361 = vmatprep.subr.mxu0 0.0
        %1362 = vmatpush1.msra.mxu0 %v734
        %1363 = vmatprep.subr.mxu0 0.0
        %1364 = vmatpush1.msra.mxu0 %v737
        %1365 = vmatprep.subr.mxu0 0.0
        %1366 = vmatpush1.msra.mxu0 %v740
        %1367 = vmatprep.subr.mxu0 0.0
        %1368 = vmatpush1.msra.mxu0 0.0
        %1369 = vmatprep.subr.mxu0 0.0
        %1370 = vmatpush1.msra.mxu0 0.0
        %1371 = vmatprep.subr.mxu0 0.0
        %1372 = vmatpush1.msra.mxu0 0.0
        %1373 = vmatprep.subr.mxu0 0.0
        %1374 = vmatpush1.msra.mxu0 0.0
        %1375 = vmatprep.subr.mxu0 0.0
        %1376 = vmatpush1.msra.mxu0 0.0
        %1377 = vmatprep.subr.mxu0 0.0
        %1378 = vmatpush1.msra.mxu0 0.0
        %1379 = vmatprep.subr.mxu0 0.0
        %1380 = vmatpush1.msra.mxu0 0.0
        %1381 = vmatprep.subr.mxu0 0.0
        %1382 = vmatpush1.msra.mxu0 0.0
        %1383 = vmatprep.subr.mxu0 0.0
        %1384 = vmatpush1.msra.mxu0 0.0
        %1385 = vmatprep.subr.mxu0 0.0
        %1386 = vmatpush1.msra.mxu0 0.0
        %1387 = vmatprep.subr.mxu0 0.0
        %1388 = vmatpush1.msra.mxu0 0.0
        %1389 = vmatprep.subr.mxu0 0.0
        %1390 = vmatpush1.msra.mxu0 0.0
        %1391 = vmatprep.subr.mxu0 0.0
        %1392 = vmatpush1.msra.mxu0 0.0
        %1393 = vmatprep.subr.mxu0 0.0
        %1394 = vmatpush1.msra.mxu0 0.0
        %1395 = vmatprep.subr.mxu0 0.0
        %1396 = vmatpush1.msra.mxu0 0.0
        %1397 = vmatprep.subr.mxu0 0.0
        %1398 = vmatpush1.msra.mxu0 0.0
        %1399 = vmatprep.mubr.f32.mxu0 0.0
        %1400 = vmatmul.mubr.f32.gmra.mrb[0].mxu0 %v1256
        %v1401 = vpop.f32.mrb[0].mxu0
        %v1402 = vadd.f32 0.0, %v1401
        %v1403 = vpop.f32.mrb[0].mxu0
        %1404 = vdwg.mxu0
        %v1405 = vadd.f32 %v1261, %v1331
        %v1406 = vsub.f32 0.0, %v1405
        %v1407 = vmul.f32 %v1406, 1.442695
        %v1408 = vpow.pop %v1407
        %v1409 = vadd.f32 %v1408, 1.0
        %v1410 = vrcp.pop %v1409
        %v1411 = vmul.f32 1.0, %v1410
        %v1412 = vadd.f32 %v1262, %v1333
        %v1413 = vsub.f32 0.0, %v1412
        %v1414 = vmul.f32 %v1413, 1.442695
        %v1415 = vpow.pop %v1414
        %v1416 = vadd.f32 %v1415, 1.0
        %v1417 = vrcp.pop %v1416
        %v1418 = vmul.f32 1.0, %v1417
        %v1419 = vadd.f32 %v1402, %v746
        %v1420 = vmul.f32 %v1411, %v1419
        %v1421 = vadd.f32 %v1263, %v1420
        %v1422 = vtanh.pop %v1421
        %v1423 = vsub.f32 1.0, %v1418
        %v1424 = vmul.f32 %v1423, %v1422
        %v1425 = vmul.f32 %v1418, %v1256
        %v1426 = vadd.f32 %v1424, %v1425
        %v1427 = vadd.f32 %v1257, %v1426
        %s1428 = smul.u32 4, 3
        %s1429 = smul.addr %s1428, 8
        %s1430 = scalar_lea.vmem [#allocation2], %s1429
        %v1431 = vld [vmem:[%s1430] sm:$0xff]
        %v1432 = vld [vmem:[%s1430 + $0x8] sm:$0xff]
        %v1433 = vld [vmem:[%s1430 + $0x10] sm:$0xff]
        %1434 = vmatprep.subr.mxu0 %v694
        %1435 = vmatpush1.msra.mxu0 %v693
        %1436 = vmatprep.subr.mxu0 %v697
        %1437 = vmatpush1.msra.mxu0 %v696
        %1438 = vmatprep.subr.mxu0 %v700
        %1439 = vmatpush1.msra.mxu0 %v699
        %1440 = vmatprep.subr.mxu0 %v703
        %1441 = vmatpush1.msra.mxu0 %v702
        %1442 = vmatprep.subr.mxu0 %v706
        %1443 = vmatpush1.msra.mxu0 %v705
        %1444 = vmatprep.subr.mxu0 %v709
        %1445 = vmatpush1.msra.mxu0 %v708
        %1446 = vmatprep.subr.mxu0 %v712
        %1447 = vmatpush1.msra.mxu0 %v711
        %1448 = vmatprep.subr.mxu0 %v715
        %1449 = vmatpush1.msra.mxu0 %v714
        %1450 = vmatprep.subr.mxu0 %v718
        %1451 = vmatpush1.msra.mxu0 %v717
        %1452 = vmatprep.subr.mxu0 %v721
        %1453 = vmatpush1.msra.mxu0 %v720
        %1454 = vmatprep.subr.mxu0 %v724
        %1455 = vmatpush1.msra.mxu0 %v723
        %1456 = vmatprep.subr.mxu0 %v727
        %1457 = vmatpush1.msra.mxu0 %v726
        %1458 = vmatprep.subr.mxu0 %v730
        %1459 = vmatpush1.msra.mxu0 %v729
        %1460 = vmatprep.subr.mxu0 %v733
        %1461 = vmatpush1.msra.mxu0 %v732
        %1462 = vmatprep.subr.mxu0 %v736
        %1463 = vmatpush1.msra.mxu0 %v735
        %1464 = vmatprep.subr.mxu0 %v739
        %1465 = vmatpush1.msra.mxu0 %v738
        %1466 = vmatprep.subr.mxu0 0.0
        %1467 = vmatpush1.msra.mxu0 0.0
        %1468 = vmatprep.subr.mxu0 0.0
        %1469 = vmatpush1.msra.mxu0 0.0
        %1470 = vmatprep.subr.mxu0 0.0
        %1471 = vmatpush1.msra.mxu0 0.0
        %1472 = vmatprep.subr.mxu0 0.0
        %1473 = vmatpush1.msra.mxu0 0.0
        %1474 = vmatprep.subr.mxu0 0.0
        %1475 = vmatpush1.msra.mxu0 0.0
        %1476 = vmatprep.subr.mxu0 0.0
        %1477 = vmatpush1.msra.mxu0 0.0
        %1478 = vmatprep.subr.mxu0 0.0
        %1479 = vmatpush1.msra.mxu0 0.0
        %1480 = vmatprep.subr.mxu0 0.0
        %1481 = vmatpush1.msra.mxu0 0.0
        %1482 = vmatprep.subr.mxu0 0.0
        %1483 = vmatpush1.msra.mxu0 0.0
        %1484 = vmatprep.subr.mxu0 0.0
        %1485 = vmatpush1.msra.mxu0 0.0
        %1486 = vmatprep.subr.mxu0 0.0
        %1487 = vmatpush1.msra.mxu0 0.0
        %1488 = vmatprep.subr.mxu0 0.0
        %1489 = vmatpush1.msra.mxu0 0.0
        %1490 = vmatprep.subr.mxu0 0.0
        %1491 = vmatpush1.msra.mxu0 0.0
        %1492 = vmatprep.subr.mxu0 0.0
        %1493 = vmatpush1.msra.mxu0 0.0
        %1494 = vmatprep.subr.mxu0 0.0
        %1495 = vmatpush1.msra.mxu0 0.0
        %1496 = vmatprep.subr.mxu0 0.0
        %1497 = vmatpush1.msra.mxu0 0.0
        %1498 = vmatprep.mubr.f32.mxu0 0.0
        %1499 = vmatmul.mubr.f32.gmra.mrb[0].mxu0 %v1426
        %v1500 = vpop.f32.mrb[0].mxu0
        %v1501 = vadd.f32 0.0, %v1500
        %v1502 = vpop.f32.mrb[0].mxu0
        %v1503 = vadd.f32 0.0, %v1502
        %1504 = vdwg.mxu0
        %1505 = vmatprep.subr.mxu0 0.0
        %1506 = vmatpush1.msra.mxu0 %v695
        %1507 = vmatprep.subr.mxu0 0.0
        %1508 = vmatpush1.msra.mxu0 %v698
        %1509 = vmatprep.subr.mxu0 0.0
        %1510 = vmatpush1.msra.mxu0 %v701
        %1511 = vmatprep.subr.mxu0 0.0
        %1512 = vmatpush1.msra.mxu0 %v704
        %1513 = vmatprep.subr.mxu0 0.0
        %1514 = vmatpush1.msra.mxu0 %v707
        %1515 = vmatprep.subr.mxu0 0.0
        %1516 = vmatpush1.msra.mxu0 %v710
        %1517 = vmatprep.subr.mxu0 0.0
        %1518 = vmatpush1.msra.mxu0 %v713
        %1519 = vmatprep.subr.mxu0 0.0
        %1520 = vmatpush1.msra.mxu0 %v716
        %1521 = vmatprep.subr.mxu0 0.0
        %1522 = vmatpush1.msra.mxu0 %v719
        %1523 = vmatprep.subr.mxu0 0.0
        %1524 = vmatpush1.msra.mxu0 %v722
        %1525 = vmatprep.subr.mxu0 0.0
        %1526 = vmatpush1.msra.mxu0 %v725
        %1527 = vmatprep.subr.mxu0 0.0
        %1528 = vmatpush1.msra.mxu0 %v728
        %1529 = vmatprep.subr.mxu0 0.0
        %1530 = vmatpush1.msra.mxu0 %v731
        %1531 = vmatprep.subr.mxu0 0.0
        %1532 = vmatpush1.msra.mxu0 %v734
        %1533 = vmatprep.subr.mxu0 0.0
        %1534 = vmatpush1.msra.mxu0 %v737
        %1535 = vmatprep.subr.mxu0 0.0
        %1536 = vmatpush1.msra.mxu0 %v740
        %1537 = vmatprep.subr.mxu0 0.0
        %1538 = vmatpush1.msra.mxu0 0.0
        %1539 = vmatprep.subr.mxu0 0.0
        %1540 = vmatpush1.msra.mxu0 0.0
        %1541 = vmatprep.subr.mxu0 0.0
        %1542 = vmatpush1.msra.mxu0 0.0
        %1543 = vmatprep.subr.mxu0 0.0
        %1544 = vmatpush1.msra.mxu0 0.0
        %1545 = vmatprep.subr.mxu0 0.0
        %1546 = vmatpush1.msra.mxu0 0.0
        %1547 = vmatprep.subr.mxu0 0.0
        %1548 = vmatpush1.msra.mxu0 0.0
        %1549 = vmatprep.subr.mxu0 0.0
        %1550 = vmatpush1.msra.mxu0 0.0
        %1551 = vmatprep.subr.mxu0 0.0
        %1552 = vmatpush1.msra.mxu0 0.0
        %1553 = vmatprep.subr.mxu0 0.0
        %1554 = vmatpush1.msra.mxu0 0.0
        %1555 = vmatprep.subr.mxu0 0.0
        %1556 = vmatpush1.msra.mxu0 0.0
        %1557 = vmatprep.subr.mxu0 0.0
        %1558 = vmatpush1.msra.mxu0 0.0
        %1559 = vmatprep.subr.mxu0 0.0
        %1560 = vmatpush1.msra.mxu0 0.0
        %1561 = vmatprep.subr.mxu0 0.0
        %1562 = vmatpush1.msra.mxu0 0.0
        %1563 = vmatprep.subr.mxu0 0.0
        %1564 = vmatpush1.msra.mxu0 0.0
        %1565 = vmatprep.subr.mxu0 0.0
        %1566 = vmatpush1.msra.mxu0 0.0
        %1567 = vmatprep.subr.mxu0 0.0
        %1568 = vmatpush1.msra.mxu0 0.0
        %1569 = vmatprep.mubr.f32.mxu0 0.0
        %1570 = vmatmul.mubr.f32.gmra.mrb[0].mxu0 %v1426
        %v1571 = vpop.f32.mrb[0].mxu0
        %v1572 = vadd.f32 0.0, %v1571
        %v1573 = vpop.f32.mrb[0].mxu0
        %1574 = vdwg.mxu0
        %v1575 = vadd.f32 %v1431, %v1501
        %v1576 = vsub.f32 0.0, %v1575
        %v1577 = vmul.f32 %v1576, 1.442695
        %v1578 = vpow.pop %v1577
        %v1579 = vadd.f32 %v1578, 1.0
        %v1580 = vrcp.pop %v1579
        %v1581 = vmul.f32 1.0, %v1580
        %v1582 = vadd.f32 %v1432, %v1503
        %v1583 = vsub.f32 0.0, %v1582
        %v1584 = vmul.f32 %v1583, 1.442695
        %v1585 = vpow.pop %v1584
        %v1586 = vadd.f32 %v1585, 1.0
        %v1587 = vrcp.pop %v1586
        %v1588 = vmul.f32 1.0, %v1587
        %v1589 = vadd.f32 %v1572, %v746
        %v1590 = vmul.f32 %v1581, %v1589
        %v1591 = vadd.f32 %v1433, %v1590
        %v1592 = vtanh.pop %v1591
        %v1593 = vsub.f32 1.0, %v1588
        %v1594 = vmul.f32 %v1593, %v1592
        %v1595 = vmul.f32 %v1588, %v1426
        %v1596 = vadd.f32 %v1594, %v1595
        %v1597 = vadd.f32 %v1427, %v1596
        %s1598 = smul.u32 5, 3
        %s1599 = smul.addr %s1598, 8
        %s1600 = scalar_lea.vmem [#allocation2], %s1599
        %v1601 = vld [vmem:[%s1600] sm:$0xff]
        %v1602 = vld [vmem:[%s1600 + $0x8] sm:$0xff]
        %v1603 = vld [vmem:[%s1600 + $0x10] sm:$0xff]
        %1604 = vmatprep.subr.mxu0 %v694
        %1605 = vmatpush1.msra.mxu0 %v693
        %1606 = vmatprep.subr.mxu0 %v697
        %1607 = vmatpush1.msra.mxu0 %v696
        %1608 = vmatprep.subr.mxu0 %v700
        %1609 = vmatpush1.msra.mxu0 %v699
        %1610 = vmatprep.subr.mxu0 %v703
        %1611 = vmatpush1.msra.mxu0 %v702
        %1612 = vmatprep.subr.mxu0 %v706
        %1613 = vmatpush1.msra.mxu0 %v705
        %1614 = vmatprep.subr.mxu0 %v709
        %1615 = vmatpush1.msra.mxu0 %v708
        %1616 = vmatprep.subr.mxu0 %v712
        %1617 = vmatpush1.msra.mxu0 %v711
        %1618 = vmatprep.subr.mxu0 %v715
        %1619 = vmatpush1.msra.mxu0 %v714
        %1620 = vmatprep.subr.mxu0 %v718
        %1621 = vmatpush1.msra.mxu0 %v717
        %1622 = vmatprep.subr.mxu0 %v721
        %1623 = vmatpush1.msra.mxu0 %v720
        %1624 = vmatprep.subr.mxu0 %v724
        %1625 = vmatpush1.msra.mxu0 %v723
        %1626 = vmatprep.subr.mxu0 %v727
        %1627 = vmatpush1.msra.mxu0 %v726
        %1628 = vmatprep.subr.mxu0 %v730
        %1629 = vmatpush1.msra.mxu0 %v729
        %1630 = vmatprep.subr.mxu0 %v733
        %1631 = vmatpush1.msra.mxu0 %v732
        %1632 = vmatprep.subr.mxu0 %v736
        %1633 = vmatpush1.msra.mxu0 %v735
        %1634 = vmatprep.subr.mxu0 %v739
        %1635 = vmatpush1.msra.mxu0 %v738
        %1636 = vmatprep.subr.mxu0 0.0
        %1637 = vmatpush1.msra.mxu0 0.0
        %1638 = vmatprep.subr.mxu0 0.0
        %1639 = vmatpush1.msra.mxu0 0.0
        %1640 = vmatprep.subr.mxu0 0.0
        %1641 = vmatpush1.msra.mxu0 0.0
        %1642 = vmatprep.subr.mxu0 0.0
        %1643 = vmatpush1.msra.mxu0 0.0
        %1644 = vmatprep.subr.mxu0 0.0
        %1645 = vmatpush1.msra.mxu0 0.0
        %1646 = vmatprep.subr.mxu0 0.0
        %1647 = vmatpush1.msra.mxu0 0.0
        %1648 = vmatprep.subr.mxu0 0.0
        %1649 = vmatpush1.msra.mxu0 0.0
        %1650 = vmatprep.subr.mxu0 0.0
        %1651 = vmatpush1.msra.mxu0 0.0
        %1652 = vmatprep.subr.mxu0 0.0
        %1653 = vmatpush1.msra.mxu0 0.0
        %1654 = vmatprep.subr.mxu0 0.0
        %1655 = vmatpush1.msra.mxu0 0.0
        %1656 = vmatprep.subr.mxu0 0.0
        %1657 = vmatpush1.msra.mxu0 0.0
        %1658 = vmatprep.subr.mxu0 0.0
        %1659 = vmatpush1.msra.mxu0 0.0
        %1660 = vmatprep.subr.mxu0 0.0
        %1661 = vmatpush1.msra.mxu0 0.0
        %1662 = vmatprep.subr.mxu0 0.0
        %1663 = vmatpush1.msra.mxu0 0.0
        %1664 = vmatprep.subr.mxu0 0.0
        %1665 = vmatpush1.msra.mxu0 0.0
        %1666 = vmatprep.subr.mxu0 0.0
        %1667 = vmatpush1.msra.mxu0 0.0
        %1668 = vmatprep.mubr.f32.mxu0 0.0
        %1669 = vmatmul.mubr.f32.gmra.mrb[0].mxu0 %v1596
        %v1670 = vpop.f32.mrb[0].mxu0
        %v1671 = vadd.f32 0.0, %v1670
        %v1672 = vpop.f32.mrb[0].mxu0
        %v1673 = vadd.f32 0.0, %v1672
        %1674 = vdwg.mxu0
        %1675 = vmatprep.subr.mxu0 0.0
        %1676 = vmatpush1.msra.mxu0 %v695
        %1677 = vmatprep.subr.mxu0 0.0
        %1678 = vmatpush1.msra.mxu0 %v698
        %1679 = vmatprep.subr.mxu0 0.0
        %1680 = vmatpush1.msra.mxu0 %v701
        %1681 = vmatprep.subr.mxu0 0.0
        %1682 = vmatpush1.msra.mxu0 %v704
        %1683 = vmatprep.subr.mxu0 0.0
        %1684 = vmatpush1.msra.mxu0 %v707
        %1685 = vmatprep.subr.mxu0 0.0
        %1686 = vmatpush1.msra.mxu0 %v710
        %1687 = vmatprep.subr.mxu0 0.0
        %1688 = vmatpush1.msra.mxu0 %v713
        %1689 = vmatprep.subr.mxu0 0.0
        %1690 = vmatpush1.msra.mxu0 %v716
        %1691 = vmatprep.subr.mxu0 0.0
        %1692 = vmatpush1.msra.mxu0 %v719
        %1693 = vmatprep.subr.mxu0 0.0
        %1694 = vmatpush1.msra.mxu0 %v722
        %1695 = vmatprep.subr.mxu0 0.0
        %1696 = vmatpush1.msra.mxu0 %v725
        %1697 = vmatprep.subr.mxu0 0.0
        %1698 = vmatpush1.msra.mxu0 %v728
        %1699 = vmatprep.subr.mxu0 0.0
        %1700 = vmatpush1.msra.mxu0 %v731
        %1701 = vmatprep.subr.mxu0 0.0
        %1702 = vmatpush1.msra.mxu0 %v734
        %1703 = vmatprep.subr.mxu0 0.0
        %1704 = vmatpush1.msra.mxu0 %v737
        %1705 = vmatprep.subr.mxu0 0.0
        %1706 = vmatpush1.msra.mxu0 %v740
        %1707 = vmatprep.subr.mxu0 0.0
        %1708 = vmatpush1.msra.mxu0 0.0
        %1709 = vmatprep.subr.mxu0 0.0
        %1710 = vmatpush1.msra.mxu0 0.0
        %1711 = vmatprep.subr.mxu0 0.0
        %1712 = vmatpush1.msra.mxu0 0.0
        %1713 = vmatprep.subr.mxu0 0.0
        %1714 = vmatpush1.msra.mxu0 0.0
        %1715 = vmatprep.subr.mxu0 0.0
        %1716 = vmatpush1.msra.mxu0 0.0
        %1717 = vmatprep.subr.mxu0 0.0
        %1718 = vmatpush1.msra.mxu0 0.0
        %1719 = vmatprep.subr.mxu0 0.0
        %1720 = vmatpush1.msra.mxu0 0.0
        %1721 = vmatprep.subr.mxu0 0.0
        %1722 = vmatpush1.msra.mxu0 0.0
        %1723 = vmatprep.subr.mxu0 0.0
        %1724 = vmatpush1.msra.mxu0 0.0
        %1725 = vmatprep.subr.mxu0 0.0
        %1726 = vmatpush1.msra.mxu0 0.0
        %1727 = vmatprep.subr.mxu0 0.0
        %1728 = vmatpush1.msra.mxu0 0.0
        %1729 = vmatprep.subr.mxu0 0.0
        %1730 = vmatpush1.msra.mxu0 0.0
        %1731 = vmatprep.subr.mxu0 0.0
        %1732 = vmatpush1.msra.mxu0 0.0
        %1733 = vmatprep.subr.mxu0 0.0
        %1734 = vmatpush1.msra.mxu0 0.0
        %1735 = vmatprep.subr.mxu0 0.0
        %1736 = vmatpush1.msra.mxu0 0.0
        %1737 = vmatprep.subr.mxu0 0.0
        %1738 = vmatpush1.msra.mxu0 0.0
        %1739 = vmatprep.mubr.f32.mxu0 0.0
        %1740 = vmatmul.mubr.f32.gmra.mrb[0].mxu0 %v1596
        %v1741 = vpop.f32.mrb[0].mxu0
        %v1742 = vadd.f32 0.0, %v1741
        %v1743 = vpop.f32.mrb[0].mxu0
        %1744 = vdwg.mxu0
        %v1745 = vadd.f32 %v1601, %v1671
        %v1746 = vsub.f32 0.0, %v1745
        %v1747 = vmul.f32 %v1746, 1.442695
        %v1748 = vpow.pop %v1747
        %v1749 = vadd.f32 %v1748, 1.0
        %v1750 = vrcp.pop %v1749
        %v1751 = vmul.f32 1.0, %v1750
        %v1752 = vadd.f32 %v1602, %v1673
        %v1753 = vsub.f32 0.0, %v1752
        %v1754 = vmul.f32 %v1753, 1.442695
        %v1755 = vpow.pop %v1754
        %v1756 = vadd.f32 %v1755, 1.0
        %v1757 = vrcp.pop %v1756
        %v1758 = vmul.f32 1.0, %v1757
        %v1759 = vadd.f32 %v1742, %v746
        %v1760 = vmul.f32 %v1751, %v1759
        %v1761 = vadd.f32 %v1603, %v1760
        %v1762 = vtanh.pop %v1761
        %v1763 = vsub.f32 1.0, %v1758
        %v1764 = vmul.f32 %v1763, %v1762
        %v1765 = vmul.f32 %v1758, %v1596
        %v1766 = vadd.f32 %v1764, %v1765
        %v1767 = vadd.f32 %v1597, %v1766
        %s1768 = smul.u32 6, 3
        %s1769 = smul.addr %s1768, 8
        %s1770 = scalar_lea.vmem [#allocation2], %s1769
        %v1771 = vld [vmem:[%s1770] sm:$0xff]
        %v1772 = vld [vmem:[%s1770 + $0x8] sm:$0xff]
        %v1773 = vld [vmem:[%s1770 + $0x10] sm:$0xff]
        %1774 = vmatprep.subr.mxu0 %v694
        %1775 = vmatpush1.msra.mxu0 %v693
        %1776 = vmatprep.subr.mxu0 %v697
        %1777 = vmatpush1.msra.mxu0 %v696
        %1778 = vmatprep.subr.mxu0 %v700
        %1779 = vmatpush1.msra.mxu0 %v699
        %1780 = vmatprep.subr.mxu0 %v703
        %1781 = vmatpush1.msra.mxu0 %v702
        %1782 = vmatprep.subr.mxu0 %v706
        %1783 = vmatpush1.msra.mxu0 %v705
        %1784 = vmatprep.subr.mxu0 %v709
        %1785 = vmatpush1.msra.mxu0 %v708
        %1786 = vmatprep.subr.mxu0 %v712
        %1787 = vmatpush1.msra.mxu0 %v711
        %1788 = vmatprep.subr.mxu0 %v715
        %1789 = vmatpush1.msra.mxu0 %v714
        %1790 = vmatprep.subr.mxu0 %v718
        %1791 = vmatpush1.msra.mxu0 %v717
        %1792 = vmatprep.subr.mxu0 %v721
        %1793 = vmatpush1.msra.mxu0 %v720
        %1794 = vmatprep.subr.mxu0 %v724
        %1795 = vmatpush1.msra.mxu0 %v723
        %1796 = vmatprep.subr.mxu0 %v727
        %1797 = vmatpush1.msra.mxu0 %v726
        %1798 = vmatprep.subr.mxu0 %v730
        %1799 = vmatpush1.msra.mxu0 %v729
        %1800 = vmatprep.subr.mxu0 %v733
        %1801 = vmatpush1.msra.mxu0 %v732
        %1802 = vmatprep.subr.mxu0 %v736
        %1803 = vmatpush1.msra.mxu0 %v735
        %1804 = vmatprep.subr.mxu0 %v739
        %1805 = vmatpush1.msra.mxu0 %v738
        %1806 = vmatprep.subr.mxu0 0.0
        %1807 = vmatpush1.msra.mxu0 0.0
        %1808 = vmatprep.subr.mxu0 0.0
        %1809 = vmatpush1.msra.mxu0 0.0
        %1810 = vmatprep.subr.mxu0 0.0
        %1811 = vmatpush1.msra.mxu0 0.0
        %1812 = vmatprep.subr.mxu0 0.0
        %1813 = vmatpush1.msra.mxu0 0.0
        %1814 = vmatprep.subr.mxu0 0.0
        %1815 = vmatpush1.msra.mxu0 0.0
        %1816 = vmatprep.subr.mxu0 0.0
        %1817 = vmatpush1.msra.mxu0 0.0
        %1818 = vmatprep.subr.mxu0 0.0
        %1819 = vmatpush1.msra.mxu0 0.0
        %1820 = vmatprep.subr.mxu0 0.0
        %1821 = vmatpush1.msra.mxu0 0.0
        %1822 = vmatprep.subr.mxu0 0.0
        %1823 = vmatpush1.msra.mxu0 0.0
        %1824 = vmatprep.subr.mxu0 0.0
        %1825 = vmatpush1.msra.mxu0 0.0
        %1826 = vmatprep.subr.mxu0 0.0
        %1827 = vmatpush1.msra.mxu0 0.0
        %1828 = vmatprep.subr.mxu0 0.0
        %1829 = vmatpush1.msra.mxu0 0.0
        %1830 = vmatprep.subr.mxu0 0.0
        %1831 = vmatpush1.msra.mxu0 0.0
        %1832 = vmatprep.subr.mxu0 0.0
        %1833 = vmatpush1.msra.mxu0 0.0
        %1834 = vmatprep.subr.mxu0 0.0
        %1835 = vmatpush1.msra.mxu0 0.0
        %1836 = vmatprep.subr.mxu0 0.0
        %1837 = vmatpush1.msra.mxu0 0.0
        %1838 = vmatprep.mubr.f32.mxu0 0.0
        %1839 = vmatmul.mubr.f32.gmra.mrb[0].mxu0 %v1766
        %v1840 = vpop.f32.mrb[0].mxu0
        %v1841 = vadd.f32 0.0, %v1840
        %v1842 = vpop.f32.mrb[0].mxu0
        %v1843 = vadd.f32 0.0, %v1842
        %1844 = vdwg.mxu0
        %1845 = vmatprep.subr.mxu0 0.0
        %1846 = vmatpush1.msra.mxu0 %v695
        %1847 = vmatprep.subr.mxu0 0.0
        %1848 = vmatpush1.msra.mxu0 %v698
        %1849 = vmatprep.subr.mxu0 0.0
        %1850 = vmatpush1.msra.mxu0 %v701
        %1851 = vmatprep.subr.mxu0 0.0
        %1852 = vmatpush1.msra.mxu0 %v704
        %1853 = vmatprep.subr.mxu0 0.0
        %1854 = vmatpush1.msra.mxu0 %v707
        %1855 = vmatprep.subr.mxu0 0.0
        %1856 = vmatpush1.msra.mxu0 %v710
        %1857 = vmatprep.subr.mxu0 0.0
        %1858 = vmatpush1.msra.mxu0 %v713
        %1859 = vmatprep.subr.mxu0 0.0
        %1860 = vmatpush1.msra.mxu0 %v716
        %1861 = vmatprep.subr.mxu0 0.0
        %1862 = vmatpush1.msra.mxu0 %v719
        %1863 = vmatprep.subr.mxu0 0.0
        %1864 = vmatpush1.msra.mxu0 %v722
        %1865 = vmatprep.subr.mxu0 0.0
        %1866 = vmatpush1.msra.mxu0 %v725
        %1867 = vmatprep.subr.mxu0 0.0
        %1868 = vmatpush1.msra.mxu0 %v728
        %1869 = vmatprep.subr.mxu0 0.0
        %1870 = vmatpush1.msra.mxu0 %v731
        %1871 = vmatprep.subr.mxu0 0.0
        %1872 = vmatpush1.msra.mxu0 %v734
        %1873 = vmatprep.subr.mxu0 0.0
        %1874 = vmatpush1.msra.mxu0 %v737
        %1875 = vmatprep.subr.mxu0 0.0
        %1876 = vmatpush1.msra.mxu0 %v740
        %1877 = vmatprep.subr.mxu0 0.0
        %1878 = vmatpush1.msra.mxu0 0.0
        %1879 = vmatprep.subr.mxu0 0.0
        %1880 = vmatpush1.msra.mxu0 0.0
        %1881 = vmatprep.subr.mxu0 0.0
        %1882 = vmatpush1.msra.mxu0 0.0
        %1883 = vmatprep.subr.mxu0 0.0
        %1884 = vmatpush1.msra.mxu0 0.0
        %1885 = vmatprep.subr.mxu0 0.0
        %1886 = vmatpush1.msra.mxu0 0.0
        %1887 = vmatprep.subr.mxu0 0.0
        %1888 = vmatpush1.msra.mxu0 0.0
        %1889 = vmatprep.subr.mxu0 0.0
        %1890 = vmatpush1.msra.mxu0 0.0
        %1891 = vmatprep.subr.mxu0 0.0
        %1892 = vmatpush1.msra.mxu0 0.0
        %1893 = vmatprep.subr.mxu0 0.0
        %1894 = vmatpush1.msra.mxu0 0.0
        %1895 = vmatprep.subr.mxu0 0.0
        %1896 = vmatpush1.msra.mxu0 0.0
        %1897 = vmatprep.subr.mxu0 0.0
        %1898 = vmatpush1.msra.mxu0 0.0
        %1899 = vmatprep.subr.mxu0 0.0
        %1900 = vmatpush1.msra.mxu0 0.0
        %1901 = vmatprep.subr.mxu0 0.0
        %1902 = vmatpush1.msra.mxu0 0.0
        %1903 = vmatprep.subr.mxu0 0.0
        %1904 = vmatpush1.msra.mxu0 0.0
        %1905 = vmatprep.subr.mxu0 0.0
        %1906 = vmatpush1.msra.mxu0 0.0
        %1907 = vmatprep.subr.mxu0 0.0
        %1908 = vmatpush1.msra.mxu0 0.0
        %1909 = vmatprep.mubr.f32.mxu0 0.0
        %1910 = vmatmul.mubr.f32.gmra.mrb[0].mxu0 %v1766
        %v1911 = vpop.f32.mrb[0].mxu0
        %v1912 = vadd.f32 0.0, %v1911
        %v1913 = vpop.f32.mrb[0].mxu0
        %1914 = vdwg.mxu0
        %v1915 = vadd.f32 %v1771, %v1841
        %v1916 = vsub.f32 0.0, %v1915
        %v1917 = vmul.f32 %v1916, 1.442695
        %v1918 = vpow.pop %v1917
        %v1919 = vadd.f32 %v1918, 1.0
        %v1920 = vrcp.pop %v1919
        %v1921 = vmul.f32 1.0, %v1920
        %v1922 = vadd.f32 %v1772, %v1843
        %v1923 = vsub.f32 0.0, %v1922
        %v1924 = vmul.f32 %v1923, 1.442695
        %v1925 = vpow.pop %v1924
        %v1926 = vadd.f32 %v1925, 1.0
        %v1927 = vrcp.pop %v1926
        %v1928 = vmul.f32 1.0, %v1927
        %v1929 = vadd.f32 %v1912, %v746
        %v1930 = vmul.f32 %v1921, %v1929
        %v1931 = vadd.f32 %v1773, %v1930
        %v1932 = vtanh.pop %v1931
        %v1933 = vsub.f32 1.0, %v1928
        %v1934 = vmul.f32 %v1933, %v1932
        %v1935 = vmul.f32 %v1928, %v1766
        %v1936 = vadd.f32 %v1934, %v1935
        %v1937 = vadd.f32 %v1767, %v1936
        %s1938 = smul.u32 7, 3
        %s1939 = smul.addr %s1938, 8
        %s1940 = scalar_lea.vmem [#allocation2], %s1939
        %v1941 = vld [vmem:[%s1940] sm:$0xff]
        %v1942 = vld [vmem:[%s1940 + $0x8] sm:$0xff]
        %v1943 = vld [vmem:[%s1940 + $0x10] sm:$0xff]
        %1944 = vmatprep.subr.mxu0 %v694
        %1945 = vmatpush1.msra.mxu0 %v693
        %1946 = vmatprep.subr.mxu0 %v697
        %1947 = vmatpush1.msra.mxu0 %v696
        %1948 = vmatprep.subr.mxu0 %v700
        %1949 = vmatpush1.msra.mxu0 %v699
        %1950 = vmatprep.subr.mxu0 %v703
        %1951 = vmatpush1.msra.mxu0 %v702
        %1952 = vmatprep.subr.mxu0 %v706
        %1953 = vmatpush1.msra.mxu0 %v705
        %1954 = vmatprep.subr.mxu0 %v709
        %1955 = vmatpush1.msra.mxu0 %v708
        %1956 = vmatprep.subr.mxu0 %v712
        %1957 = vmatpush1.msra.mxu0 %v711
        %1958 = vmatprep.subr.mxu0 %v715
        %1959 = vmatpush1.msra.mxu0 %v714
        %1960 = vmatprep.subr.mxu0 %v718
        %1961 = vmatpush1.msra.mxu0 %v717
        %1962 = vmatprep.subr.mxu0 %v721
        %1963 = vmatpush1.msra.mxu0 %v720
        %1964 = vmatprep.subr.mxu0 %v724
        %1965 = vmatpush1.msra.mxu0 %v723
        %1966 = vmatprep.subr.mxu0 %v727
        %1967 = vmatpush1.msra.mxu0 %v726
        %1968 = vmatprep.subr.mxu0 %v730
        %1969 = vmatpush1.msra.mxu0 %v729
        %1970 = vmatprep.subr.mxu0 %v733
        %1971 = vmatpush1.msra.mxu0 %v732
        %1972 = vmatprep.subr.mxu0 %v736
        %1973 = vmatpush1.msra.mxu0 %v735
        %1974 = vmatprep.subr.mxu0 %v739
        %1975 = vmatpush1.msra.mxu0 %v738
        %1976 = vmatprep.subr.mxu0 0.0
        %1977 = vmatpush1.msra.mxu0 0.0
        %1978 = vmatprep.subr.mxu0 0.0
        %1979 = vmatpush1.msra.mxu0 0.0
        %1980 = vmatprep.subr.mxu0 0.0
        %1981 = vmatpush1.msra.mxu0 0.0
        %1982 = vmatprep.subr.mxu0 0.0
        %1983 = vmatpush1.msra.mxu0 0.0
        %1984 = vmatprep.subr.mxu0 0.0
        %1985 = vmatpush1.msra.mxu0 0.0
        %1986 = vmatprep.subr.mxu0 0.0
        %1987 = vmatpush1.msra.mxu0 0.0
        %1988 = vmatprep.subr.mxu0 0.0
        %1989 = vmatpush1.msra.mxu0 0.0
        %1990 = vmatprep.subr.mxu0 0.0
        %1991 = vmatpush1.msra.mxu0 0.0
        %1992 = vmatprep.subr.mxu0 0.0
        %1993 = vmatpush1.msra.mxu0 0.0
        %1994 = vmatprep.subr.mxu0 0.0
        %1995 = vmatpush1.msra.mxu0 0.0
        %1996 = vmatprep.subr.mxu0 0.0
        %1997 = vmatpush1.msra.mxu0 0.0
        %1998 = vmatprep.subr.mxu0 0.0
        %1999 = vmatpush1.msra.mxu0 0.0
        %2000 = vmatprep.subr.mxu0 0.0
        %2001 = vmatpush1.msra.mxu0 0.0
        %2002 = vmatprep.subr.mxu0 0.0
        %2003 = vmatpush1.msra.mxu0 0.0
        %2004 = vmatprep.subr.mxu0 0.0
        %2005 = vmatpush1.msra.mxu0 0.0
        %2006 = vmatprep.subr.mxu0 0.0
        %2007 = vmatpush1.msra.mxu0 0.0
        %2008 = vmatprep.mubr.f32.mxu0 0.0
        %2009 = vmatmul.mubr.f32.gmra.mrb[0].mxu0 %v1936
        %v2010 = vpop.f32.mrb[0].mxu0
        %v2011 = vadd.f32 0.0, %v2010
        %v2012 = vpop.f32.mrb[0].mxu0
        %v2013 = vadd.f32 0.0, %v2012
        %2014 = vdwg.mxu0
        %2015 = vmatprep.subr.mxu0 0.0
        %2016 = vmatpush1.msra.mxu0 %v695
        %2017 = vmatprep.subr.mxu0 0.0
        %2018 = vmatpush1.msra.mxu0 %v698
        %2019 = vmatprep.subr.mxu0 0.0
        %2020 = vmatpush1.msra.mxu0 %v701
        %2021 = vmatprep.subr.mxu0 0.0
        %2022 = vmatpush1.msra.mxu0 %v704
        %2023 = vmatprep.subr.mxu0 0.0
        %2024 = vmatpush1.msra.mxu0 %v707
        %2025 = vmatprep.subr.mxu0 0.0
        %2026 = vmatpush1.msra.mxu0 %v710
        %2027 = vmatprep.subr.mxu0 0.0
        %2028 = vmatpush1.msra.mxu0 %v713
        %2029 = vmatprep.subr.mxu0 0.0
        %2030 = vmatpush1.msra.mxu0 %v716
        %2031 = vmatprep.subr.mxu0 0.0
        %2032 = vmatpush1.msra.mxu0 %v719
        %2033 = vmatprep.subr.mxu0 0.0
        %2034 = vmatpush1.msra.mxu0 %v722
        %2035 = vmatprep.subr.mxu0 0.0
        %2036 = vmatpush1.msra.mxu0 %v725
        %2037 = vmatprep.subr.mxu0 0.0
        %2038 = vmatpush1.msra.mxu0 %v728
        %2039 = vmatprep.subr.mxu0 0.0
        %2040 = vmatpush1.msra.mxu0 %v731
        %2041 = vmatprep.subr.mxu0 0.0
        %2042 = vmatpush1.msra.mxu0 %v734
        %2043 = vmatprep.subr.mxu0 0.0
        %2044 = vmatpush1.msra.mxu0 %v737
        %2045 = vmatprep.subr.mxu0 0.0
        %2046 = vmatpush1.msra.mxu0 %v740
        %2047 = vmatprep.subr.mxu0 0.0
        %2048 = vmatpush1.msra.mxu0 0.0
        %2049 = vmatprep.subr.mxu0 0.0
        %2050 = vmatpush1.msra.mxu0 0.0
        %2051 = vmatprep.subr.mxu0 0.0
        %2052 = vmatpush1.msra.mxu0 0.0
        %2053 = vmatprep.subr.mxu0 0.0
        %2054 = vmatpush1.msra.mxu0 0.0
        %2055 = vmatprep.subr.mxu0 0.0
        %2056 = vmatpush1.msra.mxu0 0.0
        %2057 = vmatprep.subr.mxu0 0.0
        %2058 = vmatpush1.msra.mxu0 0.0
        %2059 = vmatprep.subr.mxu0 0.0
        %2060 = vmatpush1.msra.mxu0 0.0
        %2061 = vmatprep.subr.mxu0 0.0
        %2062 = vmatpush1.msra.mxu0 0.0
        %2063 = vmatprep.subr.mxu0 0.0
        %2064 = vmatpush1.msra.mxu0 0.0
        %2065 = vmatprep.subr.mxu0 0.0
        %2066 = vmatpush1.msra.mxu0 0.0
        %2067 = vmatprep.subr.mxu0 0.0
        %2068 = vmatpush1.msra.mxu0 0.0
        %2069 = vmatprep.subr.mxu0 0.0
        %2070 = vmatpush1.msra.mxu0 0.0
        %2071 = vmatprep.subr.mxu0 0.0
        %2072 = vmatpush1.msra.mxu0 0.0
        %2073 = vmatprep.subr.mxu0 0.0
        %2074 = vmatpush1.msra.mxu0 0.0
        %2075 = vmatprep.subr.mxu0 0.0
        %2076 = vmatpush1.msra.mxu0 0.0
        %2077 = vmatprep.subr.mxu0 0.0
        %2078 = vmatpush1.msra.mxu0 0.0
        %2079 = vmatprep.mubr.f32.mxu0 0.0
        %2080 = vmatmul.mubr.f32.gmra.mrb[0].mxu0 %v1936
        %v2081 = vpop.f32.mrb[0].mxu0
        %v2082 = vadd.f32 0.0, %v2081
        %v2083 = vpop.f32.mrb[0].mxu0
        %2084 = vdwg.mxu0
        %v2085 = vadd.f32 %v1941, %v2011
        %v2086 = vsub.f32 0.0, %v2085
        %v2087 = vmul.f32 %v2086, 1.442695
        %v2088 = vpow.pop %v2087
        %v2089 = vadd.f32 %v2088, 1.0
        %v2090 = vrcp.pop %v2089
        %v2091 = vmul.f32 1.0, %v2090
        %v2092 = vadd.f32 %v1942, %v2013
        %v2093 = vsub.f32 0.0, %v2092
        %v2094 = vmul.f32 %v2093, 1.442695
        %v2095 = vpow.pop %v2094
        %v2096 = vadd.f32 %v2095, 1.0
        %v2097 = vrcp.pop %v2096
        %v2098 = vmul.f32 1.0, %v2097
        %v2099 = vadd.f32 %v2082, %v746
        %v2100 = vmul.f32 %v2091, %v2099
        %v2101 = vadd.f32 %v1943, %v2100
        %v2102 = vtanh.pop %v2101
        %v2103 = vsub.f32 1.0, %v2098
        %v2104 = vmul.f32 %v2103, %v2102
        %v2105 = vmul.f32 %v2098, %v1936
        %v2106 = vadd.f32 %v2104, %v2105
        %v2107 = vadd.f32 %v1937, %v2106
        %s2108 = smul.u32 8, 3
        %s2109 = smul.addr %s2108, 8
        %s2110 = scalar_lea.vmem [#allocation2], %s2109
        %v2111 = vld [vmem:[%s2110] sm:$0xff]
        %v2112 = vld [vmem:[%s2110 + $0x8] sm:$0xff]
        %v2113 = vld [vmem:[%s2110 + $0x10] sm:$0xff]
        %2114 = vmatprep.subr.mxu0 %v694
        %2115 = vmatpush1.msra.mxu0 %v693
        %2116 = vmatprep.subr.mxu0 %v697
        %2117 = vmatpush1.msra.mxu0 %v696
        %2118 = vmatprep.subr.mxu0 %v700
        %2119 = vmatpush1.msra.mxu0 %v699
        %2120 = vmatprep.subr.mxu0 %v703
        %2121 = vmatpush1.msra.mxu0 %v702
        %2122 = vmatprep.subr.mxu0 %v706
        %2123 = vmatpush1.msra.mxu0 %v705
        %2124 = vmatprep.subr.mxu0 %v709
        %2125 = vmatpush1.msra.mxu0 %v708
        %2126 = vmatprep.subr.mxu0 %v712
        %2127 = vmatpush1.msra.mxu0 %v711
        %2128 = vmatprep.subr.mxu0 %v715
        %2129 = vmatpush1.msra.mxu0 %v714
        %2130 = vmatprep.subr.mxu0 %v718
        %2131 = vmatpush1.msra.mxu0 %v717
        %2132 = vmatprep.subr.mxu0 %v721
        %2133 = vmatpush1.msra.mxu0 %v720
        %2134 = vmatprep.subr.mxu0 %v724
        %2135 = vmatpush1.msra.mxu0 %v723
        %2136 = vmatprep.subr.mxu0 %v727
        %2137 = vmatpush1.msra.mxu0 %v726
        %2138 = vmatprep.subr.mxu0 %v730
        %2139 = vmatpush1.msra.mxu0 %v729
        %2140 = vmatprep.subr.mxu0 %v733
        %2141 = vmatpush1.msra.mxu0 %v732
        %2142 = vmatprep.subr.mxu0 %v736
        %2143 = vmatpush1.msra.mxu0 %v735
        %2144 = vmatprep.subr.mxu0 %v739
        %2145 = vmatpush1.msra.mxu0 %v738
        %2146 = vmatprep.subr.mxu0 0.0
        %2147 = vmatpush1.msra.mxu0 0.0
        %2148 = vmatprep.subr.mxu0 0.0
        %2149 = vmatpush1.msra.mxu0 0.0
        %2150 = vmatprep.subr.mxu0 0.0
        %2151 = vmatpush1.msra.mxu0 0.0
        %2152 = vmatprep.subr.mxu0 0.0
        %2153 = vmatpush1.msra.mxu0 0.0
        %2154 = vmatprep.subr.mxu0 0.0
        %2155 = vmatpush1.msra.mxu0 0.0
        %2156 = vmatprep.subr.mxu0 0.0
        %2157 = vmatpush1.msra.mxu0 0.0
        %2158 = vmatprep.subr.mxu0 0.0
        %2159 = vmatpush1.msra.mxu0 0.0
        %2160 = vmatprep.subr.mxu0 0.0
        %2161 = vmatpush1.msra.mxu0 0.0
        %2162 = vmatprep.subr.mxu0 0.0
        %2163 = vmatpush1.msra.mxu0 0.0
        %2164 = vmatprep.subr.mxu0 0.0
        %2165 = vmatpush1.msra.mxu0 0.0
        %2166 = vmatprep.subr.mxu0 0.0
        %2167 = vmatpush1.msra.mxu0 0.0
        %2168 = vmatprep.subr.mxu0 0.0
        %2169 = vmatpush1.msra.mxu0 0.0
        %2170 = vmatprep.subr.mxu0 0.0
        %2171 = vmatpush1.msra.mxu0 0.0
        %2172 = vmatprep.subr.mxu0 0.0
        %2173 = vmatpush1.msra.mxu0 0.0
        %2174 = vmatprep.subr.mxu0 0.0
        %2175 = vmatpush1.msra.mxu0 0.0
        %2176 = vmatprep.subr.mxu0 0.0
        %2177 = vmatpush1.msra.mxu0 0.0
        %2178 = vmatprep.mubr.f32.mxu0 0.0
        %2179 = vmatmul.mubr.f32.gmra.mrb[0].mxu0 %v2106
        %v2180 = vpop.f32.mrb[0].mxu0
        %v2181 = vadd.f32 0.0, %v2180
        %v2182 = vpop.f32.mrb[0].mxu0
        %v2183 = vadd.f32 0.0, %v2182
        %2184 = vdwg.mxu0
        %2185 = vmatprep.subr.mxu0 0.0
        %2186 = vmatpush1.msra.mxu0 %v695
        %2187 = vmatprep.subr.mxu0 0.0
        %2188 = vmatpush1.msra.mxu0 %v698
        %2189 = vmatprep.subr.mxu0 0.0
        %2190 = vmatpush1.msra.mxu0 %v701
        %2191 = vmatprep.subr.mxu0 0.0
        %2192 = vmatpush1.msra.mxu0 %v704
        %2193 = vmatprep.subr.mxu0 0.0
        %2194 = vmatpush1.msra.mxu0 %v707
        %2195 = vmatprep.subr.mxu0 0.0
        %2196 = vmatpush1.msra.mxu0 %v710
        %2197 = vmatprep.subr.mxu0 0.0
        %2198 = vmatpush1.msra.mxu0 %v713
        %2199 = vmatprep.subr.mxu0 0.0
        %2200 = vmatpush1.msra.mxu0 %v716
        %2201 = vmatprep.subr.mxu0 0.0
        %2202 = vmatpush1.msra.mxu0 %v719
        %2203 = vmatprep.subr.mxu0 0.0
        %2204 = vmatpush1.msra.mxu0 %v722
        %2205 = vmatprep.subr.mxu0 0.0
        %2206 = vmatpush1.msra.mxu0 %v725
        %2207 = vmatprep.subr.mxu0 0.0
        %2208 = vmatpush1.msra.mxu0 %v728
        %2209 = vmatprep.subr.mxu0 0.0
        %2210 = vmatpush1.msra.mxu0 %v731
        %2211 = vmatprep.subr.mxu0 0.0
        %2212 = vmatpush1.msra.mxu0 %v734
        %2213 = vmatprep.subr.mxu0 0.0
        %2214 = vmatpush1.msra.mxu0 %v737
        %2215 = vmatprep.subr.mxu0 0.0
        %2216 = vmatpush1.msra.mxu0 %v740
        %2217 = vmatprep.subr.mxu0 0.0
        %2218 = vmatpush1.msra.mxu0 0.0
        %2219 = vmatprep.subr.mxu0 0.0
        %2220 = vmatpush1.msra.mxu0 0.0
        %2221 = vmatprep.subr.mxu0 0.0
        %2222 = vmatpush1.msra.mxu0 0.0
        %2223 = vmatprep.subr.mxu0 0.0
        %2224 = vmatpush1.msra.mxu0 0.0
        %2225 = vmatprep.subr.mxu0 0.0
        %2226 = vmatpush1.msra.mxu0 0.0
        %2227 = vmatprep.subr.mxu0 0.0
        %2228 = vmatpush1.msra.mxu0 0.0
        %2229 = vmatprep.subr.mxu0 0.0
        %2230 = vmatpush1.msra.mxu0 0.0
        %2231 = vmatprep.subr.mxu0 0.0
        %2232 = vmatpush1.msra.mxu0 0.0
        %2233 = vmatprep.subr.mxu0 0.0
        %2234 = vmatpush1.msra.mxu0 0.0
        %2235 = vmatprep.subr.mxu0 0.0
        %2236 = vmatpush1.msra.mxu0 0.0
        %2237 = vmatprep.subr.mxu0 0.0
        %2238 = vmatpush1.msra.mxu0 0.0
        %2239 = vmatprep.subr.mxu0 0.0
        %2240 = vmatpush1.msra.mxu0 0.0
        %2241 = vmatprep.subr.mxu0 0.0
        %2242 = vmatpush1.msra.mxu0 0.0
        %2243 = vmatprep.subr.mxu0 0.0
        %2244 = vmatpush1.msra.mxu0 0.0
        %2245 = vmatprep.subr.mxu0 0.0
        %2246 = vmatpush1.msra.mxu0 0.0
        %2247 = vmatprep.subr.mxu0 0.0
        %2248 = vmatpush1.msra.mxu0 0.0
        %2249 = vmatprep.mubr.f32.mxu0 0.0
        %2250 = vmatmul.mubr.f32.gmra.mrb[0].mxu0 %v2106
        %v2251 = vpop.f32.mrb[0].mxu0
        %v2252 = vadd.f32 0.0, %v2251
        %v2253 = vpop.f32.mrb[0].mxu0
        %2254 = vdwg.mxu0
        %v2255 = vadd.f32 %v2111, %v2181
        %v2256 = vsub.f32 0.0, %v2255
        %v2257 = vmul.f32 %v2256, 1.442695
        %v2258 = vpow.pop %v2257
        %v2259 = vadd.f32 %v2258, 1.0
        %v2260 = vrcp.pop %v2259
        %v2261 = vmul.f32 1.0, %v2260
        %v2262 = vadd.f32 %v2112, %v2183
        %v2263 = vsub.f32 0.0, %v2262
        %v2264 = vmul.f32 %v2263, 1.442695
        %v2265 = vpow.pop %v2264
        %v2266 = vadd.f32 %v2265, 1.0
        %v2267 = vrcp.pop %v2266
        %v2268 = vmul.f32 1.0, %v2267
        %v2269 = vadd.f32 %v2252, %v746
        %v2270 = vmul.f32 %v2261, %v2269
        %v2271 = vadd.f32 %v2113, %v2270
        %v2272 = vtanh.pop %v2271
        %v2273 = vsub.f32 1.0, %v2268
        %v2274 = vmul.f32 %v2273, %v2272
        %v2275 = vmul.f32 %v2268, %v2106
        %v2276 = vadd.f32 %v2274, %v2275
        %v2277 = vadd.f32 %v2107, %v2276
        %s2278 = smul.u32 9, 3
        %s2279 = smul.addr %s2278, 8
        %s2280 = scalar_lea.vmem [#allocation2], %s2279
        %v2281 = vld [vmem:[%s2280] sm:$0xff]
        %v2282 = vld [vmem:[%s2280 + $0x8] sm:$0xff]
        %v2283 = vld [vmem:[%s2280 + $0x10] sm:$0xff]
        %2284 = vmatprep.subr.mxu0 %v694
        %2285 = vmatpush1.msra.mxu0 %v693
        %2286 = vmatprep.subr.mxu0 %v697
        %2287 = vmatpush1.msra.mxu0 %v696
        %2288 = vmatprep.subr.mxu0 %v700
        %2289 = vmatpush1.msra.mxu0 %v699
        %2290 = vmatprep.subr.mxu0 %v703
        %2291 = vmatpush1.msra.mxu0 %v702
        %2292 = vmatprep.subr.mxu0 %v706
        %2293 = vmatpush1.msra.mxu0 %v705
        %2294 = vmatprep.subr.mxu0 %v709
        %2295 = vmatpush1.msra.mxu0 %v708
        %2296 = vmatprep.subr.mxu0 %v712
        %2297 = vmatpush1.msra.mxu0 %v711
        %2298 = vmatprep.subr.mxu0 %v715
        %2299 = vmatpush1.msra.mxu0 %v714
        %2300 = vmatprep.subr.mxu0 %v718
        %2301 = vmatpush1.msra.mxu0 %v717
        %2302 = vmatprep.subr.mxu0 %v721
        %2303 = vmatpush1.msra.mxu0 %v720
        %2304 = vmatprep.subr.mxu0 %v724
        %2305 = vmatpush1.msra.mxu0 %v723
        %2306 = vmatprep.subr.mxu0 %v727
        %2307 = vmatpush1.msra.mxu0 %v726
        %2308 = vmatprep.subr.mxu0 %v730
        %2309 = vmatpush1.msra.mxu0 %v729
        %2310 = vmatprep.subr.mxu0 %v733
        %2311 = vmatpush1.msra.mxu0 %v732
        %2312 = vmatprep.subr.mxu0 %v736
        %2313 = vmatpush1.msra.mxu0 %v735
        %2314 = vmatprep.subr.mxu0 %v739
        %2315 = vmatpush1.msra.mxu0 %v738
        %2316 = vmatprep.subr.mxu0 0.0
        %2317 = vmatpush1.msra.mxu0 0.0
        %2318 = vmatprep.subr.mxu0 0.0
        %2319 = vmatpush1.msra.mxu0 0.0
        %2320 = vmatprep.subr.mxu0 0.0
        %2321 = vmatpush1.msra.mxu0 0.0
        %2322 = vmatprep.subr.mxu0 0.0
        %2323 = vmatpush1.msra.mxu0 0.0
        %2324 = vmatprep.subr.mxu0 0.0
        %2325 = vmatpush1.msra.mxu0 0.0
        %2326 = vmatprep.subr.mxu0 0.0
        %2327 = vmatpush1.msra.mxu0 0.0
        %2328 = vmatprep.subr.mxu0 0.0
        %2329 = vmatpush1.msra.mxu0 0.0
        %2330 = vmatprep.subr.mxu0 0.0
        %2331 = vmatpush1.msra.mxu0 0.0
        %2332 = vmatprep.subr.mxu0 0.0
        %2333 = vmatpush1.msra.mxu0 0.0
        %2334 = vmatprep.subr.mxu0 0.0
        %2335 = vmatpush1.msra.mxu0 0.0
        %2336 = vmatprep.subr.mxu0 0.0
        %2337 = vmatpush1.msra.mxu0 0.0
        %2338 = vmatprep.subr.mxu0 0.0
        %2339 = vmatpush1.msra.mxu0 0.0
        %2340 = vmatprep.subr.mxu0 0.0
        %2341 = vmatpush1.msra.mxu0 0.0
        %2342 = vmatprep.subr.mxu0 0.0
        %2343 = vmatpush1.msra.mxu0 0.0
        %2344 = vmatprep.subr.mxu0 0.0
        %2345 = vmatpush1.msra.mxu0 0.0
        %2346 = vmatprep.subr.mxu0 0.0
        %2347 = vmatpush1.msra.mxu0 0.0
        %2348 = vmatprep.mubr.f32.mxu0 0.0
        %2349 = vmatmul.mubr.f32.gmra.mrb[0].mxu0 %v2276
        %v2350 = vpop.f32.mrb[0].mxu0
        %v2351 = vadd.f32 0.0, %v2350
        %v2352 = vpop.f32.mrb[0].mxu0
        %v2353 = vadd.f32 0.0, %v2352
        %2354 = vdwg.mxu0
        %2355 = vmatprep.subr.mxu0 0.0
        %2356 = vmatpush1.msra.mxu0 %v695
        %2357 = vmatprep.subr.mxu0 0.0
        %2358 = vmatpush1.msra.mxu0 %v698
        %2359 = vmatprep.subr.mxu0 0.0
        %2360 = vmatpush1.msra.mxu0 %v701
        %2361 = vmatprep.subr.mxu0 0.0
        %2362 = vmatpush1.msra.mxu0 %v704
        %2363 = vmatprep.subr.mxu0 0.0
        %2364 = vmatpush1.msra.mxu0 %v707
        %2365 = vmatprep.subr.mxu0 0.0
        %2366 = vmatpush1.msra.mxu0 %v710
        %2367 = vmatprep.subr.mxu0 0.0
        %2368 = vmatpush1.msra.mxu0 %v713
        %2369 = vmatprep.subr.mxu0 0.0
        %2370 = vmatpush1.msra.mxu0 %v716
        %2371 = vmatprep.subr.mxu0 0.0
        %2372 = vmatpush1.msra.mxu0 %v719
        %2373 = vmatprep.subr.mxu0 0.0
        %2374 = vmatpush1.msra.mxu0 %v722
        %2375 = vmatprep.subr.mxu0 0.0
        %2376 = vmatpush1.msra.mxu0 %v725
        %2377 = vmatprep.subr.mxu0 0.0
        %2378 = vmatpush1.msra.mxu0 %v728
        %2379 = vmatprep.subr.mxu0 0.0
        %2380 = vmatpush1.msra.mxu0 %v731
        %2381 = vmatprep.subr.mxu0 0.0
        %2382 = vmatpush1.msra.mxu0 %v734
        %2383 = vmatprep.subr.mxu0 0.0
        %2384 = vmatpush1.msra.mxu0 %v737
        %2385 = vmatprep.subr.mxu0 0.0
        %2386 = vmatpush1.msra.mxu0 %v740
        %2387 = vmatprep.subr.mxu0 0.0
        %2388 = vmatpush1.msra.mxu0 0.0
        %2389 = vmatprep.subr.mxu0 0.0
        %2390 = vmatpush1.msra.mxu0 0.0
        %2391 = vmatprep.subr.mxu0 0.0
        %2392 = vmatpush1.msra.mxu0 0.0
        %2393 = vmatprep.subr.mxu0 0.0
        %2394 = vmatpush1.msra.mxu0 0.0
        %2395 = vmatprep.subr.mxu0 0.0
        %2396 = vmatpush1.msra.mxu0 0.0
        %2397 = vmatprep.subr.mxu0 0.0
        %2398 = vmatpush1.msra.mxu0 0.0
        %2399 = vmatprep.subr.mxu0 0.0
        %2400 = vmatpush1.msra.mxu0 0.0
        %2401 = vmatprep.subr.mxu0 0.0
        %2402 = vmatpush1.msra.mxu0 0.0
        %2403 = vmatprep.subr.mxu0 0.0
        %2404 = vmatpush1.msra.mxu0 0.0
        %2405 = vmatprep.subr.mxu0 0.0
        %2406 = vmatpush1.msra.mxu0 0.0
        %2407 = vmatprep.subr.mxu0 0.0
        %2408 = vmatpush1.msra.mxu0 0.0
        %2409 = vmatprep.subr.mxu0 0.0
        %2410 = vmatpush1.msra.mxu0 0.0
        %2411 = vmatprep.subr.mxu0 0.0
        %2412 = vmatpush1.msra.mxu0 0.0
        %2413 = vmatprep.subr.mxu0 0.0
        %2414 = vmatpush1.msra.mxu0 0.0
        %2415 = vmatprep.subr.mxu0 0.0
        %2416 = vmatpush1.msra.mxu0 0.0
        %2417 = vmatprep.subr.mxu0 0.0
        %2418 = vmatpush1.msra.mxu0 0.0
        %2419 = vmatprep.mubr.f32.mxu0 0.0
        %2420 = vmatmul.mubr.f32.gmra.mrb[0].mxu0 %v2276
        %v2421 = vpop.f32.mrb[0].mxu0
        %v2422 = vadd.f32 0.0, %v2421
        %v2423 = vpop.f32.mrb[0].mxu0
        %2424 = vdwg.mxu0
        %v2425 = vadd.f32 %v2281, %v2351
        %v2426 = vsub.f32 0.0, %v2425
        %v2427 = vmul.f32 %v2426, 1.442695
        %v2428 = vpow.pop %v2427
        %v2429 = vadd.f32 %v2428, 1.0
        %v2430 = vrcp.pop %v2429
        %v2431 = vmul.f32 1.0, %v2430
        %v2432 = vadd.f32 %v2282, %v2353
        %v2433 = vsub.f32 0.0, %v2432
        %v2434 = vmul.f32 %v2433, 1.442695
        %v2435 = vpow.pop %v2434
        %v2436 = vadd.f32 %v2435, 1.0
        %v2437 = vrcp.pop %v2436
        %v2438 = vmul.f32 1.0, %v2437
        %v2439 = vadd.f32 %v2422, %v746
        %v2440 = vmul.f32 %v2431, %v2439
        %v2441 = vadd.f32 %v2283, %v2440
        %v2442 = vtanh.pop %v2441
        %v2443 = vsub.f32 1.0, %v2438
        %v2444 = vmul.f32 %v2443, %v2442
        %v2445 = vmul.f32 %v2438, %v2276
        %v2446 = vadd.f32 %v2444, %v2445
        %v2447 = vadd.f32 %v2277, %v2446
        %s2448 = smul.u32 10, 3
        %s2449 = smul.addr %s2448, 8
        %s2450 = scalar_lea.vmem [#allocation2], %s2449
        %v2451 = vld [vmem:[%s2450] sm:$0xff]
        %v2452 = vld [vmem:[%s2450 + $0x8] sm:$0xff]
        %v2453 = vld [vmem:[%s2450 + $0x10] sm:$0xff]
        %2454 = vmatprep.subr.mxu0 %v694
        %2455 = vmatpush1.msra.mxu0 %v693
        %2456 = vmatprep.subr.mxu0 %v697
        %2457 = vmatpush1.msra.mxu0 %v696
        %2458 = vmatprep.subr.mxu0 %v700
        %2459 = vmatpush1.msra.mxu0 %v699
        %2460 = vmatprep.subr.mxu0 %v703
        %2461 = vmatpush1.msra.mxu0 %v702
        %2462 = vmatprep.subr.mxu0 %v706
        %2463 = vmatpush1.msra.mxu0 %v705
        %2464 = vmatprep.subr.mxu0 %v709
        %2465 = vmatpush1.msra.mxu0 %v708
        %2466 = vmatprep.subr.mxu0 %v712
        %2467 = vmatpush1.msra.mxu0 %v711
        %2468 = vmatprep.subr.mxu0 %v715
        %2469 = vmatpush1.msra.mxu0 %v714
        %2470 = vmatprep.subr.mxu0 %v718
        %2471 = vmatpush1.msra.mxu0 %v717
        %2472 = vmatprep.subr.mxu0 %v721
        %2473 = vmatpush1.msra.mxu0 %v720
        %2474 = vmatprep.subr.mxu0 %v724
        %2475 = vmatpush1.msra.mxu0 %v723
        %2476 = vmatprep.subr.mxu0 %v727
        %2477 = vmatpush1.msra.mxu0 %v726
        %2478 = vmatprep.subr.mxu0 %v730
        %2479 = vmatpush1.msra.mxu0 %v729
        %2480 = vmatprep.subr.mxu0 %v733
        %2481 = vmatpush1.msra.mxu0 %v732
        %2482 = vmatprep.subr.mxu0 %v736
        %2483 = vmatpush1.msra.mxu0 %v735
        %2484 = vmatprep.subr.mxu0 %v739
        %2485 = vmatpush1.msra.mxu0 %v738
        %2486 = vmatprep.subr.mxu0 0.0
        %2487 = vmatpush1.msra.mxu0 0.0
        %2488 = vmatprep.subr.mxu0 0.0
        %2489 = vmatpush1.msra.mxu0 0.0
        %2490 = vmatprep.subr.mxu0 0.0
        %2491 = vmatpush1.msra.mxu0 0.0
        %2492 = vmatprep.subr.mxu0 0.0
        %2493 = vmatpush1.msra.mxu0 0.0
        %2494 = vmatprep.subr.mxu0 0.0
        %2495 = vmatpush1.msra.mxu0 0.0
        %2496 = vmatprep.subr.mxu0 0.0
        %2497 = vmatpush1.msra.mxu0 0.0
        %2498 = vmatprep.subr.mxu0 0.0
        %2499 = vmatpush1.msra.mxu0 0.0
        %2500 = vmatprep.subr.mxu0 0.0
        %2501 = vmatpush1.msra.mxu0 0.0
        %2502 = vmatprep.subr.mxu0 0.0
        %2503 = vmatpush1.msra.mxu0 0.0
        %2504 = vmatprep.subr.mxu0 0.0
        %2505 = vmatpush1.msra.mxu0 0.0
        %2506 = vmatprep.subr.mxu0 0.0
        %2507 = vmatpush1.msra.mxu0 0.0
        %2508 = vmatprep.subr.mxu0 0.0
        %2509 = vmatpush1.msra.mxu0 0.0
        %2510 = vmatprep.subr.mxu0 0.0
        %2511 = vmatpush1.msra.mxu0 0.0
        %2512 = vmatprep.subr.mxu0 0.0
        %2513 = vmatpush1.msra.mxu0 0.0
        %2514 = vmatprep.subr.mxu0 0.0
        %2515 = vmatpush1.msra.mxu0 0.0
        %2516 = vmatprep.subr.mxu0 0.0
        %2517 = vmatpush1.msra.mxu0 0.0
        %2518 = vmatprep.mubr.f32.mxu0 0.0
        %2519 = vmatmul.mubr.f32.gmra.mrb[0].mxu0 %v2446
        %v2520 = vpop.f32.mrb[0].mxu0
        %v2521 = vadd.f32 0.0, %v2520
        %v2522 = vpop.f32.mrb[0].mxu0
        %v2523 = vadd.f32 0.0, %v2522
        %2524 = vdwg.mxu0
        %2525 = vmatprep.subr.mxu0 0.0
        %2526 = vmatpush1.msra.mxu0 %v695
        %2527 = vmatprep.subr.mxu0 0.0
        %2528 = vmatpush1.msra.mxu0 %v698
        %2529 = vmatprep.subr.mxu0 0.0
        %2530 = vmatpush1.msra.mxu0 %v701
        %2531 = vmatprep.subr.mxu0 0.0
        %2532 = vmatpush1.msra.mxu0 %v704
        %2533 = vmatprep.subr.mxu0 0.0
        %2534 = vmatpush1.msra.mxu0 %v707
        %2535 = vmatprep.subr.mxu0 0.0
        %2536 = vmatpush1.msra.mxu0 %v710
        %2537 = vmatprep.subr.mxu0 0.0
        %2538 = vmatpush1.msra.mxu0 %v713
        %2539 = vmatprep.subr.mxu0 0.0
        %2540 = vmatpush1.msra.mxu0 %v716
        %2541 = vmatprep.subr.mxu0 0.0
        %2542 = vmatpush1.msra.mxu0 %v719
        %2543 = vmatprep.subr.mxu0 0.0
        %2544 = vmatpush1.msra.mxu0 %v722
        %2545 = vmatprep.subr.mxu0 0.0
        %2546 = vmatpush1.msra.mxu0 %v725
        %2547 = vmatprep.subr.mxu0 0.0
        %2548 = vmatpush1.msra.mxu0 %v728
        %2549 = vmatprep.subr.mxu0 0.0
        %2550 = vmatpush1.msra.mxu0 %v731
        %2551 = vmatprep.subr.mxu0 0.0
        %2552 = vmatpush1.msra.mxu0 %v734
        %2553 = vmatprep.subr.mxu0 0.0
        %2554 = vmatpush1.msra.mxu0 %v737
        %2555 = vmatprep.subr.mxu0 0.0
        %2556 = vmatpush1.msra.mxu0 %v740
        %2557 = vmatprep.subr.mxu0 0.0
        %2558 = vmatpush1.msra.mxu0 0.0
        %2559 = vmatprep.subr.mxu0 0.0
        %2560 = vmatpush1.msra.mxu0 0.0
        %2561 = vmatprep.subr.mxu0 0.0
        %2562 = vmatpush1.msra.mxu0 0.0
        %2563 = vmatprep.subr.mxu0 0.0
        %2564 = vmatpush1.msra.mxu0 0.0
        %2565 = vmatprep.subr.mxu0 0.0
        %2566 = vmatpush1.msra.mxu0 0.0
        %2567 = vmatprep.subr.mxu0 0.0
        %2568 = vmatpush1.msra.mxu0 0.0
        %2569 = vmatprep.subr.mxu0 0.0
        %2570 = vmatpush1.msra.mxu0 0.0
        %2571 = vmatprep.subr.mxu0 0.0
        %2572 = vmatpush1.msra.mxu0 0.0
        %2573 = vmatprep.subr.mxu0 0.0
        %2574 = vmatpush1.msra.mxu0 0.0
        %2575 = vmatprep.subr.mxu0 0.0
        %2576 = vmatpush1.msra.mxu0 0.0
        %2577 = vmatprep.subr.mxu0 0.0
        %2578 = vmatpush1.msra.mxu0 0.0
        %2579 = vmatprep.subr.mxu0 0.0
        %2580 = vmatpush1.msra.mxu0 0.0
        %2581 = vmatprep.subr.mxu0 0.0
        %2582 = vmatpush1.msra.mxu0 0.0
        %2583 = vmatprep.subr.mxu0 0.0
        %2584 = vmatpush1.msra.mxu0 0.0
        %2585 = vmatprep.subr.mxu0 0.0
        %2586 = vmatpush1.msra.mxu0 0.0
        %2587 = vmatprep.subr.mxu0 0.0
        %2588 = vmatpush1.msra.mxu0 0.0
        %2589 = vmatprep.mubr.f32.mxu0 0.0
        %2590 = vmatmul.mubr.f32.gmra.mrb[0].mxu0 %v2446
        %v2591 = vpop.f32.mrb[0].mxu0
        %v2592 = vadd.f32 0.0, %v2591
        %v2593 = vpop.f32.mrb[0].mxu0
        %2594 = vdwg.mxu0
        %v2595 = vadd.f32 %v2451, %v2521
        %v2596 = vsub.f32 0.0, %v2595
        %v2597 = vmul.f32 %v2596, 1.442695
        %v2598 = vpow.pop %v2597
        %v2599 = vadd.f32 %v2598, 1.0
        %v2600 = vrcp.pop %v2599
        %v2601 = vmul.f32 1.0, %v2600
        %v2602 = vadd.f32 %v2452, %v2523
        %v2603 = vsub.f32 0.0, %v2602
        %v2604 = vmul.f32 %v2603, 1.442695
        %v2605 = vpow.pop %v2604
        %v2606 = vadd.f32 %v2605, 1.0
        %v2607 = vrcp.pop %v2606
        %v2608 = vmul.f32 1.0, %v2607
        %v2609 = vadd.f32 %v2592, %v746
        %v2610 = vmul.f32 %v2601, %v2609
        %v2611 = vadd.f32 %v2453, %v2610
        %v2612 = vtanh.pop %v2611
        %v2613 = vsub.f32 1.0, %v2608
        %v2614 = vmul.f32 %v2613, %v2612
        %v2615 = vmul.f32 %v2608, %v2446
        %v2616 = vadd.f32 %v2614, %v2615
        %v2617 = vadd.f32 %v2447, %v2616
        %s2618 = smul.u32 11, 3
        %s2619 = smul.addr %s2618, 8
        %s2620 = scalar_lea.vmem [#allocation2], %s2619
        %v2621 = vld [vmem:[%s2620] sm:$0xff]
        %v2622 = vld [vmem:[%s2620 + $0x8] sm:$0xff]
        %v2623 = vld [vmem:[%s2620 + $0x10] sm:$0xff]
        %2624 = vmatprep.subr.mxu0 %v694
        %2625 = vmatpush1.msra.mxu0 %v693
        %2626 = vmatprep.subr.mxu0 %v697
        %2627 = vmatpush1.msra.mxu0 %v696
        %2628 = vmatprep.subr.mxu0 %v700
        %2629 = vmatpush1.msra.mxu0 %v699
        %2630 = vmatprep.subr.mxu0 %v703
        %2631 = vmatpush1.msra.mxu0 %v702
        %2632 = vmatprep.subr.mxu0 %v706
        %2633 = vmatpush1.msra.mxu0 %v705
        %2634 = vmatprep.subr.mxu0 %v709
        %2635 = vmatpush1.msra.mxu0 %v708
        %2636 = vmatprep.subr.mxu0 %v712
        %2637 = vmatpush1.msra.mxu0 %v711
        %2638 = vmatprep.subr.mxu0 %v715
        %2639 = vmatpush1.msra.mxu0 %v714
        %2640 = vmatprep.subr.mxu0 %v718
        %2641 = vmatpush1.msra.mxu0 %v717
        %2642 = vmatprep.subr.mxu0 %v721
        %2643 = vmatpush1.msra.mxu0 %v720
        %2644 = vmatprep.subr.mxu0 %v724
        %2645 = vmatpush1.msra.mxu0 %v723
        %2646 = vmatprep.subr.mxu0 %v727
        %2647 = vmatpush1.msra.mxu0 %v726
        %2648 = vmatprep.subr.mxu0 %v730
        %2649 = vmatpush1.msra.mxu0 %v729
        %2650 = vmatprep.subr.mxu0 %v733
        %2651 = vmatpush1.msra.mxu0 %v732
        %2652 = vmatprep.subr.mxu0 %v736
        %2653 = vmatpush1.msra.mxu0 %v735
        %2654 = vmatprep.subr.mxu0 %v739
        %2655 = vmatpush1.msra.mxu0 %v738
        %2656 = vmatprep.subr.mxu0 0.0
        %2657 = vmatpush1.msra.mxu0 0.0
        %2658 = vmatprep.subr.mxu0 0.0
        %2659 = vmatpush1.msra.mxu0 0.0
        %2660 = vmatprep.subr.mxu0 0.0
        %2661 = vmatpush1.msra.mxu0 0.0
        %2662 = vmatprep.subr.mxu0 0.0
        %2663 = vmatpush1.msra.mxu0 0.0
        %2664 = vmatprep.subr.mxu0 0.0
        %2665 = vmatpush1.msra.mxu0 0.0
        %2666 = vmatprep.subr.mxu0 0.0
        %2667 = vmatpush1.msra.mxu0 0.0
        %2668 = vmatprep.subr.mxu0 0.0
        %2669 = vmatpush1.msra.mxu0 0.0
        %2670 = vmatprep.subr.mxu0 0.0
        %2671 = vmatpush1.msra.mxu0 0.0
        %2672 = vmatprep.subr.mxu0 0.0
        %2673 = vmatpush1.msra.mxu0 0.0
        %2674 = vmatprep.subr.mxu0 0.0
        %2675 = vmatpush1.msra.mxu0 0.0
        %2676 = vmatprep.subr.mxu0 0.0
        %2677 = vmatpush1.msra.mxu0 0.0
        %2678 = vmatprep.subr.mxu0 0.0
        %2679 = vmatpush1.msra.mxu0 0.0
        %2680 = vmatprep.subr.mxu0 0.0
        %2681 = vmatpush1.msra.mxu0 0.0
        %2682 = vmatprep.subr.mxu0 0.0
        %2683 = vmatpush1.msra.mxu0 0.0
        %2684 = vmatprep.subr.mxu0 0.0
        %2685 = vmatpush1.msra.mxu0 0.0
        %2686 = vmatprep.subr.mxu0 0.0
        %2687 = vmatpush1.msra.mxu0 0.0
        %2688 = vmatprep.mubr.f32.mxu0 0.0
        %2689 = vmatmul.mubr.f32.gmra.mrb[0].mxu0 %v2616
        %v2690 = vpop.f32.mrb[0].mxu0
        %v2691 = vadd.f32 0.0, %v2690
        %v2692 = vpop.f32.mrb[0].mxu0
        %v2693 = vadd.f32 0.0, %v2692
        %2694 = vdwg.mxu0
        %2695 = vmatprep.subr.mxu0 0.0
        %2696 = vmatpush1.msra.mxu0 %v695
        %2697 = vmatprep.subr.mxu0 0.0
        %2698 = vmatpush1.msra.mxu0 %v698
        %2699 = vmatprep.subr.mxu0 0.0
        %2700 = vmatpush1.msra.mxu0 %v701
        %2701 = vmatprep.subr.mxu0 0.0
        %2702 = vmatpush1.msra.mxu0 %v704
        %2703 = vmatprep.subr.mxu0 0.0
        %2704 = vmatpush1.msra.mxu0 %v707
        %2705 = vmatprep.subr.mxu0 0.0
        %2706 = vmatpush1.msra.mxu0 %v710
        %2707 = vmatprep.subr.mxu0 0.0
        %2708 = vmatpush1.msra.mxu0 %v713
        %2709 = vmatprep.subr.mxu0 0.0
        %2710 = vmatpush1.msra.mxu0 %v716
        %2711 = vmatprep.subr.mxu0 0.0
        %2712 = vmatpush1.msra.mxu0 %v719
        %2713 = vmatprep.subr.mxu0 0.0
        %2714 = vmatpush1.msra.mxu0 %v722
        %2715 = vmatprep.subr.mxu0 0.0
        %2716 = vmatpush1.msra.mxu0 %v725
        %2717 = vmatprep.subr.mxu0 0.0
        %2718 = vmatpush1.msra.mxu0 %v728
        %2719 = vmatprep.subr.mxu0 0.0
        %2720 = vmatpush1.msra.mxu0 %v731
        %2721 = vmatprep.subr.mxu0 0.0
        %2722 = vmatpush1.msra.mxu0 %v734
        %2723 = vmatprep.subr.mxu0 0.0
        %2724 = vmatpush1.msra.mxu0 %v737
        %2725 = vmatprep.subr.mxu0 0.0
        %2726 = vmatpush1.msra.mxu0 %v740
        %2727 = vmatprep.subr.mxu0 0.0
        %2728 = vmatpush1.msra.mxu0 0.0
        %2729 = vmatprep.subr.mxu0 0.0
        %2730 = vmatpush1.msra.mxu0 0.0
        %2731 = vmatprep.subr.mxu0 0.0
        %2732 = vmatpush1.msra.mxu0 0.0
        %2733 = vmatprep.subr.mxu0 0.0
        %2734 = vmatpush1.msra.mxu0 0.0
        %2735 = vmatprep.subr.mxu0 0.0
        %2736 = vmatpush1.msra.mxu0 0.0
        %2737 = vmatprep.subr.mxu0 0.0
        %2738 = vmatpush1.msra.mxu0 0.0
        %2739 = vmatprep.subr.mxu0 0.0
        %2740 = vmatpush1.msra.mxu0 0.0
        %2741 = vmatprep.subr.mxu0 0.0
        %2742 = vmatpush1.msra.mxu0 0.0
        %2743 = vmatprep.subr.mxu0 0.0
        %2744 = vmatpush1.msra.mxu0 0.0
        %2745 = vmatprep.subr.mxu0 0.0
        %2746 = vmatpush1.msra.mxu0 0.0
        %2747 = vmatprep.subr.mxu0 0.0
        %2748 = vmatpush1.msra.mxu0 0.0
        %2749 = vmatprep.subr.mxu0 0.0
        %2750 = vmatpush1.msra.mxu0 0.0
        %2751 = vmatprep.subr.mxu0 0.0
        %2752 = vmatpush1.msra.mxu0 0.0
        %2753 = vmatprep.subr.mxu0 0.0
        %2754 = vmatpush1.msra.mxu0 0.0
        %2755 = vmatprep.subr.mxu0 0.0
        %2756 = vmatpush1.msra.mxu0 0.0
        %2757 = vmatprep.subr.mxu0 0.0
        %2758 = vmatpush1.msra.mxu0 0.0
        %2759 = vmatprep.mubr.f32.mxu0 0.0
        %2760 = vmatmul.mubr.f32.gmra.mrb[0].mxu0 %v2616
        %v2761 = vpop.f32.mrb[0].mxu0
        %v2762 = vadd.f32 0.0, %v2761
        %v2763 = vpop.f32.mrb[0].mxu0
        %2764 = vdwg.mxu0
        %v2765 = vadd.f32 %v2621, %v2691
        %v2766 = vsub.f32 0.0, %v2765
        %v2767 = vmul.f32 %v2766, 1.442695
        %v2768 = vpow.pop %v2767
        %v2769 = vadd.f32 %v2768, 1.0
        %v2770 = vrcp.pop %v2769
        %v2771 = vmul.f32 1.0, %v2770
        %v2772 = vadd.f32 %v2622, %v2693
        %v2773 = vsub.f32 0.0, %v2772
        %v2774 = vmul.f32 %v2773, 1.442695
        %v2775 = vpow.pop %v2774
        %v2776 = vadd.f32 %v2775, 1.0
        %v2777 = vrcp.pop %v2776
        %v2778 = vmul.f32 1.0, %v2777
        %v2779 = vadd.f32 %v2762, %v746
        %v2780 = vmul.f32 %v2771, %v2779
        %v2781 = vadd.f32 %v2623, %v2780
        %v2782 = vtanh.pop %v2781
        %v2783 = vsub.f32 1.0, %v2778
        %v2784 = vmul.f32 %v2783, %v2782
        %v2785 = vmul.f32 %v2778, %v2616
        %v2786 = vadd.f32 %v2784, %v2785
        %v2787 = vadd.f32 %v2617, %v2786
        %s2788 = smul.u32 12, 3
        %s2789 = smul.addr %s2788, 8
        %s2790 = scalar_lea.vmem [#allocation2], %s2789
        %v2791 = vld [vmem:[%s2790] sm:$0xff]
        %v2792 = vld [vmem:[%s2790 + $0x8] sm:$0xff]
        %v2793 = vld [vmem:[%s2790 + $0x10] sm:$0xff]
        %2794 = vmatprep.subr.mxu0 %v694
        %2795 = vmatpush1.msra.mxu0 %v693
        %2796 = vmatprep.subr.mxu0 %v697
        %2797 = vmatpush1.msra.mxu0 %v696
        %2798 = vmatprep.subr.mxu0 %v700
        %2799 = vmatpush1.msra.mxu0 %v699
        %2800 = vmatprep.subr.mxu0 %v703
        %2801 = vmatpush1.msra.mxu0 %v702
        %2802 = vmatprep.subr.mxu0 %v706
        %2803 = vmatpush1.msra.mxu0 %v705
        %2804 = vmatprep.subr.mxu0 %v709
        %2805 = vmatpush1.msra.mxu0 %v708
        %2806 = vmatprep.subr.mxu0 %v712
        %2807 = vmatpush1.msra.mxu0 %v711
        %2808 = vmatprep.subr.mxu0 %v715
        %2809 = vmatpush1.msra.mxu0 %v714
        %2810 = vmatprep.subr.mxu0 %v718
        %2811 = vmatpush1.msra.mxu0 %v717
        %2812 = vmatprep.subr.mxu0 %v721
        %2813 = vmatpush1.msra.mxu0 %v720
        %2814 = vmatprep.subr.mxu0 %v724
        %2815 = vmatpush1.msra.mxu0 %v723
        %2816 = vmatprep.subr.mxu0 %v727
        %2817 = vmatpush1.msra.mxu0 %v726
        %2818 = vmatprep.subr.mxu0 %v730
        %2819 = vmatpush1.msra.mxu0 %v729
        %2820 = vmatprep.subr.mxu0 %v733
        %2821 = vmatpush1.msra.mxu0 %v732
        %2822 = vmatprep.subr.mxu0 %v736
        %2823 = vmatpush1.msra.mxu0 %v735
        %2824 = vmatprep.subr.mxu0 %v739
        %2825 = vmatpush1.msra.mxu0 %v738
        %2826 = vmatprep.subr.mxu0 0.0
        %2827 = vmatpush1.msra.mxu0 0.0
        %2828 = vmatprep.subr.mxu0 0.0
        %2829 = vmatpush1.msra.mxu0 0.0
        %2830 = vmatprep.subr.mxu0 0.0
        %2831 = vmatpush1.msra.mxu0 0.0
        %2832 = vmatprep.subr.mxu0 0.0
        %2833 = vmatpush1.msra.mxu0 0.0
        %2834 = vmatprep.subr.mxu0 0.0
        %2835 = vmatpush1.msra.mxu0 0.0
        %2836 = vmatprep.subr.mxu0 0.0
        %2837 = vmatpush1.msra.mxu0 0.0
        %2838 = vmatprep.subr.mxu0 0.0
        %2839 = vmatpush1.msra.mxu0 0.0
        %2840 = vmatprep.subr.mxu0 0.0
        %2841 = vmatpush1.msra.mxu0 0.0
        %2842 = vmatprep.subr.mxu0 0.0
        %2843 = vmatpush1.msra.mxu0 0.0
        %2844 = vmatprep.subr.mxu0 0.0
        %2845 = vmatpush1.msra.mxu0 0.0
        %2846 = vmatprep.subr.mxu0 0.0
        %2847 = vmatpush1.msra.mxu0 0.0
        %2848 = vmatprep.subr.mxu0 0.0
        %2849 = vmatpush1.msra.mxu0 0.0
        %2850 = vmatprep.subr.mxu0 0.0
        %2851 = vmatpush1.msra.mxu0 0.0
        %2852 = vmatprep.subr.mxu0 0.0
        %2853 = vmatpush1.msra.mxu0 0.0
        %2854 = vmatprep.subr.mxu0 0.0
        %2855 = vmatpush1.msra.mxu0 0.0
        %2856 = vmatprep.subr.mxu0 0.0
        %2857 = vmatpush1.msra.mxu0 0.0
        %2858 = vmatprep.mubr.f32.mxu0 0.0
        %2859 = vmatmul.mubr.f32.gmra.mrb[0].mxu0 %v2786
        %v2860 = vpop.f32.mrb[0].mxu0
        %v2861 = vadd.f32 0.0, %v2860
        %v2862 = vpop.f32.mrb[0].mxu0
        %v2863 = vadd.f32 0.0, %v2862
        %2864 = vdwg.mxu0
        %2865 = vmatprep.subr.mxu0 0.0
        %2866 = vmatpush1.msra.mxu0 %v695
        %2867 = vmatprep.subr.mxu0 0.0
        %2868 = vmatpush1.msra.mxu0 %v698
        %2869 = vmatprep.subr.mxu0 0.0
        %2870 = vmatpush1.msra.mxu0 %v701
        %2871 = vmatprep.subr.mxu0 0.0
        %2872 = vmatpush1.msra.mxu0 %v704
        %2873 = vmatprep.subr.mxu0 0.0
        %2874 = vmatpush1.msra.mxu0 %v707
        %2875 = vmatprep.subr.mxu0 0.0
        %2876 = vmatpush1.msra.mxu0 %v710
        %2877 = vmatprep.subr.mxu0 0.0
        %2878 = vmatpush1.msra.mxu0 %v713
        %2879 = vmatprep.subr.mxu0 0.0
        %2880 = vmatpush1.msra.mxu0 %v716
        %2881 = vmatprep.subr.mxu0 0.0
        %2882 = vmatpush1.msra.mxu0 %v719
        %2883 = vmatprep.subr.mxu0 0.0
        %2884 = vmatpush1.msra.mxu0 %v722
        %2885 = vmatprep.subr.mxu0 0.0
        %2886 = vmatpush1.msra.mxu0 %v725
        %2887 = vmatprep.subr.mxu0 0.0
        %2888 = vmatpush1.msra.mxu0 %v728
        %2889 = vmatprep.subr.mxu0 0.0
        %2890 = vmatpush1.msra.mxu0 %v731
        %2891 = vmatprep.subr.mxu0 0.0
        %2892 = vmatpush1.msra.mxu0 %v734
        %2893 = vmatprep.subr.mxu0 0.0
        %2894 = vmatpush1.msra.mxu0 %v737
        %2895 = vmatprep.subr.mxu0 0.0
        %2896 = vmatpush1.msra.mxu0 %v740
        %2897 = vmatprep.subr.mxu0 0.0
        %2898 = vmatpush1.msra.mxu0 0.0
        %2899 = vmatprep.subr.mxu0 0.0
        %2900 = vmatpush1.msra.mxu0 0.0
        %2901 = vmatprep.subr.mxu0 0.0
        %2902 = vmatpush1.msra.mxu0 0.0
        %2903 = vmatprep.subr.mxu0 0.0
        %2904 = vmatpush1.msra.mxu0 0.0
        %2905 = vmatprep.subr.mxu0 0.0
        %2906 = vmatpush1.msra.mxu0 0.0
        %2907 = vmatprep.subr.mxu0 0.0
        %2908 = vmatpush1.msra.mxu0 0.0
        %2909 = vmatprep.subr.mxu0 0.0
        %2910 = vmatpush1.msra.mxu0 0.0
        %2911 = vmatprep.subr.mxu0 0.0
        %2912 = vmatpush1.msra.mxu0 0.0
        %2913 = vmatprep.subr.mxu0 0.0
        %2914 = vmatpush1.msra.mxu0 0.0
        %2915 = vmatprep.subr.mxu0 0.0
        %2916 = vmatpush1.msra.mxu0 0.0
        %2917 = vmatprep.subr.mxu0 0.0
        %2918 = vmatpush1.msra.mxu0 0.0
        %2919 = vmatprep.subr.mxu0 0.0
        %2920 = vmatpush1.msra.mxu0 0.0
        %2921 = vmatprep.subr.mxu0 0.0
        %2922 = vmatpush1.msra.mxu0 0.0
        %2923 = vmatprep.subr.mxu0 0.0
        %2924 = vmatpush1.msra.mxu0 0.0
        %2925 = vmatprep.subr.mxu0 0.0
        %2926 = vmatpush1.msra.mxu0 0.0
        %2927 = vmatprep.subr.mxu0 0.0
        %2928 = vmatpush1.msra.mxu0 0.0
        %2929 = vmatprep.mubr.f32.mxu0 0.0
        %2930 = vmatmul.mubr.f32.gmra.mrb[0].mxu0 %v2786
        %v2931 = vpop.f32.mrb[0].mxu0
        %v2932 = vadd.f32 0.0, %v2931
        %v2933 = vpop.f32.mrb[0].mxu0
        %2934 = vdwg.mxu0
        %v2935 = vadd.f32 %v2791, %v2861
        %v2936 = vsub.f32 0.0, %v2935
        %v2937 = vmul.f32 %v2936, 1.442695
        %v2938 = vpow.pop %v2937
        %v2939 = vadd.f32 %v2938, 1.0
        %v2940 = vrcp.pop %v2939
        %v2941 = vmul.f32 1.0, %v2940
        %v2942 = vadd.f32 %v2792, %v2863
        %v2943 = vsub.f32 0.0, %v2942
        %v2944 = vmul.f32 %v2943, 1.442695
        %v2945 = vpow.pop %v2944
        %v2946 = vadd.f32 %v2945, 1.0
        %v2947 = vrcp.pop %v2946
        %v2948 = vmul.f32 1.0, %v2947
        %v2949 = vadd.f32 %v2932, %v746
        %v2950 = vmul.f32 %v2941, %v2949
        %v2951 = vadd.f32 %v2793, %v2950
        %v2952 = vtanh.pop %v2951
        %v2953 = vsub.f32 1.0, %v2948
        %v2954 = vmul.f32 %v2953, %v2952
        %v2955 = vmul.f32 %v2948, %v2786
        %v2956 = vadd.f32 %v2954, %v2955
        %v2957 = vadd.f32 %v2787, %v2956
        %s2958 = smul.u32 13, 3
        %s2959 = smul.addr %s2958, 8
        %s2960 = scalar_lea.vmem [#allocation2], %s2959
        %v2961 = vld [vmem:[%s2960] sm:$0xff]
        %v2962 = vld [vmem:[%s2960 + $0x8] sm:$0xff]
        %v2963 = vld [vmem:[%s2960 + $0x10] sm:$0xff]
        %2964 = vmatprep.subr.mxu0 %v694
        %2965 = vmatpush1.msra.mxu0 %v693
        %2966 = vmatprep.subr.mxu0 %v697
        %2967 = vmatpush1.msra.mxu0 %v696
        %2968 = vmatprep.subr.mxu0 %v700
        %2969 = vmatpush1.msra.mxu0 %v699
        %2970 = vmatprep.subr.mxu0 %v703
        %2971 = vmatpush1.msra.mxu0 %v702
        %2972 = vmatprep.subr.mxu0 %v706
        %2973 = vmatpush1.msra.mxu0 %v705
        %2974 = vmatprep.subr.mxu0 %v709
        %2975 = vmatpush1.msra.mxu0 %v708
        %2976 = vmatprep.subr.mxu0 %v712
        %2977 = vmatpush1.msra.mxu0 %v711
        %2978 = vmatprep.subr.mxu0 %v715
        %2979 = vmatpush1.msra.mxu0 %v714
        %2980 = vmatprep.subr.mxu0 %v718
        %2981 = vmatpush1.msra.mxu0 %v717
        %2982 = vmatprep.subr.mxu0 %v721
        %2983 = vmatpush1.msra.mxu0 %v720
        %2984 = vmatprep.subr.mxu0 %v724
        %2985 = vmatpush1.msra.mxu0 %v723
        %2986 = vmatprep.subr.mxu0 %v727
        %2987 = vmatpush1.msra.mxu0 %v726
        %2988 = vmatprep.subr.mxu0 %v730
        %2989 = vmatpush1.msra.mxu0 %v729
        %2990 = vmatprep.subr.mxu0 %v733
        %2991 = vmatpush1.msra.mxu0 %v732
        %2992 = vmatprep.subr.mxu0 %v736
        %2993 = vmatpush1.msra.mxu0 %v735
        %2994 = vmatprep.subr.mxu0 %v739
        %2995 = vmatpush1.msra.mxu0 %v738
        %2996 = vmatprep.subr.mxu0 0.0
        %2997 = vmatpush1.msra.mxu0 0.0
        %2998 = vmatprep.subr.mxu0 0.0
        %2999 = vmatpush1.msra.mxu0 0.0
        %3000 = vmatprep.subr.mxu0 0.0
        %3001 = vmatpush1.msra.mxu0 0.0
        %3002 = vmatprep.subr.mxu0 0.0
        %3003 = vmatpush1.msra.mxu0 0.0
        %3004 = vmatprep.subr.mxu0 0.0
        %3005 = vmatpush1.msra.mxu0 0.0
        %3006 = vmatprep.subr.mxu0 0.0
        %3007 = vmatpush1.msra.mxu0 0.0
        %3008 = vmatprep.subr.mxu0 0.0
        %3009 = vmatpush1.msra.mxu0 0.0
        %3010 = vmatprep.subr.mxu0 0.0
        %3011 = vmatpush1.msra.mxu0 0.0
        %3012 = vmatprep.subr.mxu0 0.0
        %3013 = vmatpush1.msra.mxu0 0.0
        %3014 = vmatprep.subr.mxu0 0.0
        %3015 = vmatpush1.msra.mxu0 0.0
        %3016 = vmatprep.subr.mxu0 0.0
        %3017 = vmatpush1.msra.mxu0 0.0
        %3018 = vmatprep.subr.mxu0 0.0
        %3019 = vmatpush1.msra.mxu0 0.0
        %3020 = vmatprep.subr.mxu0 0.0
        %3021 = vmatpush1.msra.mxu0 0.0
        %3022 = vmatprep.subr.mxu0 0.0
        %3023 = vmatpush1.msra.mxu0 0.0
        %3024 = vmatprep.subr.mxu0 0.0
        %3025 = vmatpush1.msra.mxu0 0.0
        %3026 = vmatprep.subr.mxu0 0.0
        %3027 = vmatpush1.msra.mxu0 0.0
        %3028 = vmatprep.mubr.f32.mxu0 0.0
        %3029 = vmatmul.mubr.f32.gmra.mrb[0].mxu0 %v2956
        %v3030 = vpop.f32.mrb[0].mxu0
        %v3031 = vadd.f32 0.0, %v3030
        %v3032 = vpop.f32.mrb[0].mxu0
        %v3033 = vadd.f32 0.0, %v3032
        %3034 = vdwg.mxu0
        %3035 = vmatprep.subr.mxu0 0.0
        %3036 = vmatpush1.msra.mxu0 %v695
        %3037 = vmatprep.subr.mxu0 0.0
        %3038 = vmatpush1.msra.mxu0 %v698
        %3039 = vmatprep.subr.mxu0 0.0
        %3040 = vmatpush1.msra.mxu0 %v701
        %3041 = vmatprep.subr.mxu0 0.0
        %3042 = vmatpush1.msra.mxu0 %v704
        %3043 = vmatprep.subr.mxu0 0.0
        %3044 = vmatpush1.msra.mxu0 %v707
        %3045 = vmatprep.subr.mxu0 0.0
        %3046 = vmatpush1.msra.mxu0 %v710
        %3047 = vmatprep.subr.mxu0 0.0
        %3048 = vmatpush1.msra.mxu0 %v713
        %3049 = vmatprep.subr.mxu0 0.0
        %3050 = vmatpush1.msra.mxu0 %v716
        %3051 = vmatprep.subr.mxu0 0.0
        %3052 = vmatpush1.msra.mxu0 %v719
        %3053 = vmatprep.subr.mxu0 0.0
        %3054 = vmatpush1.msra.mxu0 %v722
        %3055 = vmatprep.subr.mxu0 0.0
        %3056 = vmatpush1.msra.mxu0 %v725
        %3057 = vmatprep.subr.mxu0 0.0
        %3058 = vmatpush1.msra.mxu0 %v728
        %3059 = vmatprep.subr.mxu0 0.0
        %3060 = vmatpush1.msra.mxu0 %v731
        %3061 = vmatprep.subr.mxu0 0.0
        %3062 = vmatpush1.msra.mxu0 %v734
        %3063 = vmatprep.subr.mxu0 0.0
        %3064 = vmatpush1.msra.mxu0 %v737
        %3065 = vmatprep.subr.mxu0 0.0
        %3066 = vmatpush1.msra.mxu0 %v740
        %3067 = vmatprep.subr.mxu0 0.0
        %3068 = vmatpush1.msra.mxu0 0.0
        %3069 = vmatprep.subr.mxu0 0.0
        %3070 = vmatpush1.msra.mxu0 0.0
        %3071 = vmatprep.subr.mxu0 0.0
        %3072 = vmatpush1.msra.mxu0 0.0
        %3073 = vmatprep.subr.mxu0 0.0
        %3074 = vmatpush1.msra.mxu0 0.0
        %3075 = vmatprep.subr.mxu0 0.0
        %3076 = vmatpush1.msra.mxu0 0.0
        %3077 = vmatprep.subr.mxu0 0.0
        %3078 = vmatpush1.msra.mxu0 0.0
        %3079 = vmatprep.subr.mxu0 0.0
        %3080 = vmatpush1.msra.mxu0 0.0
        %3081 = vmatprep.subr.mxu0 0.0
        %3082 = vmatpush1.msra.mxu0 0.0
        %3083 = vmatprep.subr.mxu0 0.0
        %3084 = vmatpush1.msra.mxu0 0.0
        %3085 = vmatprep.subr.mxu0 0.0
        %3086 = vmatpush1.msra.mxu0 0.0
        %3087 = vmatprep.subr.mxu0 0.0
        %3088 = vmatpush1.msra.mxu0 0.0
        %3089 = vmatprep.subr.mxu0 0.0
        %3090 = vmatpush1.msra.mxu0 0.0
        %3091 = vmatprep.subr.mxu0 0.0
        %3092 = vmatpush1.msra.mxu0 0.0
        %3093 = vmatprep.subr.mxu0 0.0
        %3094 = vmatpush1.msra.mxu0 0.0
        %3095 = vmatprep.subr.mxu0 0.0
        %3096 = vmatpush1.msra.mxu0 0.0
        %3097 = vmatprep.subr.mxu0 0.0
        %3098 = vmatpush1.msra.mxu0 0.0
        %3099 = vmatprep.mubr.f32.mxu0 0.0
        %3100 = vmatmul.mubr.f32.gmra.mrb[0].mxu0 %v2956
        %v3101 = vpop.f32.mrb[0].mxu0
        %v3102 = vadd.f32 0.0, %v3101
        %v3103 = vpop.f32.mrb[0].mxu0
        %3104 = vdwg.mxu0
        %v3105 = vadd.f32 %v2961, %v3031
        %v3106 = vsub.f32 0.0, %v3105
        %v3107 = vmul.f32 %v3106, 1.442695
        %v3108 = vpow.pop %v3107
        %v3109 = vadd.f32 %v3108, 1.0
        %v3110 = vrcp.pop %v3109
        %v3111 = vmul.f32 1.0, %v3110
        %v3112 = vadd.f32 %v2962, %v3033
        %v3113 = vsub.f32 0.0, %v3112
        %v3114 = vmul.f32 %v3113, 1.442695
        %v3115 = vpow.pop %v3114
        %v3116 = vadd.f32 %v3115, 1.0
        %v3117 = vrcp.pop %v3116
        %v3118 = vmul.f32 1.0, %v3117
        %v3119 = vadd.f32 %v3102, %v746
        %v3120 = vmul.f32 %v3111, %v3119
        %v3121 = vadd.f32 %v2963, %v3120
        %v3122 = vtanh.pop %v3121
        %v3123 = vsub.f32 1.0, %v3118
        %v3124 = vmul.f32 %v3123, %v3122
        %v3125 = vmul.f32 %v3118, %v2956
        %v3126 = vadd.f32 %v3124, %v3125
        %v3127 = vadd.f32 %v2957, %v3126
        %s3128 = smul.u32 14, 3
        %s3129 = smul.addr %s3128, 8
        %s3130 = scalar_lea.vmem [#allocation2], %s3129
        %v3131 = vld [vmem:[%s3130] sm:$0xff]
        %v3132 = vld [vmem:[%s3130 + $0x8] sm:$0xff]
        %v3133 = vld [vmem:[%s3130 + $0x10] sm:$0xff]
        %3134 = vmatprep.subr.mxu0 %v694
        %3135 = vmatpush1.msra.mxu0 %v693
        %3136 = vmatprep.subr.mxu0 %v697
        %3137 = vmatpush1.msra.mxu0 %v696
        %3138 = vmatprep.subr.mxu0 %v700
        %3139 = vmatpush1.msra.mxu0 %v699
        %3140 = vmatprep.subr.mxu0 %v703
        %3141 = vmatpush1.msra.mxu0 %v702
        %3142 = vmatprep.subr.mxu0 %v706
        %3143 = vmatpush1.msra.mxu0 %v705
        %3144 = vmatprep.subr.mxu0 %v709
        %3145 = vmatpush1.msra.mxu0 %v708
        %3146 = vmatprep.subr.mxu0 %v712
        %3147 = vmatpush1.msra.mxu0 %v711
        %3148 = vmatprep.subr.mxu0 %v715
        %3149 = vmatpush1.msra.mxu0 %v714
        %3150 = vmatprep.subr.mxu0 %v718
        %3151 = vmatpush1.msra.mxu0 %v717
        %3152 = vmatprep.subr.mxu0 %v721
        %3153 = vmatpush1.msra.mxu0 %v720
        %3154 = vmatprep.subr.mxu0 %v724
        %3155 = vmatpush1.msra.mxu0 %v723
        %3156 = vmatprep.subr.mxu0 %v727
        %3157 = vmatpush1.msra.mxu0 %v726
        %3158 = vmatprep.subr.mxu0 %v730
        %3159 = vmatpush1.msra.mxu0 %v729
        %3160 = vmatprep.subr.mxu0 %v733
        %3161 = vmatpush1.msra.mxu0 %v732
        %3162 = vmatprep.subr.mxu0 %v736
        %3163 = vmatpush1.msra.mxu0 %v735
        %3164 = vmatprep.subr.mxu0 %v739
        %3165 = vmatpush1.msra.mxu0 %v738
        %3166 = vmatprep.subr.mxu0 0.0
        %3167 = vmatpush1.msra.mxu0 0.0
        %3168 = vmatprep.subr.mxu0 0.0
        %3169 = vmatpush1.msra.mxu0 0.0
        %3170 = vmatprep.subr.mxu0 0.0
        %3171 = vmatpush1.msra.mxu0 0.0
        %3172 = vmatprep.subr.mxu0 0.0
        %3173 = vmatpush1.msra.mxu0 0.0
        %3174 = vmatprep.subr.mxu0 0.0
        %3175 = vmatpush1.msra.mxu0 0.0
        %3176 = vmatprep.subr.mxu0 0.0
        %3177 = vmatpush1.msra.mxu0 0.0
        %3178 = vmatprep.subr.mxu0 0.0
        %3179 = vmatpush1.msra.mxu0 0.0
        %3180 = vmatprep.subr.mxu0 0.0
        %3181 = vmatpush1.msra.mxu0 0.0
        %3182 = vmatprep.subr.mxu0 0.0
        %3183 = vmatpush1.msra.mxu0 0.0
        %3184 = vmatprep.subr.mxu0 0.0
        %3185 = vmatpush1.msra.mxu0 0.0
        %3186 = vmatprep.subr.mxu0 0.0
        %3187 = vmatpush1.msra.mxu0 0.0
        %3188 = vmatprep.subr.mxu0 0.0
        %3189 = vmatpush1.msra.mxu0 0.0
        %3190 = vmatprep.subr.mxu0 0.0
        %3191 = vmatpush1.msra.mxu0 0.0
        %3192 = vmatprep.subr.mxu0 0.0
        %3193 = vmatpush1.msra.mxu0 0.0
        %3194 = vmatprep.subr.mxu0 0.0
        %3195 = vmatpush1.msra.mxu0 0.0
        %3196 = vmatprep.subr.mxu0 0.0
        %3197 = vmatpush1.msra.mxu0 0.0
        %3198 = vmatprep.mubr.f32.mxu0 0.0
        %3199 = vmatmul.mubr.f32.gmra.mrb[0].mxu0 %v3126
        %v3200 = vpop.f32.mrb[0].mxu0
        %v3201 = vadd.f32 0.0, %v3200
        %v3202 = vpop.f32.mrb[0].mxu0
        %v3203 = vadd.f32 0.0, %v3202
        %3204 = vdwg.mxu0
        %3205 = vmatprep.subr.mxu0 0.0
        %3206 = vmatpush1.msra.mxu0 %v695
        %3207 = vmatprep.subr.mxu0 0.0
        %3208 = vmatpush1.msra.mxu0 %v698
        %3209 = vmatprep.subr.mxu0 0.0
        %3210 = vmatpush1.msra.mxu0 %v701
        %3211 = vmatprep.subr.mxu0 0.0
        %3212 = vmatpush1.msra.mxu0 %v704
        %3213 = vmatprep.subr.mxu0 0.0
        %3214 = vmatpush1.msra.mxu0 %v707
        %3215 = vmatprep.subr.mxu0 0.0
        %3216 = vmatpush1.msra.mxu0 %v710
        %3217 = vmatprep.subr.mxu0 0.0
        %3218 = vmatpush1.msra.mxu0 %v713
        %3219 = vmatprep.subr.mxu0 0.0
        %3220 = vmatpush1.msra.mxu0 %v716
        %3221 = vmatprep.subr.mxu0 0.0
        %3222 = vmatpush1.msra.mxu0 %v719
        %3223 = vmatprep.subr.mxu0 0.0
        %3224 = vmatpush1.msra.mxu0 %v722
        %3225 = vmatprep.subr.mxu0 0.0
        %3226 = vmatpush1.msra.mxu0 %v725
        %3227 = vmatprep.subr.mxu0 0.0
        %3228 = vmatpush1.msra.mxu0 %v728
        %3229 = vmatprep.subr.mxu0 0.0
        %3230 = vmatpush1.msra.mxu0 %v731
        %3231 = vmatprep.subr.mxu0 0.0
        %3232 = vmatpush1.msra.mxu0 %v734
        %3233 = vmatprep.subr.mxu0 0.0
        %3234 = vmatpush1.msra.mxu0 %v737
        %3235 = vmatprep.subr.mxu0 0.0
        %3236 = vmatpush1.msra.mxu0 %v740
        %3237 = vmatprep.subr.mxu0 0.0
        %3238 = vmatpush1.msra.mxu0 0.0
        %3239 = vmatprep.subr.mxu0 0.0
        %3240 = vmatpush1.msra.mxu0 0.0
        %3241 = vmatprep.subr.mxu0 0.0
        %3242 = vmatpush1.msra.mxu0 0.0
        %3243 = vmatprep.subr.mxu0 0.0
        %3244 = vmatpush1.msra.mxu0 0.0
        %3245 = vmatprep.subr.mxu0 0.0
        %3246 = vmatpush1.msra.mxu0 0.0
        %3247 = vmatprep.subr.mxu0 0.0
        %3248 = vmatpush1.msra.mxu0 0.0
        %3249 = vmatprep.subr.mxu0 0.0
        %3250 = vmatpush1.msra.mxu0 0.0
        %3251 = vmatprep.subr.mxu0 0.0
        %3252 = vmatpush1.msra.mxu0 0.0
        %3253 = vmatprep.subr.mxu0 0.0
        %3254 = vmatpush1.msra.mxu0 0.0
        %3255 = vmatprep.subr.mxu0 0.0
        %3256 = vmatpush1.msra.mxu0 0.0
        %3257 = vmatprep.subr.mxu0 0.0
        %3258 = vmatpush1.msra.mxu0 0.0
        %3259 = vmatprep.subr.mxu0 0.0
        %3260 = vmatpush1.msra.mxu0 0.0
        %3261 = vmatprep.subr.mxu0 0.0
        %3262 = vmatpush1.msra.mxu0 0.0
        %3263 = vmatprep.subr.mxu0 0.0
        %3264 = vmatpush1.msra.mxu0 0.0
        %3265 = vmatprep.subr.mxu0 0.0
        %3266 = vmatpush1.msra.mxu0 0.0
        %3267 = vmatprep.subr.mxu0 0.0
        %3268 = vmatpush1.msra.mxu0 0.0
        %3269 = vmatprep.mubr.f32.mxu0 0.0
        %3270 = vmatmul.mubr.f32.gmra.mrb[0].mxu0 %v3126
        %v3271 = vpop.f32.mrb[0].mxu0
        %v3272 = vadd.f32 0.0, %v3271
        %v3273 = vpop.f32.mrb[0].mxu0
        %3274 = vdwg.mxu0
        %v3275 = vadd.f32 %v3131, %v3201
        %v3276 = vsub.f32 0.0, %v3275
        %v3277 = vmul.f32 %v3276, 1.442695
        %v3278 = vpow.pop %v3277
        %v3279 = vadd.f32 %v3278, 1.0
        %v3280 = vrcp.pop %v3279
        %v3281 = vmul.f32 1.0, %v3280
        %v3282 = vadd.f32 %v3132, %v3203
        %v3283 = vsub.f32 0.0, %v3282
        %v3284 = vmul.f32 %v3283, 1.442695
        %v3285 = vpow.pop %v3284
        %v3286 = vadd.f32 %v3285, 1.0
        %v3287 = vrcp.pop %v3286
        %v3288 = vmul.f32 1.0, %v3287
        %v3289 = vadd.f32 %v3272, %v746
        %v3290 = vmul.f32 %v3281, %v3289
        %v3291 = vadd.f32 %v3133, %v3290
        %v3292 = vtanh.pop %v3291
        %v3293 = vsub.f32 1.0, %v3288
        %v3294 = vmul.f32 %v3293, %v3292
        %v3295 = vmul.f32 %v3288, %v3126
        %v3296 = vadd.f32 %v3294, %v3295
        %v3297 = vadd.f32 %v3127, %v3296
        %s3298 = smul.u32 15, 3
        %s3299 = smul.addr %s3298, 8
        %s3300 = scalar_lea.vmem [#allocation2], %s3299
        %v3301 = vld [vmem:[%s3300] sm:$0xff]
        %v3302 = vld [vmem:[%s3300 + $0x8] sm:$0xff]
        %v3303 = vld [vmem:[%s3300 + $0x10] sm:$0xff]
        %3304 = vmatprep.subr.mxu0 %v694
        %3305 = vmatpush1.msra.mxu0 %v693
        %3306 = vmatprep.subr.mxu0 %v697
        %3307 = vmatpush1.msra.mxu0 %v696
        %3308 = vmatprep.subr.mxu0 %v700
        %3309 = vmatpush1.msra.mxu0 %v699
        %3310 = vmatprep.subr.mxu0 %v703
        %3311 = vmatpush1.msra.mxu0 %v702
        %3312 = vmatprep.subr.mxu0 %v706
        %3313 = vmatpush1.msra.mxu0 %v705
        %3314 = vmatprep.subr.mxu0 %v709
        %3315 = vmatpush1.msra.mxu0 %v708
        %3316 = vmatprep.subr.mxu0 %v712
        %3317 = vmatpush1.msra.mxu0 %v711
        %3318 = vmatprep.subr.mxu0 %v715
        %3319 = vmatpush1.msra.mxu0 %v714
        %3320 = vmatprep.subr.mxu0 %v718
        %3321 = vmatpush1.msra.mxu0 %v717
        %3322 = vmatprep.subr.mxu0 %v721
        %3323 = vmatpush1.msra.mxu0 %v720
        %3324 = vmatprep.subr.mxu0 %v724
        %3325 = vmatpush1.msra.mxu0 %v723
        %3326 = vmatprep.subr.mxu0 %v727
        %3327 = vmatpush1.msra.mxu0 %v726
        %3328 = vmatprep.subr.mxu0 %v730
        %3329 = vmatpush1.msra.mxu0 %v729
        %3330 = vmatprep.subr.mxu0 %v733
        %3331 = vmatpush1.msra.mxu0 %v732
        %3332 = vmatprep.subr.mxu0 %v736
        %3333 = vmatpush1.msra.mxu0 %v735
        %3334 = vmatprep.subr.mxu0 %v739
        %3335 = vmatpush1.msra.mxu0 %v738
        %3336 = vmatprep.subr.mxu0 0.0
        %3337 = vmatpush1.msra.mxu0 0.0
        %3338 = vmatprep.subr.mxu0 0.0
        %3339 = vmatpush1.msra.mxu0 0.0
        %3340 = vmatprep.subr.mxu0 0.0
        %3341 = vmatpush1.msra.mxu0 0.0
        %3342 = vmatprep.subr.mxu0 0.0
        %3343 = vmatpush1.msra.mxu0 0.0
        %3344 = vmatprep.subr.mxu0 0.0
        %3345 = vmatpush1.msra.mxu0 0.0
        %3346 = vmatprep.subr.mxu0 0.0
        %3347 = vmatpush1.msra.mxu0 0.0
        %3348 = vmatprep.subr.mxu0 0.0
        %3349 = vmatpush1.msra.mxu0 0.0
        %3350 = vmatprep.subr.mxu0 0.0
        %3351 = vmatpush1.msra.mxu0 0.0
        %3352 = vmatprep.subr.mxu0 0.0
        %3353 = vmatpush1.msra.mxu0 0.0
        %3354 = vmatprep.subr.mxu0 0.0
        %3355 = vmatpush1.msra.mxu0 0.0
        %3356 = vmatprep.subr.mxu0 0.0
        %3357 = vmatpush1.msra.mxu0 0.0
        %3358 = vmatprep.subr.mxu0 0.0
        %3359 = vmatpush1.msra.mxu0 0.0
        %3360 = vmatprep.subr.mxu0 0.0
        %3361 = vmatpush1.msra.mxu0 0.0
        %3362 = vmatprep.subr.mxu0 0.0
        %3363 = vmatpush1.msra.mxu0 0.0
        %3364 = vmatprep.subr.mxu0 0.0
        %3365 = vmatpush1.msra.mxu0 0.0
        %3366 = vmatprep.subr.mxu0 0.0
        %3367 = vmatpush1.msra.mxu0 0.0
        %3368 = vmatprep.mubr.f32.mxu0 0.0
        %3369 = vmatmul.mubr.f32.gmra.mrb[0].mxu0 %v3296
        %v3370 = vpop.f32.mrb[0].mxu0
        %v3371 = vadd.f32 0.0, %v3370
        %v3372 = vpop.f32.mrb[0].mxu0
        %v3373 = vadd.f32 0.0, %v3372
        %3374 = vdwg.mxu0
        %3375 = vmatprep.subr.mxu0 0.0
        %3376 = vmatpush1.msra.mxu0 %v695
        %3377 = vmatprep.subr.mxu0 0.0
        %3378 = vmatpush1.msra.mxu0 %v698
        %3379 = vmatprep.subr.mxu0 0.0
        %3380 = vmatpush1.msra.mxu0 %v701
        %3381 = vmatprep.subr.mxu0 0.0
        %3382 = vmatpush1.msra.mxu0 %v704
        %3383 = vmatprep.subr.mxu0 0.0
        %3384 = vmatpush1.msra.mxu0 %v707
        %3385 = vmatprep.subr.mxu0 0.0
        %3386 = vmatpush1.msra.mxu0 %v710
        %3387 = vmatprep.subr.mxu0 0.0
        %3388 = vmatpush1.msra.mxu0 %v713
        %3389 = vmatprep.subr.mxu0 0.0
        %3390 = vmatpush1.msra.mxu0 %v716
        %3391 = vmatprep.subr.mxu0 0.0
        %3392 = vmatpush1.msra.mxu0 %v719
        %3393 = vmatprep.subr.mxu0 0.0
        %3394 = vmatpush1.msra.mxu0 %v722
        %3395 = vmatprep.subr.mxu0 0.0
        %3396 = vmatpush1.msra.mxu0 %v725
        %3397 = vmatprep.subr.mxu0 0.0
        %3398 = vmatpush1.msra.mxu0 %v728
        %3399 = vmatprep.subr.mxu0 0.0
        %3400 = vmatpush1.msra.mxu0 %v731
        %3401 = vmatprep.subr.mxu0 0.0
        %3402 = vmatpush1.msra.mxu0 %v734
        %3403 = vmatprep.subr.mxu0 0.0
        %3404 = vmatpush1.msra.mxu0 %v737
        %3405 = vmatprep.subr.mxu0 0.0
        %3406 = vmatpush1.msra.mxu0 %v740
        %3407 = vmatprep.subr.mxu0 0.0
        %3408 = vmatpush1.msra.mxu0 0.0
        %3409 = vmatprep.subr.mxu0 0.0
        %3410 = vmatpush1.msra.mxu0 0.0
        %3411 = vmatprep.subr.mxu0 0.0
        %3412 = vmatpush1.msra.mxu0 0.0
        %3413 = vmatprep.subr.mxu0 0.0
        %3414 = vmatpush1.msra.mxu0 0.0
        %3415 = vmatprep.subr.mxu0 0.0
        %3416 = vmatpush1.msra.mxu0 0.0
        %3417 = vmatprep.subr.mxu0 0.0
        %3418 = vmatpush1.msra.mxu0 0.0
        %3419 = vmatprep.subr.mxu0 0.0
        %3420 = vmatpush1.msra.mxu0 0.0
        %3421 = vmatprep.subr.mxu0 0.0
        %3422 = vmatpush1.msra.mxu0 0.0
        %3423 = vmatprep.subr.mxu0 0.0
        %3424 = vmatpush1.msra.mxu0 0.0
        %3425 = vmatprep.subr.mxu0 0.0
        %3426 = vmatpush1.msra.mxu0 0.0
        %3427 = vmatprep.subr.mxu0 0.0
        %3428 = vmatpush1.msra.mxu0 0.0
        %3429 = vmatprep.subr.mxu0 0.0
        %3430 = vmatpush1.msra.mxu0 0.0
        %3431 = vmatprep.subr.mxu0 0.0
        %3432 = vmatpush1.msra.mxu0 0.0
        %3433 = vmatprep.subr.mxu0 0.0
        %3434 = vmatpush1.msra.mxu0 0.0
        %3435 = vmatprep.subr.mxu0 0.0
        %3436 = vmatpush1.msra.mxu0 0.0
        %3437 = vmatprep.subr.mxu0 0.0
        %3438 = vmatpush1.msra.mxu0 0.0
        %3439 = vmatprep.mubr.f32.mxu0 0.0
        %3440 = vmatmul.mubr.f32.gmra.mrb[0].mxu0 %v3296
        %v3441 = vpop.f32.mrb[0].mxu0
        %v3442 = vadd.f32 0.0, %v3441
        %v3443 = vpop.f32.mrb[0].mxu0
        %3444 = vdwg.mxu0
        %v3445 = vadd.f32 %v3301, %v3371
        %v3446 = vsub.f32 0.0, %v3445
        %v3447 = vmul.f32 %v3446, 1.442695
        %v3448 = vpow.pop %v3447
        %v3449 = vadd.f32 %v3448, 1.0
        %v3450 = vrcp.pop %v3449
        %v3451 = vmul.f32 1.0, %v3450
        %v3452 = vadd.f32 %v3302, %v3373
        %v3453 = vsub.f32 0.0, %v3452
        %v3454 = vmul.f32 %v3453, 1.442695
        %v3455 = vpow.pop %v3454
        %v3456 = vadd.f32 %v3455, 1.0
        %v3457 = vrcp.pop %v3456
        %v3458 = vmul.f32 1.0, %v3457
        %v3459 = vadd.f32 %v3442, %v746
        %v3460 = vmul.f32 %v3451, %v3459
        %v3461 = vadd.f32 %v3303, %v3460
        %v3462 = vtanh.pop %v3461
        %v3463 = vsub.f32 1.0, %v3458
        %v3464 = vmul.f32 %v3463, %v3462
        %v3465 = vmul.f32 %v3458, %v3296
        %v3466 = vadd.f32 %v3464, %v3465
        %v3467 = vadd.f32 %v3297, %v3466
        %v3468 = vmul.f32 %v3467, 0.0625
        %3469 = vst [vmem:[%s232] sm:$0xff] %v3468
        %s3470 = sand.u32 %s138, 1
        %s3471 = scalar_lea.sflag [#allocation5], %s3470
        %s3472 = sand.u32 %s138, 1
        %s3473 = smul.addr %s3472, 8
        %s3474 = scalar_lea.vmem [#allocation6], %s3473
        // Predicated region
        $region45: #{tpu_custom_call.1} parent=39 // pred_check
          %p3475 = pneg %p148
        $region46: #{tpu_custom_call.1} parent=39 // pred_check_branch
          %3477 = sbr.rel (%p3475) target = $region48
        $region47: #{tpu_custom_call.1} parent=39 // pred_region
          %s3479 = ssub.s32 128, 128
          %3480 = vsyncadd %s3471, %s3479
          %s3481 = smul.addr %s20, 128
          %s3482 = scalar_lea.hbm %s5, %s3481
          %s3484 = sshll.u32 %s3474, 4
          %s3485 = int_to_ptr.vmem [resolvable:$true] %s3484
          %3487 = dma.vmem_to_hbm [thread:$0]  %s3485, 128, %s3482, %s3471
        $region48: #{tpu_custom_call.1} parent=39 // pred_fallthru
          _
      $region40: #{tpu_custom_call.1} parent=5 // pred_fallthru
        _
      %p3488 = scmp.le.s32.totalorder 2, %s15
      // Predicated region
      $region49: #{tpu_custom_call.1} parent=5 // pred_check
        %p3489 = pneg %p3488
      $region50: #{tpu_custom_call.1} parent=5 // pred_check_branch
        %3491 = sbr.rel (%p3489) target = $region52
      $region51: #{tpu_custom_call.1} parent=5 // pred_region
        %s3492 = ssub.s32 %s15, 2
        // Predicated region
        $region53: #{tpu_custom_call.1} parent=51 // pred_check
          %p3493 = pneg %p154
        $region54: #{tpu_custom_call.1} parent=51 // pred_check_branch
          %3495 = sbr.rel (%p3493) target = $region56
        $region55: #{tpu_custom_call.1} parent=51 // pred_region
          %s3496 = sand.u32 %s139, 1
          %s3497 = scalar_lea.sflag [#allocation5], %s3496
          %s3498 = sand.u32 %s139, 1
          %s3499 = smul.addr %s3498, 8
          %s3500 = scalar_lea.vmem [#allocation6], %s3499
          %3501 = dma.done %s3497, 128
        $region56: #{tpu_custom_call.1} parent=51 // pred_fallthru
          _
      $region52: #{tpu_custom_call.1} parent=5 // pred_fallthru
        _
    $region6: #{tpu_custom_call.1} parent=1 // loop_footer
      %s19 = sadd.s32 1, %s15
    $region7: #{tpu_custom_call.1} parent=1 // loop_footer_branch
      %14 = sbr.rel target = $region3
    $region8: #{tpu_custom_call.1} parent=1 // loop_exit
      _
    %3502 = vsyncpa [#allocation4], 1
    %s3503 = scalar_lea.sflag [#allocation4], 1
    %3504 = vsyncpa %s3503, 1
    %3505 = vsyncpa [#allocation5], 1
    %s3506 = scalar_lea.sflag [#allocation5], 1
    %3507 = vsyncpa %s3506, 1

</llo_original>
